<compile_context>
chip_gen: v5e
topology: v5e:2x2
jax: 0.10.0
libtpu: 0.0.40
codegen_flags: <defaults>
</compile_context>

<pallas_src>
import functools
import numpy as np
import jax
import jax.numpy as jnp
from jax.experimental import pallas as pl
from jax.experimental.pallas import tpu as pltpu

# ----------------------------- configuration (small, consistent) -------------
FRAME_DIM = 16                           # power of two (module asserts this)
DEPTH = int(np.log2(FRAME_DIM) - 2)      # = 2
FILTERS = (8, 16)                        # len == DEPTH
FEATURE_DIM = 32
ATTENTION_AT = 8
INIT_TEMP = 3
TARGET_TEMP = 2
ATT_IDX = DEPTH - int(np.log2(ATTENTION_AT)) + 2   # = 1
LEAKY_SLOPE = 0.2
BN_EPS = 1e-5

_temps = [bool(np.log2(i) > int(np.log2(TARGET_TEMP)) + 1)
          for i in range(INIT_TEMP, 0, -1)]
TEMPS = _temps + [False] * max(0, DEPTH - len(_temps))   # all False for this config

assert 1 <= ATT_IDX < DEPTH  # attention is fused into the preceding block's kernel

_VMEM_LIMIT = 32 * 1024 * 1024


# ----------------------------- Pallas kernels --------------------------------
def _conv_residual(x, w_ref, shift_ref, hw, M, slope):
    """x: (Dp*hw, 9*Cin) f32 VMEM value.  w_ref: (3, 9*Cin, Cout) bf16 (BN scale and
    the 1x1x1 shortcut already folded in).  Returns leaky(conv + shortcut + shift)."""
    w = w_ref[...]                                                     # (3, 9C, Cout)
    acc = jnp.dot(x[0:M, :].astype(jnp.bfloat16), w[0],
                  preferred_element_type=jnp.float32)
    for kd in (1, 2):
        acc = acc + jnp.dot(x[kd * hw:kd * hw + M, :].astype(jnp.bfloat16), w[kd],
                            preferred_element_type=jnp.float32)
    v = acc + shift_ref[...]
    return jnp.where(v >= 0, v, slope * v)


def _block_kernel(x_ref, w_ref, shift_ref, o_ref, *, hw, slope):
    M = o_ref.shape[1]
    y = _conv_residual(x_ref[0], w_ref, shift_ref, hw, M, slope)
    o_ref[0] = y.astype(o_ref.dtype)


def _block_attn_kernel(x_ref, w_ref, shift_ref, wf_ref, wg_ref, wh_ref, gamma_ref,
                       y_ref, attn_ref, *, hw, slope):
    """Residual conv block fused with SAGAN-style SelfAttention3D on its output."""
    M = y_ref.shape[1]
    y0 = _conv_residual(x_ref[0], w_ref, shift_ref, hw, M, slope)      # (M, C) f32
    yb = y0.astype(jnp.bfloat16)
    f = jnp.dot(yb, wf_ref[...], preferred_element_type=jnp.float32)   # (M, Ck)
    g = jnp.dot(yb, wg_ref[...], preferred_element_type=jnp.float32)   # (M, Ck)
    h = jnp.dot(yb, wh_ref[...], preferred_element_type=jnp.float32)   # (M, C)
    # energy[i, j] = f_i . g_j ; softmax over keys j ; o_i = sum_j p[i,j] h_j
    s = jax.lax.dot_general(f, g, (((1,), (1,)), ((), ())),
                            preferred_element_type=jnp.float32)        # (M, M)
    s = s - jnp.max(s, axis=-1, keepdims=True)
    p = jnp.exp(s)
    p = p * pl.reciprocal(jnp.sum(p, axis=-1, keepdims=True), approx=True)
    o = jnp.dot(p.astype(jnp.bfloat16), h.astype(jnp.bfloat16),
                preferred_element_type=jnp.float32)                    # (M, C)
    y_ref[0] = (gamma_ref[0, 0] * o + y0).astype(y_ref.dtype)
    attn_ref[0] = p.astype(attn_ref.dtype)


def _head_kernel(x_ref, wl_ref, bl_ref, wq_ref, bq_ref, feat_ref, log_ref):
    """mean over (T,H,W) + NormLinear(->feature_dim) + NormLinear(->1), fused."""
    xw = jnp.dot(x_ref[0], wl_ref[...], preferred_element_type=jnp.float32)   # (M, F)
    feat = jnp.mean(xw, axis=0, keepdims=True) + bl_ref[...]                   # (1, F)
    logit = jnp.sum(feat * wq_ref[...], axis=-1, keepdims=True) + bq_ref[...]  # (1, 1)
    feat_ref[0] = feat.astype(feat_ref.dtype)
    log_ref[0] = logit.astype(log_ref.dtype)


# ----------------------------- pallas_call wrappers ---------------------------
def _compiler_params():
    return pltpu.CompilerParams(dimension_semantics=("parallel",),
                                vmem_limit_bytes=_VMEM_LIMIT)


def block_conv(x9, blk, Do, Ho, Wo):
    N, R, K9 = x9.shape
    hw = Ho * Wo
    M = Do * hw
    cout = blk["w"].shape[-1]
    kern = functools.partial(_block_kernel, hw=hw, slope=LEAKY_SLOPE)
    return pl.pallas_call(
        kern,
        out_shape=jax.ShapeDtypeStruct((N, M, cout), jnp.float32),
        grid=(N,),
        in_specs=[
            pl.BlockSpec((1, R, K9), lambda b: (b, 0, 0)),
            pl.BlockSpec(blk["w"].shape, lambda b: (0, 0, 0)),
            pl.BlockSpec(blk["shift"].shape, lambda b: (0, 0)),
        ],
        out_specs=pl.BlockSpec((1, M, cout), lambda b: (b, 0, 0)),
        compiler_params=_compiler_params(),
    )(x9, blk["w"], blk["shift"])


def block_conv_attn(x9, blk, att, Do, Ho, Wo):
    N, R, K9 = x9.shape
    hw = Ho * Wo
    M = Do * hw
    cout = blk["w"].shape[-1]
    kern = functools.partial(_block_attn_kernel, hw=hw, slope=LEAKY_SLOPE)
    y, attn = pl.pallas_call(
        kern,
        out_shape=(jax.ShapeDtypeStruct((N, M, cout), jnp.float32),
                   jax.ShapeDtypeStruct((N, M, M), jnp.float32)),
        grid=(N,),
        in_specs=[
            pl.BlockSpec((1, R, K9), lambda b: (b, 0, 0)),
            pl.BlockSpec(blk["w"].shape, lambda b: (0, 0, 0)),
            pl.BlockSpec(blk["shift"].shape, lambda b: (0, 0)),
            pl.BlockSpec(att["wf"].shape, lambda b: (0, 0)),
            pl.BlockSpec(att["wg"].shape, lambda b: (0, 0)),
            pl.BlockSpec(att["wh"].shape, lambda b: (0, 0)),
            pl.BlockSpec(memory_space=pltpu.MemorySpace.SMEM),   # gamma scalar
        ],
        out_specs=(pl.BlockSpec((1, M, cout), lambda b: (b, 0, 0)),
                   pl.BlockSpec((1, M, M), lambda b: (b, 0, 0))),
        compiler_params=_compiler_params(),
    )(x9, blk["w"], blk["shift"], att["wf"], att["wg"], att["wh"], att["gamma"])
    return y, attn


def pooled_heads(x_flat, lin, log):
    N, M, C = x_flat.shape
    F = lin["w"].shape[1]
    feat3, log3 = pl.pallas_call(
        _head_kernel,
        out_shape=(jax.ShapeDtypeStruct((N, 1, F), jnp.float32),
                   jax.ShapeDtypeStruct((N, 1, 1), jnp.float32)),
        grid=(N,),
        in_specs=[
            pl.BlockSpec((1, M, C), lambda b: (b, 0, 0)),
            pl.BlockSpec(lin["w"].shape, lambda b: (0, 0)),
            pl.BlockSpec(lin["b"].shape, lambda b: (0, 0)),
            pl.BlockSpec(log["w_row"].shape, lambda b: (0, 0)),
            pl.BlockSpec(log["b"].shape, lambda b: (0, 0)),
        ],
        out_specs=(pl.BlockSpec((1, 1, F), lambda b: (b, 0, 0)),
                   pl.BlockSpec((1, 1, 1), lambda b: (b, 0, 0))),
        compiler_params=_compiler_params(),
    )(x_flat, lin["w"], lin["b"], log["w_row"], log["b"])
    return feat3.reshape(N, F), log3.reshape(N, 1)


# ----------------------------- wrapper glue (tiny XLA ops) ---------------------
def build_tap9(x):
    """Pad (1,1,1) and build the stride-2 decimated (kh,kw) tap stack.
    x: (N, D, H, W, C) -> (N, (D+2)*Ho*Wo, 9*C); rows ordered (d_pad, ho, wo),
    lanes ordered ((kh*3+kw)*C + ci).  Temporal (kd) taps are sliced in-kernel."""
    N, D, H, W, C = x.shape
    Ho, Wo = H // 2, W // 2
    xp = jnp.pad(x, ((0, 0), (1, 1), (1, 1), (1, 1), (0, 0)))
    taps = []
    for kh in range(3):
        for kw in range(3):
            taps.append(xp[:, :, kh:kh + 2 * Ho:2, kw:kw + 2 * Wo:2, :])
    t = jnp.concatenate(taps, axis=-1)                    # (N, D+2, Ho, Wo, 9C)
    return t.reshape(N, (D + 2) * Ho * Wo, 9 * C)


# ----------------------------- parameters --------------------------------------
def _weight_norm(v, g, axes):
    nrm = jnp.sqrt(jnp.sum(v * v, axis=axes, keepdims=True))
    gshape = [v.shape[0]] + [1] * (v.ndim - 1)
    return g.reshape(gshape) * v / nrm


def init_params(key):
    keys = iter(jax.random.split(key, 64))
    nxt = lambda: next(keys)
    filters = [3] + list(FILTERS)
    params = {"blocks": []}

    for i in range(DEPTH):
        cin, cout = filters[i], filters[i + 1]
        # 3x3x3 conv (weight_norm, bias=False)
        v = 0.2 * jax.random.normal(nxt(), (cout, cin, 3, 3, 3), jnp.float32)
        g = jax.random.uniform(nxt(), (cout,), jnp.float32, 0.5, 1.5)
        w = _weight_norm(v, g, axes=(1, 2, 3, 4))
        # 1x1x1 strided residual shortcut (weight_norm, bias=False)
        vs = 0.2 * jax.random.normal(nxt(), (cout, cin), jnp.float32)
        gs = jax.random.uniform(nxt(), (cout,), jnp.float32, 0.5, 1.5)
        ws = _weight_norm(vs, gs, axes=(1,))
        # eval-mode BatchNorm3d (block 0: disabled) folded into scale/shift
        if i > 0:
            gamma = jax.random.uniform(nxt(), (cout,), jnp.float32, 0.8, 1.2)
            beta = 0.1 * jax.random.normal(nxt(), (cout,), jnp.float32)
            mean = 0.1 * jax.random.normal(nxt(), (cout,), jnp.float32)
            var = jax.random.uniform(nxt(), (cout,), jnp.float32, 0.5, 1.5)
            scale = gamma / jnp.sqrt(var + BN_EPS)
            shift = beta - mean * scale
        else:
            scale = jnp.ones((cout,), jnp.float32)
            shift = jnp.zeros((cout,), jnp.float32)
        # fold BN scale into the conv weight; fold the shortcut into the centre tap
        # (kd,kh,kw)=(1,1,1) -> rows [4*cin, 5*cin) of the kd=1 slab.
        wmat = jnp.transpose(w * scale[:, None, None, None, None], (2, 3, 4, 1, 0))
        wmat = wmat.reshape(3, 9 * cin, cout)
        wmat = wmat.at[1, 4 * cin:5 * cin, :].add(ws.T)
        params["blocks"].append({
            "w": wmat.astype(jnp.bfloat16),            # (3, 9*cin, cout)
            "shift": shift.reshape(1, cout),           # f32 epilogue add
        })

    # SelfAttention3D at ATT_IDX (channels = filters[ATT_IDX])
    c_att = filters[ATT_IDX]
    ck = max(c_att // 8, 1)
    att = {}
    for name, co in (("wf", ck), ("wg", ck), ("wh", c_att)):
        v = 0.2 * jax.random.normal(nxt(), (co, c_att), jnp.float32)
        g = jax.random.uniform(nxt(), (co,), jnp.float32, 0.5, 1.5)
        att[name] = _weight_norm(v, g, axes=(1,)).T.astype(jnp.bfloat16)  # (c_att, co)
    # SAGAN initialises gamma=0; use 0.5 so the attention path is numerically active.
    att["gamma"] = jnp.full((1, 1), 0.5, jnp.float32)
    params["attention"] = att

    # NormLinear heads (weight_norm + bias, no batchnorm)
    def lin(c_in, c_out):
        v = 0.2 * jax.random.normal(nxt(), (c_out, c_in), jnp.float32)
        g = jax.random.uniform(nxt(), (c_out,), jnp.float32, 0.5, 1.5)
        w = _weight_norm(v, g, axes=(1,))
        b = 0.1 * jax.random.normal(nxt(), (c_out,), jnp.float32)
        return w, b

    wl, bl = lin(filters[-1], FEATURE_DIM)
    params["linear"] = {"w": wl.T, "b": bl.reshape(1, FEATURE_DIM)}     # (cin, F)
    wq, bq = lin(FEATURE_DIM, 1)
    params["logits"] = {"w_row": wq, "b": bq.reshape(1, 1)}             # (1, F) row
    return params


# ----------------------------- forward -----------------------------------------
def discriminator_forward(x_ncdhw, params):
    """x_ncdhw: (N, 3, T, H, W) float32 -> (feat, logits, attn)."""
    x = jnp.transpose(x_ncdhw, (0, 2, 3, 4, 1)).astype(jnp.float32)   # NDHWC
    attn = None
    y_flat = None
    for i in range(DEPTH):
        if TEMPS[i]:
            # TODO(synk): temporal downsampling (stride-2 on T) is never taken for this
            # config (all TEMPS False) and is not lowered here.
            raise NotImplementedError("temporal downsampling not implemented")
        blk = params["blocks"][i]
        N, D, H, W, _ = x.shape
        Do, Ho, Wo = D, H // 2, W // 2
        cout = blk["w"].shape[-1]
        x9 = build_tap9(x)                       # tiny XLA pad + 9-tap stack (no 27x im2col)
        if i == ATT_IDX - 1:
            # attention at i == ATT_IDX acts on the output of block ATT_IDX-1 -> fuse it.
            y_flat, attn = block_conv_attn(x9, blk, params["attention"], Do, Ho, Wo)
        else:
            y_flat = block_conv(x9, blk, Do, Ho, Wo)
        x = y_flat.reshape(N, Do, Ho, Wo, cout)   # free row-major reinterpretation
        # TODO(synk): Dropout3d(p=0.4) is the eval-mode identity here.
    feat, logits = pooled_heads(y_flat, params["linear"], params["logits"])
    return feat, logits, attn


# ----------------------------- main ---------------------------------------------
if __name__ == "__main__":
    assert not FRAME_DIM & (FRAME_DIM - 1)
    key = jax.random.PRNGKey(0)
    k_param, k_in = jax.random.split(key)
    params = init_params(k_param)
    # input: (batch=2, channels=3, T=4, H=16, W=16)  -- NCDHW like PyTorch Conv3d
    x = jax.random.normal(k_in, (2, 3, 4, FRAME_DIM, FRAME_DIM), jnp.float32)

    fwd = jax.jit(lambda inp: discriminator_forward(inp, params))
    feat, logits, attn = fwd(x)
    jax.block_until_ready((feat, logits, attn))

    assert feat.shape == (2, FEATURE_DIM)
    assert logits.shape == (2, 1)
    assert attn.shape == (2, 4 * 8 * 8, 4 * 8 * 8)
    assert bool(jnp.all(jnp.isfinite(feat))) and bool(jnp.all(jnp.isfinite(logits)))
    assert bool(jnp.all(jnp.isfinite(attn)))
    print("KERNEL_OK")
</pallas_src>

<mosaic_0001>
module attributes {stable_mosaic.version = 11 : i64} {
  func.func @_block_attn_kernel(%arg0: i32, %arg1: memref<1x384x27xf32, #tpu.memory_space<vmem>>, %arg2: memref<3x27x8xbf16, #tpu.memory_space<vmem>>, %arg3: memref<1x8xf32, #tpu.memory_space<vmem>>, %arg4: memref<8x1xbf16, #tpu.memory_space<vmem>>, %arg5: memref<8x1xbf16, #tpu.memory_space<vmem>>, %arg6: memref<8x8xbf16, #tpu.memory_space<vmem>>, %arg7: memref<1x1xf32, #tpu.memory_space<smem>>, %arg8: memref<1x256x8xf32, #tpu.memory_space<vmem>>, %arg9: memref<1x256x256xf32, #tpu.memory_space<vmem>>) attributes {dimension_semantics = [#tpu.dimension_semantics<parallel>], iteration_bounds = array<i64: 2>, scalar_prefetch = 0 : i64, scratch_operands = 0 : i64, tpu.core_type = #tpu.core_type<tc>, window_params = [{transform_indices = @transform_0, window_bounds = array<i64: 1, 384, 27>}, {pipeline_mode = #tpu.pipeline_mode<synchronous>, transform_indices = @transform_1, window_bounds = array<i64: 3, 27, 8>}, {pipeline_mode = #tpu.pipeline_mode<synchronous>, transform_indices = @transform_2, window_bounds = array<i64: 1, 8>}, {pipeline_mode = #tpu.pipeline_mode<synchronous>, transform_indices = @transform_3, window_bounds = array<i64: 8, 1>}, {pipeline_mode = #tpu.pipeline_mode<synchronous>, transform_indices = @transform_4, window_bounds = array<i64: 8, 1>}, {pipeline_mode = #tpu.pipeline_mode<synchronous>, transform_indices = @transform_5, window_bounds = array<i64: 8, 8>}, {transform_indices = @transform_6, window_bounds = array<i64: 1, 1>}, {transform_indices = @transform_7, window_bounds = array<i64: 1, 256, 8>}, {transform_indices = @transform_8, window_bounds = array<i64: 1, 256, 256>}]} {
    %c0 = arith.constant 0 : index
    %c0_0 = arith.constant 0 : index
    %c0_1 = arith.constant 0 : index
    %0 = vector.load %arg1[%c0, %c0_0, %c0_1] : memref<1x384x27xf32, #tpu.memory_space<vmem>>, vector<1x384x27xf32>
    %1 = vector.shape_cast %0 : vector<1x384x27xf32> to vector<384x27xf32>
    %c0_2 = arith.constant 0 : index
    %c0_3 = arith.constant 0 : index
    %c0_4 = arith.constant 0 : index
    %2 = vector.load %arg2[%c0_2, %c0_3, %c0_4] : memref<3x27x8xbf16, #tpu.memory_space<vmem>>, vector<3x27x8xbf16>
    %3 = vector.extract_strided_slice %1 {offsets = [0, 0], sizes = [256, 27], strides = [1, 1]} : vector<384x27xf32> to vector<256x27xf32>
    %4 = arith.truncf %3 : vector<256x27xf32> to vector<256x27xbf16>
    %5 = vector.extract_strided_slice %2 {offsets = [0, 0, 0], sizes = [1, 27, 8], strides = [1, 1, 1]} : vector<3x27x8xbf16> to vector<1x27x8xbf16>
    %6 = vector.shape_cast %5 : vector<1x27x8xbf16> to vector<27x8xbf16>
    %cst = arith.constant dense<0.000000e+00> : vector<256x8xf32>
    %7 = tpu.matmul %4, %6, %cst {dimension_numbers = #tpu.dot_dimension_numbers<[1], [0], [0], [1], [0, 0, 1, 1], [], []>} : vector<256x27xbf16>, vector<27x8xbf16>, vector<256x8xf32> -> vector<256x8xf32>
    %8 = vector.extract_strided_slice %1 {offsets = [64, 0], sizes = [256, 27], strides = [1, 1]} : vector<384x27xf32> to vector<256x27xf32>
    %9 = arith.truncf %8 : vector<256x27xf32> to vector<256x27xbf16>
    %10 = vector.extract_strided_slice %2 {offsets = [1, 0, 0], sizes = [1, 27, 8], strides = [1, 1, 1]} : vector<3x27x8xbf16> to vector<1x27x8xbf16>
    %11 = vector.shape_cast %10 : vector<1x27x8xbf16> to vector<27x8xbf16>
    %cst_5 = arith.constant dense<0.000000e+00> : vector<256x8xf32>
    %12 = tpu.matmul %9, %11, %cst_5 {dimension_numbers = #tpu.dot_dimension_numbers<[1], [0], [0], [1], [0, 0, 1, 1], [], []>} : vector<256x27xbf16>, vector<27x8xbf16>, vector<256x8xf32> -> vector<256x8xf32>
    %13 = arith.addf %7, %12 : vector<256x8xf32>
    %14 = vector.extract_strided_slice %1 {offsets = [128, 0], sizes = [256, 27], strides = [1, 1]} : vector<384x27xf32> to vector<256x27xf32>
    %15 = arith.truncf %14 : vector<256x27xf32> to vector<256x27xbf16>
    %16 = vector.extract_strided_slice %2 {offsets = [2, 0, 0], sizes = [1, 27, 8], strides = [1, 1, 1]} : vector<3x27x8xbf16> to vector<1x27x8xbf16>
    %17 = vector.shape_cast %16 : vector<1x27x8xbf16> to vector<27x8xbf16>
    %cst_6 = arith.constant dense<0.000000e+00> : vector<256x8xf32>
    %18 = tpu.matmul %15, %17, %cst_6 {dimension_numbers = #tpu.dot_dimension_numbers<[1], [0], [0], [1], [0, 0, 1, 1], [], []>} : vector<256x27xbf16>, vector<27x8xbf16>, vector<256x8xf32> -> vector<256x8xf32>
    %19 = arith.addf %13, %18 : vector<256x8xf32>
    %c0_7 = arith.constant 0 : index
    %c0_8 = arith.constant 0 : index
    %20 = vector.load %arg3[%c0_7, %c0_8] : memref<1x8xf32, #tpu.memory_space<vmem>>, vector<1x8xf32>
    %21 = vector.broadcast %20 : vector<1x8xf32> to vector<256x8xf32>
    %22 = arith.addf %19, %21 : vector<256x8xf32>
    %cst_9 = arith.constant 0.000000e+00 : f32
    %23 = vector.broadcast %cst_9 : f32 to vector<256x8xf32>
    %24 = arith.cmpf oge, %22, %23 : vector<256x8xf32>
    %cst_10 = arith.constant 2.000000e-01 : f32
    %25 = vector.broadcast %cst_10 : f32 to vector<256x8xf32>
    %26 = arith.mulf %25, %22 : vector<256x8xf32>
    %27 = arith.select %24, %22, %26 : vector<256x8xi1>, vector<256x8xf32>
    %28 = arith.truncf %27 : vector<256x8xf32> to vector<256x8xbf16>
    %c0_11 = arith.constant 0 : index
    %c0_12 = arith.constant 0 : index
    %29 = vector.load %arg4[%c0_11, %c0_12] : memref<8x1xbf16, #tpu.memory_space<vmem>>, vector<8x1xbf16>
    %cst_13 = arith.constant dense<0.000000e+00> : vector<256x1xf32>
    %30 = tpu.matmul %28, %29, %cst_13 {dimension_numbers = #tpu.dot_dimension_numbers<[1], [0], [0], [1], [0, 0, 1, 1], [], []>} : vector<256x8xbf16>, vector<8x1xbf16>, vector<256x1xf32> -> vector<256x1xf32>
    %c0_14 = arith.constant 0 : index
    %c0_15 = arith.constant 0 : index
    %31 = vector.load %arg5[%c0_14, %c0_15] : memref<8x1xbf16, #tpu.memory_space<vmem>>, vector<8x1xbf16>
    %cst_16 = arith.constant dense<0.000000e+00> : vector<256x1xf32>
    %32 = tpu.matmul %28, %31, %cst_16 {dimension_numbers = #tpu.dot_dimension_numbers<[1], [0], [0], [1], [0, 0, 1, 1], [], []>} : vector<256x8xbf16>, vector<8x1xbf16>, vector<256x1xf32> -> vector<256x1xf32>
    %c0_17 = arith.constant 0 : index
    %c0_18 = arith.constant 0 : index
    %33 = vector.load %arg6[%c0_17, %c0_18] : memref<8x8xbf16, #tpu.memory_space<vmem>>, vector<8x8xbf16>
    %cst_19 = arith.constant dense<0.000000e+00> : vector<256x8xf32>
    %34 = tpu.matmul %28, %33, %cst_19 {dimension_numbers = #tpu.dot_dimension_numbers<[1], [0], [0], [1], [0, 0, 1, 1], [], []>} : vector<256x8xbf16>, vector<8x8xbf16>, vector<256x8xf32> -> vector<256x8xf32>
    %cst_20 = arith.constant dense<0.000000e+00> : vector<256x256xf32>
    %35 = tpu.matmul %30, %32, %cst_20 {dimension_numbers = #tpu.dot_dimension_numbers<[1], [1], [0], [0], [0, 0, 1, 0], [], []>} : vector<256x1xf32>, vector<256x1xf32>, vector<256x256xf32> -> vector<256x256xf32>
    %cst_21 = arith.constant dense<0xFF800000> : vector<256xf32>
    %36 = vector.multi_reduction <maximumf>, %35, %cst_21 [1] : vector<256x256xf32> to vector<256xf32>
    %37 = vector.shape_cast %36 : vector<256xf32> to vector<256x1xf32>
    %38 = vector.broadcast %37 : vector<256x1xf32> to vector<256x256xf32>
    %39 = arith.subf %35, %38 : vector<256x256xf32>
    %40 = math.exp %39 : vector<256x256xf32>
    %cst_22 = arith.constant dense<0.000000e+00> : vector<256xf32>
    %41 = vector.multi_reduction <add>, %40, %cst_22 [1] : vector<256x256xf32> to vector<256xf32>
    %42 = vector.shape_cast %41 : vector<256xf32> to vector<256x1xf32>
    %43 = tpu.reciprocal %42 {approx = true} : vector<256x1xf32> -> vector<256x1xf32>
    %44 = vector.broadcast %43 : vector<256x1xf32> to vector<256x256xf32>
    %45 = arith.mulf %40, %44 : vector<256x256xf32>
    %46 = arith.truncf %45 : vector<256x256xf32> to vector<256x256xbf16>
    %47 = arith.truncf %34 : vector<256x8xf32> to vector<256x8xbf16>
    %cst_23 = arith.constant dense<0.000000e+00> : vector<256x8xf32>
    %48 = tpu.matmul %46, %47, %cst_23 {dimension_numbers = #tpu.dot_dimension_numbers<[1], [0], [0], [1], [0, 0, 1, 1], [], []>} : vector<256x256xbf16>, vector<256x8xbf16>, vector<256x8xf32> -> vector<256x8xf32>
    %c0_24 = arith.constant 0 : index
    %c0_25 = arith.constant 0 : index
    %49 = memref.load %arg7[%c0_24, %c0_25] : memref<1x1xf32, #tpu.memory_space<smem>>
    %50 = vector.broadcast %49 : f32 to vector<256x8xf32>
    %51 = arith.mulf %50, %48 : vector<256x8xf32>
    %52 = arith.addf %51, %27 : vector<256x8xf32>
    %c0_26 = arith.constant 0 : index
    %c0_27 = arith.constant 0 : index
    %c0_28 = arith.constant 0 : index
    %53 = vector.load %arg8[%c0_26, %c0_27, %c0_28] : memref<1x256x8xf32, #tpu.memory_space<vmem>>, vector<1x256x8xf32>
    %54 = vector.shape_cast %53 : vector<1x256x8xf32> to vector<256x8xf32>
    %55 = vector.shape_cast %52 : vector<256x8xf32> to vector<1x256x8xf32>
    tpu.vector_store %arg8[%c0_26, %c0_27, %c0_28], %55 {strides = array<i32>} : memref<1x256x8xf32, #tpu.memory_space<vmem>>, vector<1x256x8xf32>,
    %c0_29 = arith.constant 0 : index
    %c0_30 = arith.constant 0 : index
    %c0_31 = arith.constant 0 : index
    %56 = vector.load %arg9[%c0_29, %c0_30, %c0_31] : memref<1x256x256xf32, #tpu.memory_space<vmem>>, vector<1x256x256xf32>
    %57 = vector.shape_cast %56 : vector<1x256x256xf32> to vector<256x256xf32>
    %58 = vector.shape_cast %45 : vector<256x256xf32> to vector<1x256x256xf32>
    tpu.vector_store %arg9[%c0_29, %c0_30, %c0_31], %58 {strides = array<i32>} : memref<1x256x256xf32, #tpu.memory_space<vmem>>, vector<1x256x256xf32>,
    return
  }
  func.func @transform_0(%arg0: i32) -> (i32, i32, i32) {
    %c0_i32 = arith.constant 0 : i32
    %c0_i32_0 = arith.constant 0 : i32
    %c0_i32_1 = arith.constant 0 : i32
    return %arg0, %c0_i32, %c0_i32_0 : i32, i32, i32
  }
  func.func @transform_1(%arg0: i32) -> (i32, i32, i32) {
    %c0_i32 = arith.constant 0 : i32
    %c0_i32_0 = arith.constant 0 : i32
    %c0_i32_1 = arith.constant 0 : i32
    %c0_i32_2 = arith.constant 0 : i32
    return %c0_i32, %c0_i32_0, %c0_i32_1 : i32, i32, i32
  }
  func.func @transform_2(%arg0: i32) -> (i32, i32) {
    %c0_i32 = arith.constant 0 : i32
    %c0_i32_0 = arith.constant 0 : i32
    %c0_i32_1 = arith.constant 0 : i32
    return %c0_i32, %c0_i32_0 : i32, i32
  }
  func.func @transform_3(%arg0: i32) -> (i32, i32) {
    %c0_i32 = arith.constant 0 : i32
    %c0_i32_0 = arith.constant 0 : i32
    %c0_i32_1 = arith.constant 0 : i32
    return %c0_i32, %c0_i32_0 : i32, i32
  }
  func.func @transform_4(%arg0: i32) -> (i32, i32) {
    %c0_i32 = arith.constant 0 : i32
    %c0_i32_0 = arith.constant 0 : i32
    %c0_i32_1 = arith.constant 0 : i32
    return %c0_i32, %c0_i32_0 : i32, i32
  }
  func.func @transform_5(%arg0: i32) -> (i32, i32) {
    %c0_i32 = arith.constant 0 : i32
    %c0_i32_0 = arith.constant 0 : i32
    %c0_i32_1 = arith.constant 0 : i32
    return %c0_i32, %c0_i32_0 : i32, i32
  }
  func.func @transform_6(%arg0: i32) -> (i32, i32) {
    %c0_i32 = arith.constant 0 : i32
    %c0_i32_0 = arith.constant 0 : i32
    %c0_i32_1 = arith.constant 0 : i32
    return %c0_i32, %c0_i32_0 : i32, i32
  }
  func.func @transform_7(%arg0: i32) -> (i32, i32, i32) {
    %c0_i32 = arith.constant 0 : i32
    %c0_i32_0 = arith.constant 0 : i32
    %c0_i32_1 = arith.constant 0 : i32
    return %arg0, %c0_i32, %c0_i32_0 : i32, i32, i32
  }
  func.func @transform_8(%arg0: i32) -> (i32, i32, i32) {
    %c0_i32 = arith.constant 0 : i32
    %c0_i32_0 = arith.constant 0 : i32
    %c0_i32_1 = arith.constant 0 : i32
    return %arg0, %c0_i32, %c0_i32_0 : i32, i32, i32
  }
}

module attributes {stable_mosaic.version = 11 : i64} {
  func.func @_block_kernel(%arg0: i32, %arg1: memref<1x96x72xf32, #tpu.memory_space<vmem>>, %arg2: memref<3x72x16xbf16, #tpu.memory_space<vmem>>, %arg3: memref<1x16xf32, #tpu.memory_space<vmem>>, %arg4: memref<1x64x16xf32, #tpu.memory_space<vmem>>) attributes {dimension_semantics = [#tpu.dimension_semantics<parallel>], iteration_bounds = array<i64: 2>, scalar_prefetch = 0 : i64, scratch_operands = 0 : i64, tpu.core_type = #tpu.core_type<tc>, window_params = [{transform_indices = @transform_0, window_bounds = array<i64: 1, 96, 72>}, {pipeline_mode = #tpu.pipeline_mode<synchronous>, transform_indices = @transform_1, window_bounds = array<i64: 3, 72, 16>}, {pipeline_mode = #tpu.pipeline_mode<synchronous>, transform_indices = @transform_2, window_bounds = array<i64: 1, 16>}, {transform_indices = @transform_3, window_bounds = array<i64: 1, 64, 16>}]} {
    %c0 = arith.constant 0 : index
    %c0_0 = arith.constant 0 : index
    %c0_1 = arith.constant 0 : index
    %0 = vector.load %arg1[%c0, %c0_0, %c0_1] : memref<1x96x72xf32, #tpu.memory_space<vmem>>, vector<1x96x72xf32>
    %1 = vector.shape_cast %0 : vector<1x96x72xf32> to vector<96x72xf32>
    %c0_2 = arith.constant 0 : index
    %c0_3 = arith.constant 0 : index
    %c0_4 = arith.constant 0 : index
    %2 = vector.load %arg2[%c0_2, %c0_3, %c0_4] : memref<3x72x16xbf16, #tpu.memory_space<vmem>>, vector<3x72x16xbf16>
    %3 = vector.extract_strided_slice %1 {offsets = [0, 0], sizes = [64, 72], strides = [1, 1]} : vector<96x72xf32> to vector<64x72xf32>
    %4 = arith.truncf %3 : vector<64x72xf32> to vector<64x72xbf16>
    %5 = vector.extract_strided_slice %2 {offsets = [0, 0, 0], sizes = [1, 72, 16], strides = [1, 1, 1]} : vector<3x72x16xbf16> to vector<1x72x16xbf16>
    %6 = vector.shape_cast %5 : vector<1x72x16xbf16> to vector<72x16xbf16>
    %cst = arith.constant dense<0.000000e+00> : vector<64x16xf32>
    %7 = tpu.matmul %4, %6, %cst {dimension_numbers = #tpu.dot_dimension_numbers<[1], [0], [0], [1], [0, 0, 1, 1], [], []>} : vector<64x72xbf16>, vector<72x16xbf16>, vector<64x16xf32> -> vector<64x16xf32>
    %8 = vector.extract_strided_slice %1 {offsets = [16, 0], sizes = [64, 72], strides = [1, 1]} : vector<96x72xf32> to vector<64x72xf32>
    %9 = arith.truncf %8 : vector<64x72xf32> to vector<64x72xbf16>
    %10 = vector.extract_strided_slice %2 {offsets = [1, 0, 0], sizes = [1, 72, 16], strides = [1, 1, 1]} : vector<3x72x16xbf16> to vector<1x72x16xbf16>
    %11 = vector.shape_cast %10 : vector<1x72x16xbf16> to vector<72x16xbf16>
    %cst_5 = arith.constant dense<0.000000e+00> : vector<64x16xf32>
    %12 = tpu.matmul %9, %11, %cst_5 {dimension_numbers = #tpu.dot_dimension_numbers<[1], [0], [0], [1], [0, 0, 1, 1], [], []>} : vector<64x72xbf16>, vector<72x16xbf16>, vector<64x16xf32> -> vector<64x16xf32>
    %13 = arith.addf %7, %12 : vector<64x16xf32>
    %14 = vector.extract_strided_slice %1 {offsets = [32, 0], sizes = [64, 72], strides = [1, 1]} : vector<96x72xf32> to vector<64x72xf32>
    %15 = arith.truncf %14 : vector<64x72xf32> to vector<64x72xbf16>
    %16 = vector.extract_strided_slice %2 {offsets = [2, 0, 0], sizes = [1, 72, 16], strides = [1, 1, 1]} : vector<3x72x16xbf16> to vector<1x72x16xbf16>
    %17 = vector.shape_cast %16 : vector<1x72x16xbf16> to vector<72x16xbf16>
    %cst_6 = arith.constant dense<0.000000e+00> : vector<64x16xf32>
    %18 = tpu.matmul %15, %17, %cst_6 {dimension_numbers = #tpu.dot_dimension_numbers<[1], [0], [0], [1], [0, 0, 1, 1], [], []>} : vector<64x72xbf16>, vector<72x16xbf16>, vector<64x16xf32> -> vector<64x16xf32>
    %19 = arith.addf %13, %18 : vector<64x16xf32>
    %c0_7 = arith.constant 0 : index
    %c0_8 = arith.constant 0 : index
    %20 = vector.load %arg3[%c0_7, %c0_8] : memref<1x16xf32, #tpu.memory_space<vmem>>, vector<1x16xf32>
    %21 = vector.broadcast %20 : vector<1x16xf32> to vector<64x16xf32>
    %22 = arith.addf %19, %21 : vector<64x16xf32>
    %cst_9 = arith.constant 0.000000e+00 : f32
    %23 = vector.broadcast %cst_9 : f32 to vector<64x16xf32>
    %24 = arith.cmpf oge, %22, %23 : vector<64x16xf32>
    %cst_10 = arith.constant 2.000000e-01 : f32
    %25 = vector.broadcast %cst_10 : f32 to vector<64x16xf32>
    %26 = arith.mulf %25, %22 : vector<64x16xf32>
    %27 = arith.select %24, %22, %26 : vector<64x16xi1>, vector<64x16xf32>
    %c0_11 = arith.constant 0 : index
    %c0_12 = arith.constant 0 : index
    %c0_13 = arith.constant 0 : index
    %28 = vector.load %arg4[%c0_11, %c0_12, %c0_13] : memref<1x64x16xf32, #tpu.memory_space<vmem>>, vector<1x64x16xf32>
    %29 = vector.shape_cast %28 : vector<1x64x16xf32> to vector<64x16xf32>
    %30 = vector.shape_cast %27 : vector<64x16xf32> to vector<1x64x16xf32>
    tpu.vector_store %arg4[%c0_11, %c0_12, %c0_13], %30 {strides = array<i32>} : memref<1x64x16xf32, #tpu.memory_space<vmem>>, vector<1x64x16xf32>,
    return
  }
  func.func @transform_0(%arg0: i32) -> (i32, i32, i32) {
    %c0_i32 = arith.constant 0 : i32
    %c0_i32_0 = arith.constant 0 : i32
    %c0_i32_1 = arith.constant 0 : i32
    return %arg0, %c0_i32, %c0_i32_0 : i32, i32, i32
  }
  func.func @transform_1(%arg0: i32) -> (i32, i32, i32) {
    %c0_i32 = arith.constant 0 : i32
    %c0_i32_0 = arith.constant 0 : i32
    %c0_i32_1 = arith.constant 0 : i32
    %c0_i32_2 = arith.constant 0 : i32
    return %c0_i32, %c0_i32_0, %c0_i32_1 : i32, i32, i32
  }
  func.func @transform_2(%arg0: i32) -> (i32, i32) {
    %c0_i32 = arith.constant 0 : i32
    %c0_i32_0 = arith.constant 0 : i32
    %c0_i32_1 = arith.constant 0 : i32
    return %c0_i32, %c0_i32_0 : i32, i32
  }
  func.func @transform_3(%arg0: i32) -> (i32, i32, i32) {
    %c0_i32 = arith.constant 0 : i32
    %c0_i32_0 = arith.constant 0 : i32
    %c0_i32_1 = arith.constant 0 : i32
    return %arg0, %c0_i32, %c0_i32_0 : i32, i32, i32
  }
}

module attributes {stable_mosaic.version = 11 : i64} {
  func.func @_head_kernel(%arg0: i32, %arg1: memref<1x64x16xf32, #tpu.memory_space<vmem>>, %arg2: memref<16x32xf32, #tpu.memory_space<vmem>>, %arg3: memref<1x32xf32, #tpu.memory_space<vmem>>, %arg4: memref<1x32xf32, #tpu.memory_space<vmem>>, %arg5: memref<1x1xf32, #tpu.memory_space<vmem>>, %arg6: memref<1x1x32xf32, #tpu.memory_space<vmem>>, %arg7: memref<1x1x1xf32, #tpu.memory_space<vmem>>) attributes {dimension_semantics = [#tpu.dimension_semantics<parallel>], iteration_bounds = array<i64: 2>, scalar_prefetch = 0 : i64, scratch_operands = 0 : i64, tpu.core_type = #tpu.core_type<tc>, window_params = [{transform_indices = @transform_0, window_bounds = array<i64: 1, 64, 16>}, {pipeline_mode = #tpu.pipeline_mode<synchronous>, transform_indices = @transform_1, window_bounds = array<i64: 16, 32>}, {pipeline_mode = #tpu.pipeline_mode<synchronous>, transform_indices = @transform_2, window_bounds = array<i64: 1, 32>}, {pipeline_mode = #tpu.pipeline_mode<synchronous>, transform_indices = @transform_3, window_bounds = array<i64: 1, 32>}, {pipeline_mode = #tpu.pipeline_mode<synchronous>, transform_indices = @transform_4, window_bounds = array<i64: 1, 1>}, {transform_indices = @transform_5, window_bounds = array<i64: 1, 1, 32>}, {transform_indices = @transform_6, window_bounds = array<i64: 1, 1, 1>}]} {
    %c0 = arith.constant 0 : index
    %c0_0 = arith.constant 0 : index
    %c0_1 = arith.constant 0 : index
    %0 = vector.load %arg1[%c0, %c0_0, %c0_1] : memref<1x64x16xf32, #tpu.memory_space<vmem>>, vector<1x64x16xf32>
    %1 = vector.shape_cast %0 : vector<1x64x16xf32> to vector<64x16xf32>
    %c0_2 = arith.constant 0 : index
    %c0_3 = arith.constant 0 : index
    %2 = vector.load %arg2[%c0_2, %c0_3] : memref<16x32xf32, #tpu.memory_space<vmem>>, vector<16x32xf32>
    %cst = arith.constant dense<0.000000e+00> : vector<64x32xf32>
    %3 = tpu.matmul %1, %2, %cst {dimension_numbers = #tpu.dot_dimension_numbers<[1], [0], [0], [1], [0, 0, 1, 1], [], []>} : vector<64x16xf32>, vector<16x32xf32>, vector<64x32xf32> -> vector<64x32xf32>
    %cst_4 = arith.constant dense<0.000000e+00> : vector<32xf32>
    %4 = vector.multi_reduction <add>, %3, %cst_4 [0] : vector<64x32xf32> to vector<32xf32>
    %5 = vector.shape_cast %4 : vector<32xf32> to vector<1x32xf32>
    %cst_5 = arith.constant 6.400000e+01 : f32
    %6 = vector.broadcast %cst_5 : f32 to vector<1x32xf32>
    %7 = arith.divf %5, %6 : vector<1x32xf32>
    %c0_6 = arith.constant 0 : index
    %c0_7 = arith.constant 0 : index
    %8 = vector.load %arg3[%c0_6, %c0_7] : memref<1x32xf32, #tpu.memory_space<vmem>>, vector<1x32xf32>
    %9 = arith.addf %7, %8 : vector<1x32xf32>
    %c0_8 = arith.constant 0 : index
    %c0_9 = arith.constant 0 : index
    %10 = vector.load %arg4[%c0_8, %c0_9] : memref<1x32xf32, #tpu.memory_space<vmem>>, vector<1x32xf32>
    %11 = arith.mulf %9, %10 : vector<1x32xf32>
    %cst_10 = arith.constant dense<0.000000e+00> : vector<1xf32>
    %12 = vector.multi_reduction <add>, %11, %cst_10 [1] : vector<1x32xf32> to vector<1xf32>
    %13 = vector.shape_cast %12 : vector<1xf32> to vector<1x1xf32>
    %c0_11 = arith.constant 0 : index
    %c0_12 = arith.constant 0 : index
    %14 = vector.load %arg5[%c0_11, %c0_12] : memref<1x1xf32, #tpu.memory_space<vmem>>, vector<1x1xf32>
    %15 = arith.addf %13, %14 : vector<1x1xf32>
    %c0_13 = arith.constant 0 : index
    %c0_14 = arith.constant 0 : index
    %c0_15 = arith.constant 0 : index
    %16 = vector.load %arg6[%c0_13, %c0_14, %c0_15] : memref<1x1x32xf32, #tpu.memory_space<vmem>>, vector<1x1x32xf32>
    %17 = vector.shape_cast %16 : vector<1x1x32xf32> to vector<1x32xf32>
    %18 = vector.shape_cast %9 : vector<1x32xf32> to vector<1x1x32xf32>
    tpu.vector_store %arg6[%c0_13, %c0_14, %c0_15], %18 {strides = array<i32>} : memref<1x1x32xf32, #tpu.memory_space<vmem>>, vector<1x1x32xf32>,
    %c0_16 = arith.constant 0 : index
    %c0_17 = arith.constant 0 : index
    %c0_18 = arith.constant 0 : index
    %19 = vector.load %arg7[%c0_16, %c0_17, %c0_18] : memref<1x1x1xf32, #tpu.memory_space<vmem>>, vector<1x1x1xf32>
    %20 = vector.shape_cast %19 : vector<1x1x1xf32> to vector<1x1xf32>
    %21 = vector.shape_cast %15 : vector<1x1xf32> to vector<1x1x1xf32>
    tpu.vector_store %arg7[%c0_16, %c0_17, %c0_18], %21 {strides = array<i32>} : memref<1x1x1xf32, #tpu.memory_space<vmem>>, vector<1x1x1xf32>,
    return
  }
  func.func @transform_0(%arg0: i32) -> (i32, i32, i32) {
    %c0_i32 = arith.constant 0 : i32
    %c0_i32_0 = arith.constant 0 : i32
    %c0_i32_1 = arith.constant 0 : i32
    return %arg0, %c0_i32, %c0_i32_0 : i32, i32, i32
  }
  func.func @transform_1(%arg0: i32) -> (i32, i32) {
    %c0_i32 = arith.constant 0 : i32
    %c0_i32_0 = arith.constant 0 : i32
    %c0_i32_1 = arith.constant 0 : i32
    return %c0_i32, %c0_i32_0 : i32, i32
  }
  func.func @transform_2(%arg0: i32) -> (i32, i32) {
    %c0_i32 = arith.constant 0 : i32
    %c0_i32_0 = arith.constant 0 : i32
    %c0_i32_1 = arith.constant 0 : i32
    return %c0_i32, %c0_i32_0 : i32, i32
  }
  func.func @transform_3(%arg0: i32) -> (i32, i32) {
    %c0_i32 = arith.constant 0 : i32
    %c0_i32_0 = arith.constant 0 : i32
    %c0_i32_1 = arith.constant 0 : i32
    return %c0_i32, %c0_i32_0 : i32, i32
  }
  func.func @transform_4(%arg0: i32) -> (i32, i32) {
    %c0_i32 = arith.constant 0 : i32
    %c0_i32_0 = arith.constant 0 : i32
    %c0_i32_1 = arith.constant 0 : i32
    return %c0_i32, %c0_i32_0 : i32, i32
  }
  func.func @transform_5(%arg0: i32) -> (i32, i32, i32) {
    %c0_i32 = arith.constant 0 : i32
    %c0_i32_0 = arith.constant 0 : i32
    %c0_i32_1 = arith.constant 0 : i32
    return %arg0, %c0_i32, %c0_i32_0 : i32, i32, i32
  }
  func.func @transform_6(%arg0: i32) -> (i32, i32, i32) {
    %c0_i32 = arith.constant 0 : i32
    %c0_i32_0 = arith.constant 0 : i32
    %c0_i32_1 = arith.constant 0 : i32
    return %arg0, %c0_i32, %c0_i32_0 : i32, i32, i32
  }
}

</mosaic_0001>

<llo_original>
// kernel: _lambda_.3
$region0: #{_lambda_.3}
  #allocation0 [shape = 'u32[]', space=smem, size = 0x4, offset = 0x4, fixed_abs, tag = 'smem constant byte address 0x4 - core index']
  #allocation1 [shape = 'u32[72,128]{1,0:T(1,128)}', space=vmem, size = 0x9000, scoped, tag = 'internal scratch']
  #allocation2 [shape = 'f32[1,1]{1,0:T(1,128)S(6)}', space=smem, size = 0x200, scoped, tag = 'scoped memory for _lambda_.3']
  %s0 = inlined_call_operand.vmem [shape: f32[2,384,27], index: 0, kind: input, shape index: {}]
  %s1 = inlined_call_operand.vmem [shape: bf16[3,27,8], index: 1, kind: input, shape index: {}]
  %s2 = inlined_call_operand.vmem [shape: f32[1,8], index: 2, kind: input, shape index: {}]
  %s3 = inlined_call_operand.vmem [shape: bf16[8,1], index: 3, kind: input, shape index: {}]
  %s4 = inlined_call_operand.vmem [shape: bf16[8,1], index: 4, kind: input, shape index: {}]
  %s5 = inlined_call_operand.vmem [shape: bf16[8,8], index: 5, kind: input, shape index: {}]
  %s6 = inlined_call_operand.<no memory space> [shape: f32[1,1], index: 6, kind: input, shape index: {}]
  %s7 = inlined_call_operand.vmem [shape: f32[2,256,8], index: 7, kind: output, shape index: {0}]
  %s8 = inlined_call_operand.hbm [shape: f32[2,256,256], index: 8, kind: output, shape index: {1}]
  %9 = xla_tuple %s7, %s8
  %s10 = sld [smem:[#allocation0]]
  $region69: #{_lambda_.3} parent=0
    _
  %s12 = ssub.s32 1, %s10
  %s13 = scalar_select 0, %s12, %s10
  %14 = sst [smem:[#allocation2]] %s6
  $region1: #{_lambda_.3} parent=0
    #allocation3 [shape = 'u8[524288]{0}', space=vmem, size = 0x80000, scoped, tag = 'output window, operand 1']
    #allocation4 [shape = 's32[2]{0}', space=sflag, size = 0x8, scoped, tag = 'scoped memory for _lambda_.3']
    %15 = vsyncpa [#allocation4], 0
    %s16 = scalar_lea.sflag [#allocation4], 1
    %17 = vsyncpa %s16, 0
    loop: start=0, step=1, limit=4
    $region2: #{_lambda_.3} parent=1 // loop_pre_header
      _
    $region3: #{_lambda_.3} parent=1 // loop_header
      %s19 = sphi 0, %s23
      %p20 = scmp.ge.s32.totalorder %s19, 4
      %s29 = sphi 0, %s31
      %s32 = sphi 0, %s29
      %s33 = sphi 0, %s32
      %s49 = sphi 0, %s33
      %s53 = sphi 0, %s53
      %s55 = sphi 0, %s53
      %s56 = sphi 0, %s55
      %s70 = sphi 0, %s56
      %s74 = sphi 0, %s74
      %s76 = sphi 0, %s74
      %s77 = sphi 0, %s76
      %s91 = sphi 0, %s77
      %s95 = sphi 0, %s95
      %s97 = sphi 0, %s95
      %s98 = sphi 0, %s97
      %s112 = sphi 0, %s98
      %s116 = sphi 0, %s116
      %s118 = sphi 0, %s116
      %s119 = sphi 0, %s118
      %s133 = sphi 0, %s119
      %s137 = sphi 0, %s137
      %s139 = sphi 0, %s137
      %s140 = sphi 0, %s139
      %s154 = sphi 0, %s140
      %s158 = sphi 0, %s158
      %s160 = sphi 0, %s158
      %s161 = sphi 0, %s160
      %s175 = sphi 0, %s161
      %s181 = sphi 0, %s183
      %s184 = sphi 0, %s181
      %s185 = sphi 0, %s184
      %s201 = sphi 0, %s185
      %s207 = sphi 0, %s209
      %s210 = sphi 0, %s207
      %s211 = sphi 0, %s210
      %s227 = sphi 0, %s211
    $region4: #{_lambda_.3} parent=1 // loop_header_branch
      %22 = sbr.rel (%p20) target = $region8
    $region5: #{_lambda_.3} parent=1 // loop_body
      %s24 = ssub.s32 %s19, 1
      %s25 = ssub.s32 %s19, 2
      %s26 = sadd.s32 %s19, 1
      %s27 = ssub.s32 %s19, %s26
      %p28 = scmp.eq.s32.totalorder %s27, 0
      %s30 = sadd.s32 %s29, 1
      %s31 = scalar_select %p28, %s29, %s30
      %p34 = pneg %p28
      %p35 = scmp.eq.s32.totalorder %s19, 1
      %p36 = por %p34, %p35
      %p37 = scmp.ne.s32.totalorder %s29, %s32
      %p38 = scmp.eq.s32.totalorder %s19, 0
      %p39 = por %p37, %p38
      %p40 = scmp.ne.s32.totalorder %s29, %s32
      %p41 = scmp.eq.s32.totalorder %s24, 1
      %p42 = por %p40, %p41
      %p43 = scmp.ne.s32.totalorder %s32, %s33
      %p44 = scmp.eq.s32.totalorder %s24, 0
      %p45 = por %p43, %p44
      %p46 = scmp.ne.s32.totalorder %s32, %s33
      %p47 = scmp.eq.s32.totalorder %s25, 1
      %p48 = por %p46, %p47
      %p50 = scmp.ne.s32.totalorder %s33, %s49
      %p51 = scmp.eq.s32.totalorder %s25, 0
      %p52 = por %p50, %p51
      %s54 = sadd.s32 %s53, 1
      %p57 = scmp.eq.s32.totalorder %s19, 1
      %p58 = scmp.ne.s32.totalorder %s53, %s55
      %p59 = scmp.eq.s32.totalorder %s19, 0
      %p60 = por %p58, %p59
      %p61 = scmp.ne.s32.totalorder %s53, %s55
      %p62 = scmp.eq.s32.totalorder %s24, 1
      %p63 = por %p61, %p62
      %p64 = scmp.ne.s32.totalorder %s55, %s56
      %p65 = scmp.eq.s32.totalorder %s24, 0
      %p66 = por %p64, %p65
      %p67 = scmp.ne.s32.totalorder %s55, %s56
      %p68 = scmp.eq.s32.totalorder %s25, 1
      %p69 = por %p67, %p68
      %p71 = scmp.ne.s32.totalorder %s56, %s70
      %p72 = scmp.eq.s32.totalorder %s25, 0
      %p73 = por %p71, %p72
      %s75 = sadd.s32 %s74, 1
      %p78 = scmp.eq.s32.totalorder %s19, 1
      %p79 = scmp.ne.s32.totalorder %s74, %s76
      %p80 = scmp.eq.s32.totalorder %s19, 0
      %p81 = por %p79, %p80
      %p82 = scmp.ne.s32.totalorder %s74, %s76
      %p83 = scmp.eq.s32.totalorder %s24, 1
      %p84 = por %p82, %p83
      %p85 = scmp.ne.s32.totalorder %s76, %s77
      %p86 = scmp.eq.s32.totalorder %s24, 0
      %p87 = por %p85, %p86
      %p88 = scmp.ne.s32.totalorder %s76, %s77
      %p89 = scmp.eq.s32.totalorder %s25, 1
      %p90 = por %p88, %p89
      %p92 = scmp.ne.s32.totalorder %s77, %s91
      %p93 = scmp.eq.s32.totalorder %s25, 0
      %p94 = por %p92, %p93
      %s96 = sadd.s32 %s95, 1
      %p99 = scmp.eq.s32.totalorder %s19, 1
      %p100 = scmp.ne.s32.totalorder %s95, %s97
      %p101 = scmp.eq.s32.totalorder %s19, 0
      %p102 = por %p100, %p101
      %p103 = scmp.ne.s32.totalorder %s95, %s97
      %p104 = scmp.eq.s32.totalorder %s24, 1
      %p105 = por %p103, %p104
      %p106 = scmp.ne.s32.totalorder %s97, %s98
      %p107 = scmp.eq.s32.totalorder %s24, 0
      %p108 = por %p106, %p107
      %p109 = scmp.ne.s32.totalorder %s97, %s98
      %p110 = scmp.eq.s32.totalorder %s25, 1
      %p111 = por %p109, %p110
      %p113 = scmp.ne.s32.totalorder %s98, %s112
      %p114 = scmp.eq.s32.totalorder %s25, 0
      %p115 = por %p113, %p114
      %s117 = sadd.s32 %s116, 1
      %p120 = scmp.eq.s32.totalorder %s19, 1
      %p121 = scmp.ne.s32.totalorder %s116, %s118
      %p122 = scmp.eq.s32.totalorder %s19, 0
      %p123 = por %p121, %p122
      %p124 = scmp.ne.s32.totalorder %s116, %s118
      %p125 = scmp.eq.s32.totalorder %s24, 1
      %p126 = por %p124, %p125
      %p127 = scmp.ne.s32.totalorder %s118, %s119
      %p128 = scmp.eq.s32.totalorder %s24, 0
      %p129 = por %p127, %p128
      %p130 = scmp.ne.s32.totalorder %s118, %s119
      %p131 = scmp.eq.s32.totalorder %s25, 1
      %p132 = por %p130, %p131
      %p134 = scmp.ne.s32.totalorder %s119, %s133
      %p135 = scmp.eq.s32.totalorder %s25, 0
      %p136 = por %p134, %p135
      %s138 = sadd.s32 %s137, 1
      %p141 = scmp.eq.s32.totalorder %s19, 1
      %p142 = scmp.ne.s32.totalorder %s137, %s139
      %p143 = scmp.eq.s32.totalorder %s19, 0
      %p144 = por %p142, %p143
      %p145 = scmp.ne.s32.totalorder %s137, %s139
      %p146 = scmp.eq.s32.totalorder %s24, 1
      %p147 = por %p145, %p146
      %p148 = scmp.ne.s32.totalorder %s139, %s140
      %p149 = scmp.eq.s32.totalorder %s24, 0
      %p150 = por %p148, %p149
      %p151 = scmp.ne.s32.totalorder %s139, %s140
      %p152 = scmp.eq.s32.totalorder %s25, 1
      %p153 = por %p151, %p152
      %p155 = scmp.ne.s32.totalorder %s140, %s154
      %p156 = scmp.eq.s32.totalorder %s25, 0
      %p157 = por %p155, %p156
      %s159 = sadd.s32 %s158, 1
      %p162 = scmp.eq.s32.totalorder %s19, 1
      %p163 = scmp.ne.s32.totalorder %s158, %s160
      %p164 = scmp.eq.s32.totalorder %s19, 0
      %p165 = por %p163, %p164
      %p166 = scmp.ne.s32.totalorder %s158, %s160
      %p167 = scmp.eq.s32.totalorder %s24, 1
      %p168 = por %p166, %p167
      %p169 = scmp.ne.s32.totalorder %s160, %s161
      %p170 = scmp.eq.s32.totalorder %s24, 0
      %p171 = por %p169, %p170
      %p172 = scmp.ne.s32.totalorder %s160, %s161
      %p173 = scmp.eq.s32.totalorder %s25, 1
      %p174 = por %p172, %p173
      %p176 = scmp.ne.s32.totalorder %s161, %s175
      %p177 = scmp.eq.s32.totalorder %s25, 0
      %p178 = por %p176, %p177
      %s179 = ssub.s32 %s19, %s26
      %p180 = scmp.eq.s32.totalorder %s179, 0
      %s182 = sadd.s32 %s181, 1
      %s183 = scalar_select %p180, %s181, %s182
      %p186 = pneg %p180
      %p187 = scmp.eq.s32.totalorder %s19, 1
      %p188 = por %p186, %p187
      %p189 = scmp.ne.s32.totalorder %s181, %s184
      %p190 = scmp.eq.s32.totalorder %s19, 0
      %p191 = por %p189, %p190
      %p192 = scmp.ne.s32.totalorder %s181, %s184
      %p193 = scmp.eq.s32.totalorder %s24, 1
      %p194 = por %p192, %p193
      %p195 = scmp.ne.s32.totalorder %s184, %s185
      %p196 = scmp.eq.s32.totalorder %s24, 0
      %p197 = por %p195, %p196
      %p198 = scmp.ne.s32.totalorder %s184, %s185
      %p199 = scmp.eq.s32.totalorder %s25, 1
      %p200 = por %p198, %p199
      %p202 = scmp.ne.s32.totalorder %s185, %s201
      %p203 = scmp.eq.s32.totalorder %s25, 0
      %p204 = por %p202, %p203
      %s205 = ssub.s32 %s19, %s26
      %p206 = scmp.eq.s32.totalorder %s205, 0
      %s208 = sadd.s32 %s207, 1
      %s209 = scalar_select %p206, %s207, %s208
      %p212 = pneg %p206
      %p213 = scmp.eq.s32.totalorder %s19, 1
      %p214 = por %p212, %p213
      %p215 = scmp.ne.s32.totalorder %s207, %s210
      %p216 = scmp.eq.s32.totalorder %s19, 0
      %p217 = por %p215, %p216
      %p218 = scmp.ne.s32.totalorder %s207, %s210
      %p219 = scmp.eq.s32.totalorder %s24, 1
      %p220 = por %p218, %p219
      %p221 = scmp.ne.s32.totalorder %s210, %s211
      %p222 = scmp.eq.s32.totalorder %s24, 0
      %p223 = por %p221, %p222
      %p224 = scmp.ne.s32.totalorder %s210, %s211
      %p225 = scmp.eq.s32.totalorder %s25, 1
      %p226 = por %p224, %p225
      %p228 = scmp.ne.s32.totalorder %s211, %s227
      %p229 = scmp.eq.s32.totalorder %s25, 0
      %p230 = por %p228, %p229
      %p231 = scmp.le.s32.totalorder 1, %s19
      %p232 = scmp.lt.s32.totalorder %s19, 3
      %p233 = pnand %p231, %p232
      %p234 = pneg %p233
      // Predicated region
      $region9: #{_lambda_.3} parent=5 // pred_check
        _
      $region10: #{_lambda_.3} parent=5 // pred_check_branch
        %236 = sbr.rel (%p233) target = $region12
      $region11: #{_lambda_.3} parent=5 // pred_region
        %s237 = ssub.s32 %s19, 1
        // Predicated region
        $region13: #{_lambda_.3} parent=11 // pred_check
          %p238 = pneg %p66
        $region14: #{_lambda_.3} parent=11 // pred_check_branch
          %240 = sbr.rel (%p238) target = $region16
        $region15: #{_lambda_.3} parent=11 // pred_region
          _
        $region16: #{_lambda_.3} parent=11 // pred_fallthru
          _
        // Predicated region
        $region17: #{_lambda_.3} parent=11 // pred_check
          %p241 = pneg %p87
        $region18: #{_lambda_.3} parent=11 // pred_check_branch
          %243 = sbr.rel (%p241) target = $region20
        $region19: #{_lambda_.3} parent=11 // pred_region
          _
        $region20: #{_lambda_.3} parent=11 // pred_fallthru
          _
        // Predicated region
        $region21: #{_lambda_.3} parent=11 // pred_check
          %p244 = pneg %p108
        $region22: #{_lambda_.3} parent=11 // pred_check_branch
          %246 = sbr.rel (%p244) target = $region24
        $region23: #{_lambda_.3} parent=11 // pred_region
          _
        $region24: #{_lambda_.3} parent=11 // pred_fallthru
          _
        // Predicated region
        $region25: #{_lambda_.3} parent=11 // pred_check
          %p247 = pneg %p129
        $region26: #{_lambda_.3} parent=11 // pred_check_branch
          %249 = sbr.rel (%p247) target = $region28
        $region27: #{_lambda_.3} parent=11 // pred_region
          _
        $region28: #{_lambda_.3} parent=11 // pred_fallthru
          _
        // Predicated region
        $region29: #{_lambda_.3} parent=11 // pred_check
          %p250 = pneg %p150
        $region30: #{_lambda_.3} parent=11 // pred_check_branch
          %252 = sbr.rel (%p250) target = $region32
        $region31: #{_lambda_.3} parent=11 // pred_region
          _
        $region32: #{_lambda_.3} parent=11 // pred_fallthru
          _
        // Predicated region
        $region33: #{_lambda_.3} parent=11 // pred_check
          %p253 = pneg %p171
        $region34: #{_lambda_.3} parent=11 // pred_check_branch
          %255 = sbr.rel (%p253) target = $region36
        $region35: #{_lambda_.3} parent=11 // pred_region
          _
        $region36: #{_lambda_.3} parent=11 // pred_fallthru
          _
      $region12: #{_lambda_.3} parent=5 // pred_fallthru
        _
      %p256 = scmp.lt.s32.totalorder %s19, 2
      // Predicated region
      $region37: #{_lambda_.3} parent=5 // pred_check
        %p257 = pneg %p256
      $region38: #{_lambda_.3} parent=5 // pred_check_branch
        %259 = sbr.rel (%p257) target = $region40
      $region39: #{_lambda_.3} parent=5 // pred_region
        // Predicated region
        $region41: #{_lambda_.3} parent=39 // pred_check
          %p260 = pneg %p39
        $region42: #{_lambda_.3} parent=39 // pred_check_branch
          %262 = sbr.rel (%p260) target = $region44
        $region43: #{_lambda_.3} parent=39 // pred_region
          %p263 = scmp.lt.s32.totalorder %s19, 1
          %s264 = scalar_select %p263, %s19, 1
          %s265 = smul.addr %s264, 48
          %s266 = smul.addr %s265, 8
          %s267 = scalar_lea.vmem %s0, %s266
        $region44: #{_lambda_.3} parent=39 // pred_fallthru
          _
      $region40: #{_lambda_.3} parent=5 // pred_fallthru
        _
      %p268 = scmp.le.s32.totalorder 1, %s19
      %p269 = scmp.lt.s32.totalorder %s19, 3
      %p270 = pnand %p268, %p269
      %p271 = pneg %p270
      // Predicated region
      $region45: #{_lambda_.3} parent=5 // pred_check
        _
      $region46: #{_lambda_.3} parent=5 // pred_check_branch
        %273 = sbr.rel (%p270) target = $region48
      $region47: #{_lambda_.3} parent=5 // pred_region
        %s274 = ssub.s32 %s19, 1
        %p275 = scmp.lt.s32.totalorder %s24, 1
        %s276 = scalar_select %p275, %s24, 1
        %s277 = smul.addr %s276, 48
        %s278 = smul.addr %s277, 8
        %s279 = scalar_lea.vmem %s0, %s278
        %p280 = pneg %p45
        %p281 = pneg %p42
        %p282 = pneg %p66
        %p283 = pneg %p63
        %p284 = pneg %p87
        %p285 = pneg %p84
        %p286 = pneg %p108
        %p287 = pneg %p105
        %p288 = pneg %p129
        %p289 = pneg %p126
        %p290 = pneg %p150
        %p291 = pneg %p147
        %p292 = pneg %p171
        %p293 = pneg %p168
        %p294 = pneg %p197
        %p295 = pneg %p194
        %p296 = scmp.lt.s32.totalorder %s24, 1
        %s297 = scalar_select %p296, %s24, 1
        %s298 = smul.addr %s297, 32
        %s299 = smul.addr %s298, 8
        %s300 = scalar_lea.vmem %s7, %s299
        %p301 = pneg %p223
        %p302 = pneg %p220
        %s303 = sand.u32 %s210, 1
        %s304 = scalar_lea.sflag [#allocation4], %s303
        %s305 = sand.u32 %s210, 1
        %s306 = smul.addr %s305, 512
        %s307 = scalar_lea.vmem [#allocation3], %s306
        %p308 = scmp.lt.s32.totalorder %s24, 1
        %s309 = scalar_select %p308, %s24, 1
        %s310 = smul.addr %s309, 48
        %s311 = smul.addr %s310, 8
        %s312 = scalar_lea.vmem %s0, %s311
        %p313 = scmp.lt.s32.totalorder %s24, 1
        %s314 = scalar_select %p313, %s24, 1
        %s315 = smul.addr %s314, 32
        %s316 = smul.addr %s315, 8
        %s317 = scalar_lea.vmem %s7, %s316
        %v319 = vld [vmem:[%s312] sm:$0xff]
        %v320 = vld [vmem:[%s312 + $0x8] sm:$0xff]
        %v321 = vld [vmem:[%s312 + $0x10] sm:$0xff]
        %v322 = vld [vmem:[%s312 + $0x18] sm:$0xff]
        %v323 = vld [vmem:[%s312 + $0x20] sm:$0xff]
        %v324 = vld [vmem:[%s312 + $0x28] sm:$0xff]
        %v325 = vld [vmem:[%s312 + $0x30] sm:$0xff]
        %v326 = vld [vmem:[%s312 + $0x38] sm:$0xff]
        %v327 = vld [vmem:[%s312 + $0x40] sm:$0xff]
        %v328 = vld [vmem:[%s312 + $0x48] sm:$0xff]
        %v329 = vld [vmem:[%s312 + $0x50] sm:$0xff]
        %v330 = vld [vmem:[%s312 + $0x58] sm:$0xff]
        %v331 = vld [vmem:[%s312 + $0x60] sm:$0xff]
        %v332 = vld [vmem:[%s312 + $0x68] sm:$0xff]
        %v333 = vld [vmem:[%s312 + $0x70] sm:$0xff]
        %v334 = vld [vmem:[%s312 + $0x78] sm:$0xff]
        %v335 = vld [vmem:[%s312 + $0x80] sm:$0xff]
        %v336 = vld [vmem:[%s312 + $0x88] sm:$0xff]
        %v337 = vld [vmem:[%s312 + $0x90] sm:$0xff]
        %v338 = vld [vmem:[%s312 + $0x98] sm:$0xff]
        %v339 = vld [vmem:[%s312 + $0xa0] sm:$0xff]
        %v340 = vld [vmem:[%s312 + $0xa8] sm:$0xff]
        %v341 = vld [vmem:[%s312 + $0xb0] sm:$0xff]
        %v342 = vld [vmem:[%s312 + $0xb8] sm:$0xff]
        %v343 = vld [vmem:[%s312 + $0xc0] sm:$0xff]
        %v344 = vld [vmem:[%s312 + $0xc8] sm:$0xff]
        %v345 = vld [vmem:[%s312 + $0xd0] sm:$0xff]
        %v346 = vld [vmem:[%s312 + $0xd8] sm:$0xff]
        %v347 = vld [vmem:[%s312 + $0xe0] sm:$0xff]
        %v348 = vld [vmem:[%s312 + $0xe8] sm:$0xff]
        %v349 = vld [vmem:[%s312 + $0xf0] sm:$0xff]
        %v350 = vld [vmem:[%s312 + $0xf8] sm:$0xff]
        %v351 = vld [vmem:[%s312 + $0x100] sm:$0xff]
        %v352 = vld [vmem:[%s312 + $0x108] sm:$0xff]
        %v353 = vld [vmem:[%s312 + $0x110] sm:$0xff]
        %v354 = vld [vmem:[%s312 + $0x118] sm:$0xff]
        %v355 = vld [vmem:[%s312 + $0x120] sm:$0xff]
        %v356 = vld [vmem:[%s312 + $0x128] sm:$0xff]
        %v357 = vld [vmem:[%s312 + $0x130] sm:$0xff]
        %v358 = vld [vmem:[%s312 + $0x138] sm:$0xff]
        %v359 = vld [vmem:[%s312 + $0x140] sm:$0xff]
        %v360 = vld [vmem:[%s312 + $0x148] sm:$0xff]
        %v361 = vld [vmem:[%s312 + $0x150] sm:$0xff]
        %v362 = vld [vmem:[%s312 + $0x158] sm:$0xff]
        %v363 = vld [vmem:[%s312 + $0x160] sm:$0xff]
        %v364 = vld [vmem:[%s312 + $0x168] sm:$0xff]
        %v365 = vld [vmem:[%s312 + $0x170] sm:$0xff]
        %v366 = vld [vmem:[%s312 + $0x178] sm:$0xff]
        %v367 = vld [vmem:[%s1] sm:$0xf]
        %v368 = vld [vmem:[%s1 + $0x4] sm:$0xf]
        %v369 = vld [vmem:[%s1 + $0x8] sm:$0xf]
        %v370 = vld [vmem:[%s1 + $0xc] sm:$0x3]
        %v371 = vld [vmem:[%s1 + $0x10] sm:$0xf]
        %v372 = vld [vmem:[%s1 + $0x14] sm:$0xf]
        %v373 = vld [vmem:[%s1 + $0x18] sm:$0xf]
        %v374 = vld [vmem:[%s1 + $0x1c] sm:$0x3]
        %v375 = vld [vmem:[%s1 + $0x20] sm:$0xf]
        %v376 = vld [vmem:[%s1 + $0x24] sm:$0xf]
        %v377 = vld [vmem:[%s1 + $0x28] sm:$0xf]
        %v378 = vld [vmem:[%s1 + $0x2c] sm:$0x3]
        %v379 = vpack.c.bf16 %v320, %v319
        %v380 = vpack.c.bf16 %v322, %v321
        %v381 = vpack.c.bf16 %v324, %v323
        %v382 = vpack.c.bf16 %v326, %v325
        %v383 = vpack.c.bf16 %v328, %v327
        %v384 = vpack.c.bf16 %v330, %v329
        %v385 = vpack.c.bf16 %v332, %v331
        %v386 = vpack.c.bf16 %v334, %v333
        %v387 = vpack.c.bf16 %v336, %v335
        %v388 = vpack.c.bf16 %v338, %v337
        %v389 = vpack.c.bf16 %v340, %v339
        %v390 = vpack.c.bf16 %v342, %v341
        %v391 = vpack.c.bf16 %v344, %v343
        %v392 = vpack.c.bf16 %v346, %v345
        %v393 = vpack.c.bf16 %v348, %v347
        %v394 = vpack.c.bf16 %v350, %v349
        %v395 = vpack.c.bf16 %v352, %v351
        %v396 = vpack.c.bf16 %v354, %v353
        %v397 = vpack.c.bf16 %v356, %v355
        %v398 = vpack.c.bf16 %v358, %v357
        %v403 = vunpack.c.l.b16 %v371
        %v404 = vunpack.c.l.b16 %v372
        %v405 = vunpack.c.l.b16 %v373
        %v406 = vunpack.c.l.b16 %v374
        %v407 = vpack.c.b16 %v404, %v403
        %v408 = vpack.c.b16 %v406, %v405
        %vm410 = vcmask 220160
        %v412 = vsel %vm410, %v383, 0
        %v415 = vsel %vm410, %v384, 0
        %v418 = vsel %vm410, %v385, 0
        %v421 = vsel %vm410, %v386, 0
        %v424 = vsel %vm410, %v387, 0
        %v427 = vsel %vm410, %v388, 0
        %v430 = vsel %vm410, %v389, 0
        %v433 = vsel %vm410, %v390, 0
        %v436 = vsel %vm410, %v391, 0
        %v439 = vsel %vm410, %v392, 0
        %v442 = vsel %vm410, %v393, 0
        %v445 = vsel %vm410, %v394, 0
        %v448 = vsel %vm410, %v395, 0
        %v451 = vsel %vm410, %v396, 0
        %v454 = vsel %vm410, %v397, 0
        %v457 = vsel %vm410, %v398, 0
        %vm459 = vcmask 1044480
        %vm460 = vcmask 1045504
        %v461 = vsel %vm459, 4294967295, 65535
        %v462 = vsel %vm460, %v461, 0
        %v464 = vand.u32 %v408, %v462
        %466 = vmatpush.bf16.msra.mxu0 0
        %467 = vmatpush.bf16.msra.mxu0 0
        %468 = vmatpush.bf16.msra.mxu0 0
        %469 = vmatpush.bf16.msra.mxu0 0
        %470 = vmatpush.bf16.msra.mxu0 0
        %471 = vmatpush.bf16.msra.mxu0 0
        %472 = vmatpush.bf16.msra.mxu0 %v464
        %473 = vmatpush.bf16.msra.mxu0 %v407
        %474 = vmatmul.bf16.gmra.mxu0 %v412
        %v475 = vpop.f32.mrf.mxu0
        %v476 = vadd.f32 0.0, %v475
        %v477 = vpop.f32.mrf.mxu0
        %v478 = vadd.f32 0.0, %v477
        %479 = vmatmul.bf16.gmra.mxu0 %v415
        %v480 = vpop.f32.mrf.mxu0
        %v481 = vadd.f32 0.0, %v480
        %v482 = vpop.f32.mrf.mxu0
        %v483 = vadd.f32 0.0, %v482
        %484 = vmatmul.bf16.gmra.mxu0 %v418
        %v485 = vpop.f32.mrf.mxu0
        %v486 = vadd.f32 0.0, %v485
        %v487 = vpop.f32.mrf.mxu0
        %v488 = vadd.f32 0.0, %v487
        %489 = vmatmul.bf16.gmra.mxu0 %v421
        %v490 = vpop.f32.mrf.mxu0
        %v491 = vadd.f32 0.0, %v490
        %v492 = vpop.f32.mrf.mxu0
        %v493 = vadd.f32 0.0, %v492
        %494 = vmatmul.bf16.gmra.mxu0 %v424
        %v495 = vpop.f32.mrf.mxu0
        %v496 = vadd.f32 0.0, %v495
        %v497 = vpop.f32.mrf.mxu0
        %v498 = vadd.f32 0.0, %v497
        %499 = vmatmul.bf16.gmra.mxu0 %v427
        %v500 = vpop.f32.mrf.mxu0
        %v501 = vadd.f32 0.0, %v500
        %v502 = vpop.f32.mrf.mxu0
        %v503 = vadd.f32 0.0, %v502
        %504 = vmatmul.bf16.gmra.mxu0 %v430
        %v505 = vpop.f32.mrf.mxu0
        %v506 = vadd.f32 0.0, %v505
        %v507 = vpop.f32.mrf.mxu0
        %v508 = vadd.f32 0.0, %v507
        %509 = vmatmul.bf16.gmra.mxu0 %v433
        %v510 = vpop.f32.mrf.mxu0
        %v511 = vadd.f32 0.0, %v510
        %v512 = vpop.f32.mrf.mxu0
        %v513 = vadd.f32 0.0, %v512
        %514 = vmatmul.bf16.gmra.mxu0 %v436
        %v515 = vpop.f32.mrf.mxu0
        %v516 = vadd.f32 0.0, %v515
        %v517 = vpop.f32.mrf.mxu0
        %v518 = vadd.f32 0.0, %v517
        %519 = vmatmul.bf16.gmra.mxu0 %v439
        %v520 = vpop.f32.mrf.mxu0
        %v521 = vadd.f32 0.0, %v520
        %v522 = vpop.f32.mrf.mxu0
        %v523 = vadd.f32 0.0, %v522
        %524 = vmatmul.bf16.gmra.mxu0 %v442
        %v525 = vpop.f32.mrf.mxu0
        %v526 = vadd.f32 0.0, %v525
        %v527 = vpop.f32.mrf.mxu0
        %v528 = vadd.f32 0.0, %v527
        %529 = vmatmul.bf16.gmra.mxu0 %v445
        %v530 = vpop.f32.mrf.mxu0
        %v531 = vadd.f32 0.0, %v530
        %v532 = vpop.f32.mrf.mxu0
        %v533 = vadd.f32 0.0, %v532
        %534 = vmatmul.bf16.gmra.mxu0 %v448
        %v535 = vpop.f32.mrf.mxu0
        %v536 = vadd.f32 0.0, %v535
        %v537 = vpop.f32.mrf.mxu0
        %v538 = vadd.f32 0.0, %v537
        %539 = vmatmul.bf16.gmra.mxu0 %v451
        %v540 = vpop.f32.mrf.mxu0
        %v541 = vadd.f32 0.0, %v540
        %v542 = vpop.f32.mrf.mxu0
        %v543 = vadd.f32 0.0, %v542
        %544 = vmatmul.bf16.gmra.mxu0 %v454
        %v545 = vpop.f32.mrf.mxu0
        %v546 = vadd.f32 0.0, %v545
        %v547 = vpop.f32.mrf.mxu0
        %v548 = vadd.f32 0.0, %v547
        %549 = vmatmul.bf16.gmra.mxu0 %v457
        %v550 = vpop.f32.mrf.mxu0
        %v551 = vadd.f32 0.0, %v550
        %v552 = vpop.f32.mrf.mxu0
        %v553 = vadd.f32 0.0, %v552
        %554 = vdwg.mxu0
        %v559 = vunpack.c.l.b16 %v367
        %v560 = vunpack.c.l.b16 %v368
        %v561 = vunpack.c.l.b16 %v369
        %v562 = vunpack.c.l.b16 %v370
        %v563 = vpack.c.b16 %v560, %v559
        %v564 = vpack.c.b16 %v562, %v561
        %v567 = vsel %vm410, %v379, 0
        %v570 = vsel %vm410, %v380, 0
        %v573 = vsel %vm410, %v381, 0
        %v576 = vsel %vm410, %v382, 0
        %v579 = vand.u32 %v564, %v462
        %581 = vmatpush.bf16.msra.mxu0 0
        %582 = vmatpush.bf16.msra.mxu0 0
        %583 = vmatpush.bf16.msra.mxu0 0
        %584 = vmatpush.bf16.msra.mxu0 0
        %585 = vmatpush.bf16.msra.mxu0 0
        %586 = vmatpush.bf16.msra.mxu0 0
        %587 = vmatpush.bf16.msra.mxu0 %v579
        %588 = vmatpush.bf16.msra.mxu0 %v563
        %589 = vmatmul.bf16.gmra.mxu0 %v567
        %v590 = vpop.f32.mrf.mxu0
        %v591 = vadd.f32 %v476, %v590
        %v592 = vpop.f32.mrf.mxu0
        %v593 = vadd.f32 %v478, %v592
        %594 = vmatmul.bf16.gmra.mxu0 %v570
        %v595 = vpop.f32.mrf.mxu0
        %v596 = vadd.f32 %v481, %v595
        %v597 = vpop.f32.mrf.mxu0
        %v598 = vadd.f32 %v483, %v597
        %599 = vmatmul.bf16.gmra.mxu0 %v573
        %v600 = vpop.f32.mrf.mxu0
        %v601 = vadd.f32 %v486, %v600
        %v602 = vpop.f32.mrf.mxu0
        %v603 = vadd.f32 %v488, %v602
        %604 = vmatmul.bf16.gmra.mxu0 %v576
        %v605 = vpop.f32.mrf.mxu0
        %v606 = vadd.f32 %v491, %v605
        %v607 = vpop.f32.mrf.mxu0
        %v608 = vadd.f32 %v493, %v607
        %609 = vmatmul.bf16.gmra.mxu0 %v412
        %v610 = vpop.f32.mrf.mxu0
        %v611 = vadd.f32 %v496, %v610
        %v612 = vpop.f32.mrf.mxu0
        %v613 = vadd.f32 %v498, %v612
        %614 = vmatmul.bf16.gmra.mxu0 %v415
        %v615 = vpop.f32.mrf.mxu0
        %v616 = vadd.f32 %v501, %v615
        %v617 = vpop.f32.mrf.mxu0
        %v618 = vadd.f32 %v503, %v617
        %619 = vmatmul.bf16.gmra.mxu0 %v418
        %v620 = vpop.f32.mrf.mxu0
        %v621 = vadd.f32 %v506, %v620
        %v622 = vpop.f32.mrf.mxu0
        %v623 = vadd.f32 %v508, %v622
        %624 = vmatmul.bf16.gmra.mxu0 %v421
        %v625 = vpop.f32.mrf.mxu0
        %v626 = vadd.f32 %v511, %v625
        %v627 = vpop.f32.mrf.mxu0
        %v628 = vadd.f32 %v513, %v627
        %629 = vmatmul.bf16.gmra.mxu0 %v424
        %v630 = vpop.f32.mrf.mxu0
        %v631 = vadd.f32 %v516, %v630
        %v632 = vpop.f32.mrf.mxu0
        %v633 = vadd.f32 %v518, %v632
        %634 = vmatmul.bf16.gmra.mxu0 %v427
        %v635 = vpop.f32.mrf.mxu0
        %v636 = vadd.f32 %v521, %v635
        %v637 = vpop.f32.mrf.mxu0
        %v638 = vadd.f32 %v523, %v637
        %639 = vmatmul.bf16.gmra.mxu0 %v430
        %v640 = vpop.f32.mrf.mxu0
        %v641 = vadd.f32 %v526, %v640
        %v642 = vpop.f32.mrf.mxu0
        %v643 = vadd.f32 %v528, %v642
        %644 = vmatmul.bf16.gmra.mxu0 %v433
        %v645 = vpop.f32.mrf.mxu0
        %v646 = vadd.f32 %v531, %v645
        %v647 = vpop.f32.mrf.mxu0
        %v648 = vadd.f32 %v533, %v647
        %649 = vmatmul.bf16.gmra.mxu0 %v436
        %v650 = vpop.f32.mrf.mxu0
        %v651 = vadd.f32 %v536, %v650
        %v652 = vpop.f32.mrf.mxu0
        %v653 = vadd.f32 %v538, %v652
        %654 = vmatmul.bf16.gmra.mxu0 %v439
        %v655 = vpop.f32.mrf.mxu0
        %v656 = vadd.f32 %v541, %v655
        %v657 = vpop.f32.mrf.mxu0
        %v658 = vadd.f32 %v543, %v657
        %659 = vmatmul.bf16.gmra.mxu0 %v442
        %v660 = vpop.f32.mrf.mxu0
        %v661 = vadd.f32 %v546, %v660
        %v662 = vpop.f32.mrf.mxu0
        %v663 = vadd.f32 %v548, %v662
        %664 = vmatmul.bf16.gmra.mxu0 %v445
        %v665 = vpop.f32.mrf.mxu0
        %v666 = vadd.f32 %v551, %v665
        %v667 = vpop.f32.mrf.mxu0
        %v668 = vadd.f32 %v553, %v667
        %669 = vdwg.mxu0
        %v670 = vpack.c.bf16 %v360, %v359
        %v671 = vpack.c.bf16 %v362, %v361
        %v672 = vpack.c.bf16 %v364, %v363
        %v673 = vpack.c.bf16 %v366, %v365
        %v678 = vunpack.c.l.b16 %v375
        %v679 = vunpack.c.l.b16 %v376
        %v680 = vunpack.c.l.b16 %v377
        %v681 = vunpack.c.l.b16 %v378
        %v682 = vpack.c.b16 %v679, %v678
        %v683 = vpack.c.b16 %v681, %v680
        %v686 = vsel %vm410, %v670, 0
        %v689 = vsel %vm410, %v671, 0
        %v692 = vsel %vm410, %v672, 0
        %v695 = vsel %vm410, %v673, 0
        %v698 = vand.u32 %v683, %v462
        %700 = vmatpush.bf16.msra.mxu0 0
        %701 = vmatpush.bf16.msra.mxu0 0
        %702 = vmatpush.bf16.msra.mxu0 0
        %703 = vmatpush.bf16.msra.mxu0 0
        %704 = vmatpush.bf16.msra.mxu0 0
        %705 = vmatpush.bf16.msra.mxu0 0
        %706 = vmatpush.bf16.msra.mxu0 %v698
        %707 = vmatpush.bf16.msra.mxu0 %v682
        %708 = vmatmul.bf16.gmra.mxu0 %v424
        %v709 = vpop.f32.mrf.mxu0
        %v710 = vadd.f32 0.0, %v709
        %v711 = vpop.f32.mrf.mxu0
        %v712 = vadd.f32 0.0, %v711
        %713 = vmatmul.bf16.gmra.mxu0 %v427
        %v714 = vpop.f32.mrf.mxu0
        %v715 = vadd.f32 0.0, %v714
        %v716 = vpop.f32.mrf.mxu0
        %v717 = vadd.f32 0.0, %v716
        %718 = vmatmul.bf16.gmra.mxu0 %v430
        %v719 = vpop.f32.mrf.mxu0
        %v720 = vadd.f32 0.0, %v719
        %v721 = vpop.f32.mrf.mxu0
        %v722 = vadd.f32 0.0, %v721
        %723 = vmatmul.bf16.gmra.mxu0 %v433
        %v724 = vpop.f32.mrf.mxu0
        %v725 = vadd.f32 0.0, %v724
        %v726 = vpop.f32.mrf.mxu0
        %v727 = vadd.f32 0.0, %v726
        %728 = vmatmul.bf16.gmra.mxu0 %v436
        %v729 = vpop.f32.mrf.mxu0
        %v730 = vadd.f32 0.0, %v729
        %v731 = vpop.f32.mrf.mxu0
        %v732 = vadd.f32 0.0, %v731
        %733 = vmatmul.bf16.gmra.mxu0 %v439
        %v734 = vpop.f32.mrf.mxu0
        %v735 = vadd.f32 0.0, %v734
        %v736 = vpop.f32.mrf.mxu0
        %v737 = vadd.f32 0.0, %v736
        %738 = vmatmul.bf16.gmra.mxu0 %v442
        %v739 = vpop.f32.mrf.mxu0
        %v740 = vadd.f32 0.0, %v739
        %v741 = vpop.f32.mrf.mxu0
        %v742 = vadd.f32 0.0, %v741
        %743 = vmatmul.bf16.gmra.mxu0 %v445
        %v744 = vpop.f32.mrf.mxu0
        %v745 = vadd.f32 0.0, %v744
        %v746 = vpop.f32.mrf.mxu0
        %v747 = vadd.f32 0.0, %v746
        %748 = vmatmul.bf16.gmra.mxu0 %v448
        %v749 = vpop.f32.mrf.mxu0
        %v750 = vadd.f32 0.0, %v749
        %v751 = vpop.f32.mrf.mxu0
        %v752 = vadd.f32 0.0, %v751
        %753 = vmatmul.bf16.gmra.mxu0 %v451
        %v754 = vpop.f32.mrf.mxu0
        %v755 = vadd.f32 0.0, %v754
        %v756 = vpop.f32.mrf.mxu0
        %v757 = vadd.f32 0.0, %v756
        %758 = vmatmul.bf16.gmra.mxu0 %v454
        %v759 = vpop.f32.mrf.mxu0
        %v760 = vadd.f32 0.0, %v759
        %v761 = vpop.f32.mrf.mxu0
        %v762 = vadd.f32 0.0, %v761
        %763 = vmatmul.bf16.gmra.mxu0 %v457
        %v764 = vpop.f32.mrf.mxu0
        %v765 = vadd.f32 0.0, %v764
        %v766 = vpop.f32.mrf.mxu0
        %v767 = vadd.f32 0.0, %v766
        %768 = vmatmul.bf16.gmra.mxu0 %v686
        %v769 = vpop.f32.mrf.mxu0
        %v770 = vadd.f32 0.0, %v769
        %v771 = vpop.f32.mrf.mxu0
        %v772 = vadd.f32 0.0, %v771
        %773 = vmatmul.bf16.gmra.mxu0 %v689
        %v774 = vpop.f32.mrf.mxu0
        %v775 = vadd.f32 0.0, %v774
        %v776 = vpop.f32.mrf.mxu0
        %v777 = vadd.f32 0.0, %v776
        %778 = vmatmul.bf16.gmra.mxu0 %v692
        %v779 = vpop.f32.mrf.mxu0
        %v780 = vadd.f32 0.0, %v779
        %v781 = vpop.f32.mrf.mxu0
        %v782 = vadd.f32 0.0, %v781
        %783 = vmatmul.bf16.gmra.mxu0 %v695
        %v784 = vpop.f32.mrf.mxu0
        %v785 = vadd.f32 0.0, %v784
        %v786 = vpop.f32.mrf.mxu0
        %v787 = vadd.f32 0.0, %v786
        %788 = vdwg.mxu0
        %v789 = vadd.f32 %v591, %v710
        %v790 = vadd.f32 %v593, %v712
        %v791 = vadd.f32 %v596, %v715
        %v792 = vadd.f32 %v598, %v717
        %v793 = vadd.f32 %v601, %v720
        %v794 = vadd.f32 %v603, %v722
        %v795 = vadd.f32 %v606, %v725
        %v796 = vadd.f32 %v608, %v727
        %v797 = vadd.f32 %v611, %v730
        %v798 = vadd.f32 %v613, %v732
        %v799 = vadd.f32 %v616, %v735
        %v800 = vadd.f32 %v618, %v737
        %v801 = vadd.f32 %v621, %v740
        %v802 = vadd.f32 %v623, %v742
        %v803 = vadd.f32 %v626, %v745
        %v804 = vadd.f32 %v628, %v747
        %v805 = vadd.f32 %v631, %v750
        %v806 = vadd.f32 %v633, %v752
        %v807 = vadd.f32 %v636, %v755
        %v808 = vadd.f32 %v638, %v757
        %v809 = vadd.f32 %v641, %v760
        %v810 = vadd.f32 %v643, %v762
        %v811 = vadd.f32 %v646, %v765
        %v812 = vadd.f32 %v648, %v767
        %v813 = vadd.f32 %v651, %v770
        %v814 = vadd.f32 %v653, %v772
        %v815 = vadd.f32 %v656, %v775
        %v816 = vadd.f32 %v658, %v777
        %v817 = vadd.f32 %v661, %v780
        %v818 = vadd.f32 %v663, %v782
        %v819 = vadd.f32 %v666, %v785
        %v820 = vadd.f32 %v668, %v787
        %v821 = vld [vmem:[%s2] sm:$0x1]
        %v823 = vperm.slane %v821, 0
        %v825 = vadd.f32 %v789, %v823
        %v826 = vadd.f32 %v790, %v823
        %v827 = vadd.f32 %v791, %v823
        %v828 = vadd.f32 %v792, %v823
        %v829 = vadd.f32 %v793, %v823
        %v830 = vadd.f32 %v794, %v823
        %v831 = vadd.f32 %v795, %v823
        %v832 = vadd.f32 %v796, %v823
        %v833 = vadd.f32 %v797, %v823
        %v834 = vadd.f32 %v798, %v823
        %v835 = vadd.f32 %v799, %v823
        %v836 = vadd.f32 %v800, %v823
        %v837 = vadd.f32 %v801, %v823
        %v838 = vadd.f32 %v802, %v823
        %v839 = vadd.f32 %v803, %v823
        %v840 = vadd.f32 %v804, %v823
        %v841 = vadd.f32 %v805, %v823
        %v842 = vadd.f32 %v806, %v823
        %v843 = vadd.f32 %v807, %v823
        %v844 = vadd.f32 %v808, %v823
        %v845 = vadd.f32 %v809, %v823
        %v846 = vadd.f32 %v810, %v823
        %v847 = vadd.f32 %v811, %v823
        %v848 = vadd.f32 %v812, %v823
        %v849 = vadd.f32 %v813, %v823
        %v850 = vadd.f32 %v814, %v823
        %v851 = vadd.f32 %v815, %v823
        %v852 = vadd.f32 %v816, %v823
        %v853 = vadd.f32 %v817, %v823
        %v854 = vadd.f32 %v818, %v823
        %v855 = vadd.f32 %v819, %v823
        %v856 = vadd.f32 %v820, %v823
        %vm857 = vcmp.ge.f32.partialorder %v825, 0.0
        %vm858 = vcmp.ge.f32.partialorder %v826, 0.0
        %vm859 = vcmp.ge.f32.partialorder %v827, 0.0
        %vm860 = vcmp.ge.f32.partialorder %v828, 0.0
        %vm861 = vcmp.ge.f32.partialorder %v829, 0.0
        %vm862 = vcmp.ge.f32.partialorder %v830, 0.0
        %vm863 = vcmp.ge.f32.partialorder %v831, 0.0
        %vm864 = vcmp.ge.f32.partialorder %v832, 0.0
        %vm865 = vcmp.ge.f32.partialorder %v833, 0.0
        %vm866 = vcmp.ge.f32.partialorder %v834, 0.0
        %vm867 = vcmp.ge.f32.partialorder %v835, 0.0
        %vm868 = vcmp.ge.f32.partialorder %v836, 0.0
        %vm869 = vcmp.ge.f32.partialorder %v837, 0.0
        %vm870 = vcmp.ge.f32.partialorder %v838, 0.0
        %vm871 = vcmp.ge.f32.partialorder %v839, 0.0
        %vm872 = vcmp.ge.f32.partialorder %v840, 0.0
        %vm873 = vcmp.ge.f32.partialorder %v841, 0.0
        %vm874 = vcmp.ge.f32.partialorder %v842, 0.0
        %vm875 = vcmp.ge.f32.partialorder %v843, 0.0
        %vm876 = vcmp.ge.f32.partialorder %v844, 0.0
        %vm877 = vcmp.ge.f32.partialorder %v845, 0.0
        %vm878 = vcmp.ge.f32.partialorder %v846, 0.0
        %vm879 = vcmp.ge.f32.partialorder %v847, 0.0
        %vm880 = vcmp.ge.f32.partialorder %v848, 0.0
        %vm881 = vcmp.ge.f32.partialorder %v849, 0.0
        %vm882 = vcmp.ge.f32.partialorder %v850, 0.0
        %vm883 = vcmp.ge.f32.partialorder %v851, 0.0
        %vm884 = vcmp.ge.f32.partialorder %v852, 0.0
        %vm885 = vcmp.ge.f32.partialorder %v853, 0.0
        %vm886 = vcmp.ge.f32.partialorder %v854, 0.0
        %vm887 = vcmp.ge.f32.partialorder %v855, 0.0
        %vm888 = vcmp.ge.f32.partialorder %v856, 0.0
        %v889 = vmul.f32 %v825, 0.2
        %v890 = vmul.f32 %v826, 0.2
        %v891 = vmul.f32 %v827, 0.2
        %v892 = vmul.f32 %v828, 0.2
        %v893 = vmul.f32 %v829, 0.2
        %v894 = vmul.f32 %v830, 0.2
        %v895 = vmul.f32 %v831, 0.2
        %v896 = vmul.f32 %v832, 0.2
        %v897 = vmul.f32 %v833, 0.2
        %v898 = vmul.f32 %v834, 0.2
        %v899 = vmul.f32 %v835, 0.2
        %v900 = vmul.f32 %v836, 0.2
        %v901 = vmul.f32 %v837, 0.2
        %v902 = vmul.f32 %v838, 0.2
        %v903 = vmul.f32 %v839, 0.2
        %v904 = vmul.f32 %v840, 0.2
        %v905 = vmul.f32 %v841, 0.2
        %v906 = vmul.f32 %v842, 0.2
        %v907 = vmul.f32 %v843, 0.2
        %v908 = vmul.f32 %v844, 0.2
        %v909 = vmul.f32 %v845, 0.2
        %v910 = vmul.f32 %v846, 0.2
        %v911 = vmul.f32 %v847, 0.2
        %v912 = vmul.f32 %v848, 0.2
        %v913 = vmul.f32 %v849, 0.2
        %v914 = vmul.f32 %v850, 0.2
        %v915 = vmul.f32 %v851, 0.2
        %v916 = vmul.f32 %v852, 0.2
        %v917 = vmul.f32 %v853, 0.2
        %v918 = vmul.f32 %v854, 0.2
        %v919 = vmul.f32 %v855, 0.2
        %v920 = vmul.f32 %v856, 0.2
        %v921 = vsel %vm857, %v825, %v889
        %v922 = vsel %vm858, %v826, %v890
        %v923 = vsel %vm859, %v827, %v891
        %v924 = vsel %vm860, %v828, %v892
        %v925 = vsel %vm861, %v829, %v893
        %v926 = vsel %vm862, %v830, %v894
        %v927 = vsel %vm863, %v831, %v895
        %v928 = vsel %vm864, %v832, %v896
        %v929 = vsel %vm865, %v833, %v897
        %v930 = vsel %vm866, %v834, %v898
        %v931 = vsel %vm867, %v835, %v899
        %v932 = vsel %vm868, %v836, %v900
        %v933 = vsel %vm869, %v837, %v901
        %v934 = vsel %vm870, %v838, %v902
        %v935 = vsel %vm871, %v839, %v903
        %v936 = vsel %vm872, %v840, %v904
        %v937 = vsel %vm873, %v841, %v905
        %v938 = vsel %vm874, %v842, %v906
        %v939 = vsel %vm875, %v843, %v907
        %v940 = vsel %vm876, %v844, %v908
        %v941 = vsel %vm877, %v845, %v909
        %v942 = vsel %vm878, %v846, %v910
        %v943 = vsel %vm879, %v847, %v911
        %v944 = vsel %vm880, %v848, %v912
        %v945 = vsel %vm881, %v849, %v913
        %v946 = vsel %vm882, %v850, %v914
        %v947 = vsel %vm883, %v851, %v915
        %v948 = vsel %vm884, %v852, %v916
        %v949 = vsel %vm885, %v853, %v917
        %v950 = vsel %vm886, %v854, %v918
        %v951 = vsel %vm887, %v855, %v919
        %v952 = vsel %vm888, %v856, %v920
        %v953 = vpack.c.bf16 %v922, %v921
        %v954 = vpack.c.bf16 %v924, %v923
        %v955 = vpack.c.bf16 %v926, %v925
        %v956 = vpack.c.bf16 %v928, %v927
        %v957 = vpack.c.bf16 %v930, %v929
        %v958 = vpack.c.bf16 %v932, %v931
        %v959 = vpack.c.bf16 %v934, %v933
        %v960 = vpack.c.bf16 %v936, %v935
        %v961 = vpack.c.bf16 %v938, %v937
        %v962 = vpack.c.bf16 %v940, %v939
        %v963 = vpack.c.bf16 %v942, %v941
        %v964 = vpack.c.bf16 %v944, %v943
        %v965 = vpack.c.bf16 %v946, %v945
        %v966 = vpack.c.bf16 %v948, %v947
        %v967 = vpack.c.bf16 %v950, %v949
        %v968 = vpack.c.bf16 %v952, %v951
        %v969 = vld [vmem:[%s3] sm:$0xf]
        %vm970 = vcmask 64512
        %v972 = vsel %vm970, %v953, 0
        %v975 = vsel %vm970, %v954, 0
        %v978 = vsel %vm970, %v955, 0
        %v981 = vsel %vm970, %v956, 0
        %v984 = vsel %vm970, %v957, 0
        %v987 = vsel %vm970, %v958, 0
        %v990 = vsel %vm970, %v959, 0
        %v993 = vsel %vm970, %v960, 0
        %v996 = vsel %vm970, %v961, 0
        %v999 = vsel %vm970, %v962, 0
        %v1002 = vsel %vm970, %v963, 0
        %v1005 = vsel %vm970, %v964, 0
        %v1008 = vsel %vm970, %v965, 0
        %v1011 = vsel %vm970, %v966, 0
        %v1014 = vsel %vm970, %v967, 0
        %v1017 = vsel %vm970, %v968, 0
        %vm1019 = vcmask 1043456
        %v1021 = vsel %vm1019, %v969, 0
        %1023 = vmatpush.bf16.msra.mxu0 0
        %1024 = vmatpush.bf16.msra.mxu0 0
        %1025 = vmatpush.bf16.msra.mxu0 0
        %1026 = vmatpush.bf16.msra.mxu0 0
        %1027 = vmatpush.bf16.msra.mxu0 0
        %1028 = vmatpush.bf16.msra.mxu0 0
        %1029 = vmatpush.bf16.msra.mxu0 0
        %1030 = vmatpush.bf16.msra.mxu0 %v1021
        %1031 = vmatmul.bf16.gmra.mxu0 %v972
        %v1032 = vpop.f32.mrf.mxu0
        %v1033 = vadd.f32 0.0, %v1032
        %v1034 = vpop.f32.mrf.mxu0
        %v1035 = vadd.f32 0.0, %v1034
        %1036 = vmatmul.bf16.gmra.mxu0 %v975
        %v1037 = vpop.f32.mrf.mxu0
        %v1038 = vadd.f32 0.0, %v1037
        %v1039 = vpop.f32.mrf.mxu0
        %v1040 = vadd.f32 0.0, %v1039
        %1041 = vmatmul.bf16.gmra.mxu0 %v978
        %v1042 = vpop.f32.mrf.mxu0
        %v1043 = vadd.f32 0.0, %v1042
        %v1044 = vpop.f32.mrf.mxu0
        %v1045 = vadd.f32 0.0, %v1044
        %1046 = vmatmul.bf16.gmra.mxu0 %v981
        %v1047 = vpop.f32.mrf.mxu0
        %v1048 = vadd.f32 0.0, %v1047
        %v1049 = vpop.f32.mrf.mxu0
        %v1050 = vadd.f32 0.0, %v1049
        %1051 = vmatmul.bf16.gmra.mxu0 %v984
        %v1052 = vpop.f32.mrf.mxu0
        %v1053 = vadd.f32 0.0, %v1052
        %v1054 = vpop.f32.mrf.mxu0
        %v1055 = vadd.f32 0.0, %v1054
        %1056 = vmatmul.bf16.gmra.mxu0 %v987
        %v1057 = vpop.f32.mrf.mxu0
        %v1058 = vadd.f32 0.0, %v1057
        %v1059 = vpop.f32.mrf.mxu0
        %v1060 = vadd.f32 0.0, %v1059
        %1061 = vmatmul.bf16.gmra.mxu0 %v990
        %v1062 = vpop.f32.mrf.mxu0
        %v1063 = vadd.f32 0.0, %v1062
        %v1064 = vpop.f32.mrf.mxu0
        %v1065 = vadd.f32 0.0, %v1064
        %1066 = vmatmul.bf16.gmra.mxu0 %v993
        %v1067 = vpop.f32.mrf.mxu0
        %v1068 = vadd.f32 0.0, %v1067
        %v1069 = vpop.f32.mrf.mxu0
        %v1070 = vadd.f32 0.0, %v1069
        %1071 = vmatmul.bf16.gmra.mxu0 %v996
        %v1072 = vpop.f32.mrf.mxu0
        %v1073 = vadd.f32 0.0, %v1072
        %v1074 = vpop.f32.mrf.mxu0
        %v1075 = vadd.f32 0.0, %v1074
        %1076 = vmatmul.bf16.gmra.mxu0 %v999
        %v1077 = vpop.f32.mrf.mxu0
        %v1078 = vadd.f32 0.0, %v1077
        %v1079 = vpop.f32.mrf.mxu0
        %v1080 = vadd.f32 0.0, %v1079
        %1081 = vmatmul.bf16.gmra.mxu0 %v1002
        %v1082 = vpop.f32.mrf.mxu0
        %v1083 = vadd.f32 0.0, %v1082
        %v1084 = vpop.f32.mrf.mxu0
        %v1085 = vadd.f32 0.0, %v1084
        %1086 = vmatmul.bf16.gmra.mxu0 %v1005
        %v1087 = vpop.f32.mrf.mxu0
        %v1088 = vadd.f32 0.0, %v1087
        %v1089 = vpop.f32.mrf.mxu0
        %v1090 = vadd.f32 0.0, %v1089
        %1091 = vmatmul.bf16.gmra.mxu0 %v1008
        %v1092 = vpop.f32.mrf.mxu0
        %v1093 = vadd.f32 0.0, %v1092
        %v1094 = vpop.f32.mrf.mxu0
        %v1095 = vadd.f32 0.0, %v1094
        %1096 = vmatmul.bf16.gmra.mxu0 %v1011
        %v1097 = vpop.f32.mrf.mxu0
        %v1098 = vadd.f32 0.0, %v1097
        %v1099 = vpop.f32.mrf.mxu0
        %v1100 = vadd.f32 0.0, %v1099
        %1101 = vmatmul.bf16.gmra.mxu0 %v1014
        %v1102 = vpop.f32.mrf.mxu0
        %v1103 = vadd.f32 0.0, %v1102
        %v1104 = vpop.f32.mrf.mxu0
        %v1105 = vadd.f32 0.0, %v1104
        %1106 = vmatmul.bf16.gmra.mxu0 %v1017
        %v1107 = vpop.f32.mrf.mxu0
        %v1108 = vadd.f32 0.0, %v1107
        %v1109 = vpop.f32.mrf.mxu0
        %v1110 = vadd.f32 0.0, %v1109
        %1111 = vdwg.mxu0
        %v1112 = vld [vmem:[%s4] sm:$0xf]
        %v1114 = vsel %vm1019, %v1112, 0
        %1116 = vmatpush.bf16.msra.mxu0 0
        %1117 = vmatpush.bf16.msra.mxu0 0
        %1118 = vmatpush.bf16.msra.mxu0 0
        %1119 = vmatpush.bf16.msra.mxu0 0
        %1120 = vmatpush.bf16.msra.mxu0 0
        %1121 = vmatpush.bf16.msra.mxu0 0
        %1122 = vmatpush.bf16.msra.mxu0 0
        %1123 = vmatpush.bf16.msra.mxu0 %v1114
        %1124 = vmatmul.bf16.gmra.mxu0 %v972
        %v1125 = vpop.f32.mrf.mxu0
        %v1126 = vadd.f32 0.0, %v1125
        %v1127 = vpop.f32.mrf.mxu0
        %v1128 = vadd.f32 0.0, %v1127
        %1129 = vmatmul.bf16.gmra.mxu0 %v975
        %v1130 = vpop.f32.mrf.mxu0
        %v1131 = vadd.f32 0.0, %v1130
        %v1132 = vpop.f32.mrf.mxu0
        %v1133 = vadd.f32 0.0, %v1132
        %1134 = vmatmul.bf16.gmra.mxu0 %v978
        %v1135 = vpop.f32.mrf.mxu0
        %v1136 = vadd.f32 0.0, %v1135
        %v1137 = vpop.f32.mrf.mxu0
        %v1138 = vadd.f32 0.0, %v1137
        %1139 = vmatmul.bf16.gmra.mxu0 %v981
        %v1140 = vpop.f32.mrf.mxu0
        %v1141 = vadd.f32 0.0, %v1140
        %v1142 = vpop.f32.mrf.mxu0
        %v1143 = vadd.f32 0.0, %v1142
        %1144 = vmatmul.bf16.gmra.mxu0 %v984
        %v1145 = vpop.f32.mrf.mxu0
        %v1146 = vadd.f32 0.0, %v1145
        %v1147 = vpop.f32.mrf.mxu0
        %v1148 = vadd.f32 0.0, %v1147
        %1149 = vmatmul.bf16.gmra.mxu0 %v987
        %v1150 = vpop.f32.mrf.mxu0
        %v1151 = vadd.f32 0.0, %v1150
        %v1152 = vpop.f32.mrf.mxu0
        %v1153 = vadd.f32 0.0, %v1152
        %1154 = vmatmul.bf16.gmra.mxu0 %v990
        %v1155 = vpop.f32.mrf.mxu0
        %v1156 = vadd.f32 0.0, %v1155
        %v1157 = vpop.f32.mrf.mxu0
        %v1158 = vadd.f32 0.0, %v1157
        %1159 = vmatmul.bf16.gmra.mxu0 %v993
        %v1160 = vpop.f32.mrf.mxu0
        %v1161 = vadd.f32 0.0, %v1160
        %v1162 = vpop.f32.mrf.mxu0
        %v1163 = vadd.f32 0.0, %v1162
        %1164 = vmatmul.bf16.gmra.mxu0 %v996
        %v1165 = vpop.f32.mrf.mxu0
        %v1166 = vadd.f32 0.0, %v1165
        %v1167 = vpop.f32.mrf.mxu0
        %v1168 = vadd.f32 0.0, %v1167
        %1169 = vmatmul.bf16.gmra.mxu0 %v999
        %v1170 = vpop.f32.mrf.mxu0
        %v1171 = vadd.f32 0.0, %v1170
        %v1172 = vpop.f32.mrf.mxu0
        %v1173 = vadd.f32 0.0, %v1172
        %1174 = vmatmul.bf16.gmra.mxu0 %v1002
        %v1175 = vpop.f32.mrf.mxu0
        %v1176 = vadd.f32 0.0, %v1175
        %v1177 = vpop.f32.mrf.mxu0
        %v1178 = vadd.f32 0.0, %v1177
        %1179 = vmatmul.bf16.gmra.mxu0 %v1005
        %v1180 = vpop.f32.mrf.mxu0
        %v1181 = vadd.f32 0.0, %v1180
        %v1182 = vpop.f32.mrf.mxu0
        %v1183 = vadd.f32 0.0, %v1182
        %1184 = vmatmul.bf16.gmra.mxu0 %v1008
        %v1185 = vpop.f32.mrf.mxu0
        %v1186 = vadd.f32 0.0, %v1185
        %v1187 = vpop.f32.mrf.mxu0
        %v1188 = vadd.f32 0.0, %v1187
        %1189 = vmatmul.bf16.gmra.mxu0 %v1011
        %v1190 = vpop.f32.mrf.mxu0
        %v1191 = vadd.f32 0.0, %v1190
        %v1192 = vpop.f32.mrf.mxu0
        %v1193 = vadd.f32 0.0, %v1192
        %1194 = vmatmul.bf16.gmra.mxu0 %v1014
        %v1195 = vpop.f32.mrf.mxu0
        %v1196 = vadd.f32 0.0, %v1195
        %v1197 = vpop.f32.mrf.mxu0
        %v1198 = vadd.f32 0.0, %v1197
        %1199 = vmatmul.bf16.gmra.mxu0 %v1017
        %v1200 = vpop.f32.mrf.mxu0
        %v1201 = vadd.f32 0.0, %v1200
        %v1202 = vpop.f32.mrf.mxu0
        %v1203 = vadd.f32 0.0, %v1202
        %1204 = vdwg.mxu0
        %v1205 = vld [vmem:[%s5] sm:$0xf]
        %v1207 = vsel %vm1019, %v1205, 0
        %1209 = vmatpush.bf16.msra.mxu0 0
        %1210 = vmatpush.bf16.msra.mxu0 0
        %1211 = vmatpush.bf16.msra.mxu0 0
        %1212 = vmatpush.bf16.msra.mxu0 0
        %1213 = vmatpush.bf16.msra.mxu0 0
        %1214 = vmatpush.bf16.msra.mxu0 0
        %1215 = vmatpush.bf16.msra.mxu0 0
        %1216 = vmatpush.bf16.msra.mxu0 %v1207
        %1217 = vmatmul.bf16.gmra.mxu0 %v972
        %v1218 = vpop.f32.mrf.mxu0
        %v1219 = vadd.f32 0.0, %v1218
        %v1220 = vpop.f32.mrf.mxu0
        %v1221 = vadd.f32 0.0, %v1220
        %1222 = vmatmul.bf16.gmra.mxu0 %v975
        %v1223 = vpop.f32.mrf.mxu0
        %v1224 = vadd.f32 0.0, %v1223
        %v1225 = vpop.f32.mrf.mxu0
        %v1226 = vadd.f32 0.0, %v1225
        %1227 = vmatmul.bf16.gmra.mxu0 %v978
        %v1228 = vpop.f32.mrf.mxu0
        %v1229 = vadd.f32 0.0, %v1228
        %v1230 = vpop.f32.mrf.mxu0
        %v1231 = vadd.f32 0.0, %v1230
        %1232 = vmatmul.bf16.gmra.mxu0 %v981
        %v1233 = vpop.f32.mrf.mxu0
        %v1234 = vadd.f32 0.0, %v1233
        %v1235 = vpop.f32.mrf.mxu0
        %v1236 = vadd.f32 0.0, %v1235
        %1237 = vmatmul.bf16.gmra.mxu0 %v984
        %v1238 = vpop.f32.mrf.mxu0
        %v1239 = vadd.f32 0.0, %v1238
        %v1240 = vpop.f32.mrf.mxu0
        %v1241 = vadd.f32 0.0, %v1240
        %1242 = vmatmul.bf16.gmra.mxu0 %v987
        %v1243 = vpop.f32.mrf.mxu0
        %v1244 = vadd.f32 0.0, %v1243
        %v1245 = vpop.f32.mrf.mxu0
        %v1246 = vadd.f32 0.0, %v1245
        %1247 = vmatmul.bf16.gmra.mxu0 %v990
        %v1248 = vpop.f32.mrf.mxu0
        %v1249 = vadd.f32 0.0, %v1248
        %v1250 = vpop.f32.mrf.mxu0
        %v1251 = vadd.f32 0.0, %v1250
        %1252 = vmatmul.bf16.gmra.mxu0 %v993
        %v1253 = vpop.f32.mrf.mxu0
        %v1254 = vadd.f32 0.0, %v1253
        %v1255 = vpop.f32.mrf.mxu0
        %v1256 = vadd.f32 0.0, %v1255
        %1257 = vmatmul.bf16.gmra.mxu0 %v996
        %v1258 = vpop.f32.mrf.mxu0
        %v1259 = vadd.f32 0.0, %v1258
        %v1260 = vpop.f32.mrf.mxu0
        %v1261 = vadd.f32 0.0, %v1260
        %1262 = vmatmul.bf16.gmra.mxu0 %v999
        %v1263 = vpop.f32.mrf.mxu0
        %v1264 = vadd.f32 0.0, %v1263
        %v1265 = vpop.f32.mrf.mxu0
        %v1266 = vadd.f32 0.0, %v1265
        %1267 = vmatmul.bf16.gmra.mxu0 %v1002
        %v1268 = vpop.f32.mrf.mxu0
        %v1269 = vadd.f32 0.0, %v1268
        %v1270 = vpop.f32.mrf.mxu0
        %v1271 = vadd.f32 0.0, %v1270
        %1272 = vmatmul.bf16.gmra.mxu0 %v1005
        %v1273 = vpop.f32.mrf.mxu0
        %v1274 = vadd.f32 0.0, %v1273
        %v1275 = vpop.f32.mrf.mxu0
        %v1276 = vadd.f32 0.0, %v1275
        %1277 = vmatmul.bf16.gmra.mxu0 %v1008
        %v1278 = vpop.f32.mrf.mxu0
        %v1279 = vadd.f32 0.0, %v1278
        %v1280 = vpop.f32.mrf.mxu0
        %v1281 = vadd.f32 0.0, %v1280
        %1282 = vmatmul.bf16.gmra.mxu0 %v1011
        %v1283 = vpop.f32.mrf.mxu0
        %v1284 = vadd.f32 0.0, %v1283
        %v1285 = vpop.f32.mrf.mxu0
        %v1286 = vadd.f32 0.0, %v1285
        %1287 = vmatmul.bf16.gmra.mxu0 %v1014
        %v1288 = vpop.f32.mrf.mxu0
        %v1289 = vadd.f32 0.0, %v1288
        %v1290 = vpop.f32.mrf.mxu0
        %v1291 = vadd.f32 0.0, %v1290
        %1292 = vmatmul.bf16.gmra.mxu0 %v1017
        %v1293 = vpop.f32.mrf.mxu0
        %v1294 = vadd.f32 0.0, %v1293
        %v1295 = vpop.f32.mrf.mxu0
        %v1296 = vadd.f32 0.0, %v1295
        %1297 = vdwg.mxu0
        %vm1298 = vcmask 7168
        %v1300 = vsel %vm1298, %v1033, 0
        %v1303 = vsel %vm1298, %v1035, 0
        %v1306 = vsel %vm1298, %v1038, 0
        %v1309 = vsel %vm1298, %v1040, 0
        %v1312 = vsel %vm1298, %v1043, 0
        %v1315 = vsel %vm1298, %v1045, 0
        %v1318 = vsel %vm1298, %v1048, 0
        %v1321 = vsel %vm1298, %v1050, 0
        %v1324 = vsel %vm1298, %v1053, 0
        %v1327 = vsel %vm1298, %v1055, 0
        %v1330 = vsel %vm1298, %v1058, 0
        %v1333 = vsel %vm1298, %v1060, 0
        %v1336 = vsel %vm1298, %v1063, 0
        %v1339 = vsel %vm1298, %v1065, 0
        %v1342 = vsel %vm1298, %v1068, 0
        %v1345 = vsel %vm1298, %v1070, 0
        %v1348 = vsel %vm1298, %v1073, 0
        %v1351 = vsel %vm1298, %v1075, 0
        %v1354 = vsel %vm1298, %v1078, 0
        %v1357 = vsel %vm1298, %v1080, 0
        %v1360 = vsel %vm1298, %v1083, 0
        %v1363 = vsel %vm1298, %v1085, 0
        %v1366 = vsel %vm1298, %v1088, 0
        %v1369 = vsel %vm1298, %v1090, 0
        %v1372 = vsel %vm1298, %v1093, 0
        %v1375 = vsel %vm1298, %v1095, 0
        %v1378 = vsel %vm1298, %v1098, 0
        %v1381 = vsel %vm1298, %v1100, 0
        %v1384 = vsel %vm1298, %v1103, 0
        %v1387 = vsel %vm1298, %v1105, 0
        %v1390 = vsel %vm1298, %v1108, 0
        %v1393 = vsel %vm1298, %v1110, 0
        %v1396 = vsel %vm1298, %v1126, 0
        %v1399 = vsel %vm1298, %v1128, 0
        %v1402 = vsel %vm1298, %v1131, 0
        %v1405 = vsel %vm1298, %v1133, 0
        %v1408 = vsel %vm1298, %v1136, 0
        %v1411 = vsel %vm1298, %v1138, 0
        %v1414 = vsel %vm1298, %v1141, 0
        %v1417 = vsel %vm1298, %v1143, 0
        %v1420 = vsel %vm1298, %v1146, 0
        %v1423 = vsel %vm1298, %v1148, 0
        %v1426 = vsel %vm1298, %v1151, 0
        %v1429 = vsel %vm1298, %v1153, 0
        %v1432 = vsel %vm1298, %v1156, 0
        %v1435 = vsel %vm1298, %v1158, 0
        %v1438 = vsel %vm1298, %v1161, 0
        %v1441 = vsel %vm1298, %v1163, 0
        %v1444 = vsel %vm1298, %v1166, 0
        %v1447 = vsel %vm1298, %v1168, 0
        %v1450 = vsel %vm1298, %v1171, 0
        %v1453 = vsel %vm1298, %v1173, 0
        %v1456 = vsel %vm1298, %v1176, 0
        %v1459 = vsel %vm1298, %v1178, 0
        %v1462 = vsel %vm1298, %v1181, 0
        %v1465 = vsel %vm1298, %v1183, 0
        %v1468 = vsel %vm1298, %v1186, 0
        %v1471 = vsel %vm1298, %v1188, 0
        %v1474 = vsel %vm1298, %v1191, 0
        %v1477 = vsel %vm1298, %v1193, 0
        %v1480 = vsel %vm1298, %v1196, 0
        %v1483 = vsel %vm1298, %v1198, 0
        %v1486 = vsel %vm1298, %v1201, 0
        %v1489 = vsel %vm1298, %v1203, 0
        %1491 = vmatpush.xpose.msra.mxu0 %v1441
        %1492 = vmatpush.xpose.msra.mxu0 %v1438
        %1493 = vmatpush.xpose.msra.mxu0 %v1435
        %1494 = vmatpush.xpose.msra.mxu0 %v1432
        %1495 = vmatpush.xpose.msra.mxu0 %v1429
        %1496 = vmatpush.xpose.msra.mxu0 %v1426
        %1497 = vmatpush.xpose.msra.mxu0 %v1423
        %1498 = vmatpush.xpose.msra.mxu0 %v1420
        %1499 = vmatpush.xpose.msra.mxu0 %v1417
        %1500 = vmatpush.xpose.msra.mxu0 %v1414
        %1501 = vmatpush.xpose.msra.mxu0 %v1411
        %1502 = vmatpush.xpose.msra.mxu0 %v1408
        %1503 = vmatpush.xpose.msra.mxu0 %v1405
        %1504 = vmatpush.xpose.msra.mxu0 %v1402
        %1505 = vmatpush.xpose.msra.mxu0 %v1399
        %1506 = vmatpush.xpose.msra.mxu0 %v1396
        %1507 = vmatmul.f32.gmra.mxu0 %v1300
        %v1508 = vpop.f32.mrf.mxu0
        %v1509 = vadd.f32 0.0, %v1508
        %1510 = vmatmul.f32.gmra.mxu0 %v1303
        %v1511 = vpop.f32.mrf.mxu0
        %v1512 = vadd.f32 0.0, %v1511
        %1513 = vmatmul.f32.gmra.mxu0 %v1306
        %v1514 = vpop.f32.mrf.mxu0
        %v1515 = vadd.f32 0.0, %v1514
        %1516 = vmatmul.f32.gmra.mxu0 %v1309
        %v1517 = vpop.f32.mrf.mxu0
        %v1518 = vadd.f32 0.0, %v1517
        %1519 = vmatmul.f32.gmra.mxu0 %v1312
        %v1520 = vpop.f32.mrf.mxu0
        %v1521 = vadd.f32 0.0, %v1520
        %1522 = vmatmul.f32.gmra.mxu0 %v1315
        %v1523 = vpop.f32.mrf.mxu0
        %v1524 = vadd.f32 0.0, %v1523
        %1525 = vmatmul.f32.gmra.mxu0 %v1318
        %v1526 = vpop.f32.mrf.mxu0
        %v1527 = vadd.f32 0.0, %v1526
        %1528 = vmatmul.f32.gmra.mxu0 %v1321
        %v1529 = vpop.f32.mrf.mxu0
        %v1530 = vadd.f32 0.0, %v1529
        %1531 = vmatmul.f32.gmra.mxu0 %v1324
        %v1532 = vpop.f32.mrf.mxu0
        %v1533 = vadd.f32 0.0, %v1532
        %1534 = vmatmul.f32.gmra.mxu0 %v1327
        %v1535 = vpop.f32.mrf.mxu0
        %v1536 = vadd.f32 0.0, %v1535
        %1537 = vmatmul.f32.gmra.mxu0 %v1330
        %v1538 = vpop.f32.mrf.mxu0
        %v1539 = vadd.f32 0.0, %v1538
        %1540 = vmatmul.f32.gmra.mxu0 %v1333
        %v1541 = vpop.f32.mrf.mxu0
        %v1542 = vadd.f32 0.0, %v1541
        %1543 = vmatmul.f32.gmra.mxu0 %v1336
        %v1544 = vpop.f32.mrf.mxu0
        %v1545 = vadd.f32 0.0, %v1544
        %1546 = vmatmul.f32.gmra.mxu0 %v1339
        %v1547 = vpop.f32.mrf.mxu0
        %v1548 = vadd.f32 0.0, %v1547
        %1549 = vmatmul.f32.gmra.mxu0 %v1342
        %v1550 = vpop.f32.mrf.mxu0
        %v1551 = vadd.f32 0.0, %v1550
        %1552 = vmatmul.f32.gmra.mxu0 %v1345
        %v1553 = vpop.f32.mrf.mxu0
        %v1554 = vadd.f32 0.0, %v1553
        %1555 = vmatmul.f32.gmra.mxu0 %v1348
        %v1556 = vpop.f32.mrf.mxu0
        %v1557 = vadd.f32 0.0, %v1556
        %1558 = vmatmul.f32.gmra.mxu0 %v1351
        %v1559 = vpop.f32.mrf.mxu0
        %v1560 = vadd.f32 0.0, %v1559
        %1561 = vmatmul.f32.gmra.mxu0 %v1354
        %v1562 = vpop.f32.mrf.mxu0
        %v1563 = vadd.f32 0.0, %v1562
        %1564 = vmatmul.f32.gmra.mxu0 %v1357
        %v1565 = vpop.f32.mrf.mxu0
        %v1566 = vadd.f32 0.0, %v1565
        %1567 = vmatmul.f32.gmra.mxu0 %v1360
        %v1568 = vpop.f32.mrf.mxu0
        %v1569 = vadd.f32 0.0, %v1568
        %1570 = vmatmul.f32.gmra.mxu0 %v1363
        %v1571 = vpop.f32.mrf.mxu0
        %v1572 = vadd.f32 0.0, %v1571
        %1573 = vmatmul.f32.gmra.mxu0 %v1366
        %v1574 = vpop.f32.mrf.mxu0
        %v1575 = vadd.f32 0.0, %v1574
        %1576 = vmatmul.f32.gmra.mxu0 %v1369
        %v1577 = vpop.f32.mrf.mxu0
        %v1578 = vadd.f32 0.0, %v1577
        %1579 = vmatmul.f32.gmra.mxu0 %v1372
        %v1580 = vpop.f32.mrf.mxu0
        %v1581 = vadd.f32 0.0, %v1580
        %1582 = vmatmul.f32.gmra.mxu0 %v1375
        %v1583 = vpop.f32.mrf.mxu0
        %v1584 = vadd.f32 0.0, %v1583
        %1585 = vmatmul.f32.gmra.mxu0 %v1378
        %v1586 = vpop.f32.mrf.mxu0
        %v1587 = vadd.f32 0.0, %v1586
        %1588 = vmatmul.f32.gmra.mxu0 %v1381
        %v1589 = vpop.f32.mrf.mxu0
        %v1590 = vadd.f32 0.0, %v1589
        %1591 = vmatmul.f32.gmra.mxu0 %v1384
        %v1592 = vpop.f32.mrf.mxu0
        %v1593 = vadd.f32 0.0, %v1592
        %1594 = vmatmul.f32.gmra.mxu0 %v1387
        %v1595 = vpop.f32.mrf.mxu0
        %v1596 = vadd.f32 0.0, %v1595
        %1597 = vmatmul.f32.gmra.mxu0 %v1390
        %v1598 = vpop.f32.mrf.mxu0
        %v1599 = vadd.f32 0.0, %v1598
        %1600 = vmatmul.f32.gmra.mxu0 %v1393
        %v1601 = vpop.f32.mrf.mxu0
        %v1602 = vadd.f32 0.0, %v1601
        %1603 = vdwg.mxu0
        %1604 = vmatpush.xpose.msra.mxu0 %v1489
        %1605 = vmatpush.xpose.msra.mxu0 %v1486
        %1606 = vmatpush.xpose.msra.mxu0 %v1483
        %1607 = vmatpush.xpose.msra.mxu0 %v1480
        %1608 = vmatpush.xpose.msra.mxu0 %v1477
        %1609 = vmatpush.xpose.msra.mxu0 %v1474
        %1610 = vmatpush.xpose.msra.mxu0 %v1471
        %1611 = vmatpush.xpose.msra.mxu0 %v1468
        %1612 = vmatpush.xpose.msra.mxu0 %v1465
        %1613 = vmatpush.xpose.msra.mxu0 %v1462
        %1614 = vmatpush.xpose.msra.mxu0 %v1459
        %1615 = vmatpush.xpose.msra.mxu0 %v1456
        %1616 = vmatpush.xpose.msra.mxu0 %v1453
        %1617 = vmatpush.xpose.msra.mxu0 %v1450
        %1618 = vmatpush.xpose.msra.mxu0 %v1447
        %1619 = vmatpush.xpose.msra.mxu0 %v1444
        %1620 = vmatmul.f32.gmra.mxu0 %v1300
        %v1621 = vpop.f32.mrf.mxu0
        %v1622 = vadd.f32 0.0, %v1621
        %1623 = vmatmul.f32.gmra.mxu0 %v1303
        %v1624 = vpop.f32.mrf.mxu0
        %v1625 = vadd.f32 0.0, %v1624
        %1626 = vmatmul.f32.gmra.mxu0 %v1306
        %v1627 = vpop.f32.mrf.mxu0
        %v1628 = vadd.f32 0.0, %v1627
        %1629 = vmatmul.f32.gmra.mxu0 %v1309
        %v1630 = vpop.f32.mrf.mxu0
        %v1631 = vadd.f32 0.0, %v1630
        %1632 = vmatmul.f32.gmra.mxu0 %v1312
        %v1633 = vpop.f32.mrf.mxu0
        %v1634 = vadd.f32 0.0, %v1633
        %1635 = vmatmul.f32.gmra.mxu0 %v1315
        %v1636 = vpop.f32.mrf.mxu0
        %v1637 = vadd.f32 0.0, %v1636
        %1638 = vmatmul.f32.gmra.mxu0 %v1318
        %v1639 = vpop.f32.mrf.mxu0
        %v1640 = vadd.f32 0.0, %v1639
        %1641 = vmatmul.f32.gmra.mxu0 %v1321
        %v1642 = vpop.f32.mrf.mxu0
        %v1643 = vadd.f32 0.0, %v1642
        %1644 = vmatmul.f32.gmra.mxu0 %v1324
        %v1645 = vpop.f32.mrf.mxu0
        %v1646 = vadd.f32 0.0, %v1645
        %1647 = vmatmul.f32.gmra.mxu0 %v1327
        %v1648 = vpop.f32.mrf.mxu0
        %v1649 = vadd.f32 0.0, %v1648
        %1650 = vmatmul.f32.gmra.mxu0 %v1330
        %v1651 = vpop.f32.mrf.mxu0
        %v1652 = vadd.f32 0.0, %v1651
        %1653 = vmatmul.f32.gmra.mxu0 %v1333
        %v1654 = vpop.f32.mrf.mxu0
        %v1655 = vadd.f32 0.0, %v1654
        %1656 = vmatmul.f32.gmra.mxu0 %v1336
        %v1657 = vpop.f32.mrf.mxu0
        %v1658 = vadd.f32 0.0, %v1657
        %1659 = vmatmul.f32.gmra.mxu0 %v1339
        %v1660 = vpop.f32.mrf.mxu0
        %v1661 = vadd.f32 0.0, %v1660
        %1662 = vmatmul.f32.gmra.mxu0 %v1342
        %v1663 = vpop.f32.mrf.mxu0
        %v1664 = vadd.f32 0.0, %v1663
        %1665 = vmatmul.f32.gmra.mxu0 %v1345
        %v1666 = vpop.f32.mrf.mxu0
        %v1667 = vadd.f32 0.0, %v1666
        %1668 = vmatmul.f32.gmra.mxu0 %v1348
        %v1669 = vpop.f32.mrf.mxu0
        %v1670 = vadd.f32 0.0, %v1669
        %1671 = vmatmul.f32.gmra.mxu0 %v1351
        %v1672 = vpop.f32.mrf.mxu0
        %v1673 = vadd.f32 0.0, %v1672
        %1674 = vmatmul.f32.gmra.mxu0 %v1354
        %v1675 = vpop.f32.mrf.mxu0
        %v1676 = vadd.f32 0.0, %v1675
        %1677 = vmatmul.f32.gmra.mxu0 %v1357
        %v1678 = vpop.f32.mrf.mxu0
        %v1679 = vadd.f32 0.0, %v1678
        %1680 = vmatmul.f32.gmra.mxu0 %v1360
        %v1681 = vpop.f32.mrf.mxu0
        %v1682 = vadd.f32 0.0, %v1681
        %1683 = vmatmul.f32.gmra.mxu0 %v1363
        %v1684 = vpop.f32.mrf.mxu0
        %v1685 = vadd.f32 0.0, %v1684
        %1686 = vmatmul.f32.gmra.mxu0 %v1366
        %v1687 = vpop.f32.mrf.mxu0
        %v1688 = vadd.f32 0.0, %v1687
        %1689 = vmatmul.f32.gmra.mxu0 %v1369
        %v1690 = vpop.f32.mrf.mxu0
        %v1691 = vadd.f32 0.0, %v1690
        %1692 = vmatmul.f32.gmra.mxu0 %v1372
        %v1693 = vpop.f32.mrf.mxu0
        %v1694 = vadd.f32 0.0, %v1693
        %1695 = vmatmul.f32.gmra.mxu0 %v1375
        %v1696 = vpop.f32.mrf.mxu0
        %v1697 = vadd.f32 0.0, %v1696
        %1698 = vmatmul.f32.gmra.mxu0 %v1378
        %v1699 = vpop.f32.mrf.mxu0
        %v1700 = vadd.f32 0.0, %v1699
        %1701 = vmatmul.f32.gmra.mxu0 %v1381
        %v1702 = vpop.f32.mrf.mxu0
        %v1703 = vadd.f32 0.0, %v1702
        %1704 = vmatmul.f32.gmra.mxu0 %v1384
        %v1705 = vpop.f32.mrf.mxu0
        %v1706 = vadd.f32 0.0, %v1705
        %1707 = vmatmul.f32.gmra.mxu0 %v1387
        %v1708 = vpop.f32.mrf.mxu0
        %v1709 = vadd.f32 0.0, %v1708
        %1710 = vmatmul.f32.gmra.mxu0 %v1390
        %v1711 = vpop.f32.mrf.mxu0
        %v1712 = vadd.f32 0.0, %v1711
        %1713 = vmatmul.f32.gmra.mxu0 %v1393
        %v1714 = vpop.f32.mrf.mxu0
        %v1715 = vadd.f32 0.0, %v1714
        %1716 = vdwg.mxu0
        %v1717 = vmax.f32 %v1509, %v1622
        %1718 = vmax.xlane.f32.xlu0 %v1717
        %v1719 = vpop.xlane.xlu0 %1718
        %v1720 = vmax.f32 %v1512, %v1625
        %1721 = vmax.xlane.f32.xlu0 %v1720
        %v1722 = vpop.xlane.xlu0 %1721
        %v1723 = vmax.f32 %v1515, %v1628
        %1724 = vmax.xlane.f32.xlu0 %v1723
        %v1725 = vpop.xlane.xlu0 %1724
        %v1726 = vmax.f32 %v1518, %v1631
        %1727 = vmax.xlane.f32.xlu0 %v1726
        %v1728 = vpop.xlane.xlu0 %1727
        %v1729 = vmax.f32 %v1521, %v1634
        %1730 = vmax.xlane.f32.xlu0 %v1729
        %v1731 = vpop.xlane.xlu0 %1730
        %v1732 = vmax.f32 %v1524, %v1637
        %1733 = vmax.xlane.f32.xlu0 %v1732
        %v1734 = vpop.xlane.xlu0 %1733
        %v1735 = vmax.f32 %v1527, %v1640
        %1736 = vmax.xlane.f32.xlu0 %v1735
        %v1737 = vpop.xlane.xlu0 %1736
        %v1738 = vmax.f32 %v1530, %v1643
        %1739 = vmax.xlane.f32.xlu0 %v1738
        %v1740 = vpop.xlane.xlu0 %1739
        %v1741 = vmax.f32 %v1533, %v1646
        %1742 = vmax.xlane.f32.xlu0 %v1741
        %v1743 = vpop.xlane.xlu0 %1742
        %v1744 = vmax.f32 %v1536, %v1649
        %1745 = vmax.xlane.f32.xlu0 %v1744
        %v1746 = vpop.xlane.xlu0 %1745
        %v1747 = vmax.f32 %v1539, %v1652
        %1748 = vmax.xlane.f32.xlu0 %v1747
        %v1749 = vpop.xlane.xlu0 %1748
        %v1750 = vmax.f32 %v1542, %v1655
        %1751 = vmax.xlane.f32.xlu0 %v1750
        %v1752 = vpop.xlane.xlu0 %1751
        %v1753 = vmax.f32 %v1545, %v1658
        %1754 = vmax.xlane.f32.xlu0 %v1753
        %v1755 = vpop.xlane.xlu0 %1754
        %v1756 = vmax.f32 %v1548, %v1661
        %1757 = vmax.xlane.f32.xlu0 %v1756
        %v1758 = vpop.xlane.xlu0 %1757
        %v1759 = vmax.f32 %v1551, %v1664
        %1760 = vmax.xlane.f32.xlu0 %v1759
        %v1761 = vpop.xlane.xlu0 %1760
        %v1762 = vmax.f32 %v1554, %v1667
        %1763 = vmax.xlane.f32.xlu0 %v1762
        %v1764 = vpop.xlane.xlu0 %1763
        %v1765 = vmax.f32 %v1557, %v1670
        %1766 = vmax.xlane.f32.xlu0 %v1765
        %v1767 = vpop.xlane.xlu0 %1766
        %v1768 = vmax.f32 %v1560, %v1673
        %1769 = vmax.xlane.f32.xlu0 %v1768
        %v1770 = vpop.xlane.xlu0 %1769
        %v1771 = vmax.f32 %v1563, %v1676
        %1772 = vmax.xlane.f32.xlu0 %v1771
        %v1773 = vpop.xlane.xlu0 %1772
        %v1774 = vmax.f32 %v1566, %v1679
        %1775 = vmax.xlane.f32.xlu0 %v1774
        %v1776 = vpop.xlane.xlu0 %1775
        %v1777 = vmax.f32 %v1569, %v1682
        %1778 = vmax.xlane.f32.xlu0 %v1777
        %v1779 = vpop.xlane.xlu0 %1778
        %v1780 = vmax.f32 %v1572, %v1685
        %1781 = vmax.xlane.f32.xlu0 %v1780
        %v1782 = vpop.xlane.xlu0 %1781
        %v1783 = vmax.f32 %v1575, %v1688
        %1784 = vmax.xlane.f32.xlu0 %v1783
        %v1785 = vpop.xlane.xlu0 %1784
        %v1786 = vmax.f32 %v1578, %v1691
        %1787 = vmax.xlane.f32.xlu0 %v1786
        %v1788 = vpop.xlane.xlu0 %1787
        %v1789 = vmax.f32 %v1581, %v1694
        %1790 = vmax.xlane.f32.xlu0 %v1789
        %v1791 = vpop.xlane.xlu0 %1790
        %v1792 = vmax.f32 %v1584, %v1697
        %1793 = vmax.xlane.f32.xlu0 %v1792
        %v1794 = vpop.xlane.xlu0 %1793
        %v1795 = vmax.f32 %v1587, %v1700
        %1796 = vmax.xlane.f32.xlu0 %v1795
        %v1797 = vpop.xlane.xlu0 %1796
        %v1798 = vmax.f32 %v1590, %v1703
        %1799 = vmax.xlane.f32.xlu0 %v1798
        %v1800 = vpop.xlane.xlu0 %1799
        %v1801 = vmax.f32 %v1593, %v1706
        %1802 = vmax.xlane.f32.xlu0 %v1801
        %v1803 = vpop.xlane.xlu0 %1802
        %v1804 = vmax.f32 %v1596, %v1709
        %1805 = vmax.xlane.f32.xlu0 %v1804
        %v1806 = vpop.xlane.xlu0 %1805
        %v1807 = vmax.f32 %v1599, %v1712
        %1808 = vmax.xlane.f32.xlu0 %v1807
        %v1809 = vpop.xlane.xlu0 %1808
        %v1810 = vmax.f32 %v1602, %v1715
        %1811 = vmax.xlane.f32.xlu0 %v1810
        %v1812 = vpop.xlane.xlu0 %1811
        %v1813 = vsub.f32 %v1509, %v1719
        %v1814 = vsub.f32 %v1622, %v1719
        %v1815 = vsub.f32 %v1512, %v1722
        %v1816 = vsub.f32 %v1625, %v1722
        %v1817 = vsub.f32 %v1515, %v1725
        %v1818 = vsub.f32 %v1628, %v1725
        %v1819 = vsub.f32 %v1518, %v1728
        %v1820 = vsub.f32 %v1631, %v1728
        %v1821 = vsub.f32 %v1521, %v1731
        %v1822 = vsub.f32 %v1634, %v1731
        %v1823 = vsub.f32 %v1524, %v1734
        %v1824 = vsub.f32 %v1637, %v1734
        %v1825 = vsub.f32 %v1527, %v1737
        %v1826 = vsub.f32 %v1640, %v1737
        %v1827 = vsub.f32 %v1530, %v1740
        %v1828 = vsub.f32 %v1643, %v1740
        %v1829 = vsub.f32 %v1533, %v1743
        %v1830 = vsub.f32 %v1646, %v1743
        %v1831 = vsub.f32 %v1536, %v1746
        %v1832 = vsub.f32 %v1649, %v1746
        %v1833 = vsub.f32 %v1539, %v1749
        %v1834 = vsub.f32 %v1652, %v1749
        %v1835 = vsub.f32 %v1542, %v1752
        %v1836 = vsub.f32 %v1655, %v1752
        %v1837 = vsub.f32 %v1545, %v1755
        %v1838 = vsub.f32 %v1658, %v1755
        %v1839 = vsub.f32 %v1548, %v1758
        %v1840 = vsub.f32 %v1661, %v1758
        %v1841 = vsub.f32 %v1551, %v1761
        %v1842 = vsub.f32 %v1664, %v1761
        %v1843 = vsub.f32 %v1554, %v1764
        %v1844 = vsub.f32 %v1667, %v1764
        %v1845 = vsub.f32 %v1557, %v1767
        %v1846 = vsub.f32 %v1670, %v1767
        %v1847 = vsub.f32 %v1560, %v1770
        %v1848 = vsub.f32 %v1673, %v1770
        %v1849 = vsub.f32 %v1563, %v1773
        %v1850 = vsub.f32 %v1676, %v1773
        %v1851 = vsub.f32 %v1566, %v1776
        %v1852 = vsub.f32 %v1679, %v1776
        %v1853 = vsub.f32 %v1569, %v1779
        %v1854 = vsub.f32 %v1682, %v1779
        %v1855 = vsub.f32 %v1572, %v1782
        %v1856 = vsub.f32 %v1685, %v1782
        %v1857 = vsub.f32 %v1575, %v1785
        %v1858 = vsub.f32 %v1688, %v1785
        %v1859 = vsub.f32 %v1578, %v1788
        %v1860 = vsub.f32 %v1691, %v1788
        %v1861 = vsub.f32 %v1581, %v1791
        %v1862 = vsub.f32 %v1694, %v1791
        %v1863 = vsub.f32 %v1584, %v1794
        %v1864 = vsub.f32 %v1697, %v1794
        %v1865 = vsub.f32 %v1587, %v1797
        %v1866 = vsub.f32 %v1700, %v1797
        %v1867 = vsub.f32 %v1590, %v1800
        %v1868 = vsub.f32 %v1703, %v1800
        %v1869 = vsub.f32 %v1593, %v1803
        %v1870 = vsub.f32 %v1706, %v1803
        %v1871 = vsub.f32 %v1596, %v1806
        %v1872 = vsub.f32 %v1709, %v1806
        %v1873 = vsub.f32 %v1599, %v1809
        %v1874 = vsub.f32 %v1712, %v1809
        %v1875 = vsub.f32 %v1602, %v1812
        %v1876 = vsub.f32 %v1715, %v1812
        %v1877 = vmul.f32 %v1813, 1.442695
        %v1878 = vpow.pop %v1877
        %v1879 = vmul.f32 %v1814, 1.442695
        %v1880 = vpow.pop %v1879
        %v1881 = vmul.f32 %v1815, 1.442695
        %v1882 = vpow.pop %v1881
        %v1883 = vmul.f32 %v1816, 1.442695
        %v1884 = vpow.pop %v1883
        %v1885 = vmul.f32 %v1817, 1.442695
        %v1886 = vpow.pop %v1885
        %v1887 = vmul.f32 %v1818, 1.442695
        %v1888 = vpow.pop %v1887
        %v1889 = vmul.f32 %v1819, 1.442695
        %v1890 = vpow.pop %v1889
        %v1891 = vmul.f32 %v1820, 1.442695
        %v1892 = vpow.pop %v1891
        %v1893 = vmul.f32 %v1821, 1.442695
        %v1894 = vpow.pop %v1893
        %v1895 = vmul.f32 %v1822, 1.442695
        %v1896 = vpow.pop %v1895
        %v1897 = vmul.f32 %v1823, 1.442695
        %v1898 = vpow.pop %v1897
        %v1899 = vmul.f32 %v1824, 1.442695
        %v1900 = vpow.pop %v1899
        %v1901 = vmul.f32 %v1825, 1.442695
        %v1902 = vpow.pop %v1901
        %v1903 = vmul.f32 %v1826, 1.442695
        %v1904 = vpow.pop %v1903
        %v1905 = vmul.f32 %v1827, 1.442695
        %v1906 = vpow.pop %v1905
        %v1907 = vmul.f32 %v1828, 1.442695
        %v1908 = vpow.pop %v1907
        %v1909 = vmul.f32 %v1829, 1.442695
        %v1910 = vpow.pop %v1909
        %v1911 = vmul.f32 %v1830, 1.442695
        %v1912 = vpow.pop %v1911
        %v1913 = vmul.f32 %v1831, 1.442695
        %v1914 = vpow.pop %v1913
        %v1915 = vmul.f32 %v1832, 1.442695
        %v1916 = vpow.pop %v1915
        %v1917 = vmul.f32 %v1833, 1.442695
        %v1918 = vpow.pop %v1917
        %v1919 = vmul.f32 %v1834, 1.442695
        %v1920 = vpow.pop %v1919
        %v1921 = vmul.f32 %v1835, 1.442695
        %v1922 = vpow.pop %v1921
        %v1923 = vmul.f32 %v1836, 1.442695
        %v1924 = vpow.pop %v1923
        %v1925 = vmul.f32 %v1837, 1.442695
        %v1926 = vpow.pop %v1925
        %v1927 = vmul.f32 %v1838, 1.442695
        %v1928 = vpow.pop %v1927
        %v1929 = vmul.f32 %v1839, 1.442695
        %v1930 = vpow.pop %v1929
        %v1931 = vmul.f32 %v1840, 1.442695
        %v1932 = vpow.pop %v1931
        %v1933 = vmul.f32 %v1841, 1.442695
        %v1934 = vpow.pop %v1933
        %v1935 = vmul.f32 %v1842, 1.442695
        %v1936 = vpow.pop %v1935
        %v1937 = vmul.f32 %v1843, 1.442695
        %v1938 = vpow.pop %v1937
        %v1939 = vmul.f32 %v1844, 1.442695
        %v1940 = vpow.pop %v1939
        %v1941 = vmul.f32 %v1845, 1.442695
        %v1942 = vpow.pop %v1941
        %v1943 = vmul.f32 %v1846, 1.442695
        %v1944 = vpow.pop %v1943
        %v1945 = vmul.f32 %v1847, 1.442695
        %v1946 = vpow.pop %v1945
        %v1947 = vmul.f32 %v1848, 1.442695
        %v1948 = vpow.pop %v1947
        %v1949 = vmul.f32 %v1849, 1.442695
        %v1950 = vpow.pop %v1949
        %v1951 = vmul.f32 %v1850, 1.442695
        %v1952 = vpow.pop %v1951
        %v1953 = vmul.f32 %v1851, 1.442695
        %v1954 = vpow.pop %v1953
        %v1955 = vmul.f32 %v1852, 1.442695
        %v1956 = vpow.pop %v1955
        %v1957 = vmul.f32 %v1853, 1.442695
        %v1958 = vpow.pop %v1957
        %v1959 = vmul.f32 %v1854, 1.442695
        %v1960 = vpow.pop %v1959
        %v1961 = vmul.f32 %v1855, 1.442695
        %v1962 = vpow.pop %v1961
        %v1963 = vmul.f32 %v1856, 1.442695
        %v1964 = vpow.pop %v1963
        %v1965 = vmul.f32 %v1857, 1.442695
        %v1966 = vpow.pop %v1965
        %v1967 = vmul.f32 %v1858, 1.442695
        %v1968 = vpow.pop %v1967
        %v1969 = vmul.f32 %v1859, 1.442695
        %v1970 = vpow.pop %v1969
        %v1971 = vmul.f32 %v1860, 1.442695
        %v1972 = vpow.pop %v1971
        %v1973 = vmul.f32 %v1861, 1.442695
        %v1974 = vpow.pop %v1973
        %v1975 = vmul.f32 %v1862, 1.442695
        %v1976 = vpow.pop %v1975
        %v1977 = vmul.f32 %v1863, 1.442695
        %v1978 = vpow.pop %v1977
        %v1979 = vmul.f32 %v1864, 1.442695
        %v1980 = vpow.pop %v1979
        %v1981 = vmul.f32 %v1865, 1.442695
        %v1982 = vpow.pop %v1981
        %v1983 = vmul.f32 %v1866, 1.442695
        %v1984 = vpow.pop %v1983
        %v1985 = vmul.f32 %v1867, 1.442695
        %v1986 = vpow.pop %v1985
        %v1987 = vmul.f32 %v1868, 1.442695
        %v1988 = vpow.pop %v1987
        %v1989 = vmul.f32 %v1869, 1.442695
        %v1990 = vpow.pop %v1989
        %v1991 = vmul.f32 %v1870, 1.442695
        %v1992 = vpow.pop %v1991
        %v1993 = vmul.f32 %v1871, 1.442695
        %v1994 = vpow.pop %v1993
        %v1995 = vmul.f32 %v1872, 1.442695
        %v1996 = vpow.pop %v1995
        %v1997 = vmul.f32 %v1873, 1.442695
        %v1998 = vpow.pop %v1997
        %v1999 = vmul.f32 %v1874, 1.442695
        %v2000 = vpow.pop %v1999
        %v2001 = vmul.f32 %v1875, 1.442695
        %v2002 = vpow.pop %v2001
        %v2003 = vmul.f32 %v1876, 1.442695
        %v2004 = vpow.pop %v2003
        %v2005 = vadd.f32 %v1878, %v1880
        %2006 = vadd.xlane.f32.xlu0 %v2005
        %v2007 = vpop.xlane.xlu0 %2006
        %v2008 = vadd.f32 %v1882, %v1884
        %2009 = vadd.xlane.f32.xlu0 %v2008
        %v2010 = vpop.xlane.xlu0 %2009
        %v2011 = vadd.f32 %v1886, %v1888
        %2012 = vadd.xlane.f32.xlu0 %v2011
        %v2013 = vpop.xlane.xlu0 %2012
        %v2014 = vadd.f32 %v1890, %v1892
        %2015 = vadd.xlane.f32.xlu0 %v2014
        %v2016 = vpop.xlane.xlu0 %2015
        %v2017 = vadd.f32 %v1894, %v1896
        %2018 = vadd.xlane.f32.xlu0 %v2017
        %v2019 = vpop.xlane.xlu0 %2018
        %v2020 = vadd.f32 %v1898, %v1900
        %2021 = vadd.xlane.f32.xlu0 %v2020
        %v2022 = vpop.xlane.xlu0 %2021
        %v2023 = vadd.f32 %v1902, %v1904
        %2024 = vadd.xlane.f32.xlu0 %v2023
        %v2025 = vpop.xlane.xlu0 %2024
        %v2026 = vadd.f32 %v1906, %v1908
        %2027 = vadd.xlane.f32.xlu0 %v2026
        %v2028 = vpop.xlane.xlu0 %2027
        %v2029 = vadd.f32 %v1910, %v1912
        %2030 = vadd.xlane.f32.xlu0 %v2029
        %v2031 = vpop.xlane.xlu0 %2030
        %v2032 = vadd.f32 %v1914, %v1916
        %2033 = vadd.xlane.f32.xlu0 %v2032
        %v2034 = vpop.xlane.xlu0 %2033
        %v2035 = vadd.f32 %v1918, %v1920
        %2036 = vadd.xlane.f32.xlu0 %v2035
        %v2037 = vpop.xlane.xlu0 %2036
        %v2038 = vadd.f32 %v1922, %v1924
        %2039 = vadd.xlane.f32.xlu0 %v2038
        %v2040 = vpop.xlane.xlu0 %2039
        %v2041 = vadd.f32 %v1926, %v1928
        %2042 = vadd.xlane.f32.xlu0 %v2041
        %v2043 = vpop.xlane.xlu0 %2042
        %v2044 = vadd.f32 %v1930, %v1932
        %2045 = vadd.xlane.f32.xlu0 %v2044
        %v2046 = vpop.xlane.xlu0 %2045
        %v2047 = vadd.f32 %v1934, %v1936
        %2048 = vadd.xlane.f32.xlu0 %v2047
        %v2049 = vpop.xlane.xlu0 %2048
        %v2050 = vadd.f32 %v1938, %v1940
        %2051 = vadd.xlane.f32.xlu0 %v2050
        %v2052 = vpop.xlane.xlu0 %2051
        %v2053 = vadd.f32 %v1942, %v1944
        %2054 = vadd.xlane.f32.xlu0 %v2053
        %v2055 = vpop.xlane.xlu0 %2054
        %v2056 = vadd.f32 %v1946, %v1948
        %2057 = vadd.xlane.f32.xlu0 %v2056
        %v2058 = vpop.xlane.xlu0 %2057
        %v2059 = vadd.f32 %v1950, %v1952
        %2060 = vadd.xlane.f32.xlu0 %v2059
        %v2061 = vpop.xlane.xlu0 %2060
        %v2062 = vadd.f32 %v1954, %v1956
        %2063 = vadd.xlane.f32.xlu0 %v2062
        %v2064 = vpop.xlane.xlu0 %2063
        %v2065 = vadd.f32 %v1958, %v1960
        %2066 = vadd.xlane.f32.xlu0 %v2065
        %v2067 = vpop.xlane.xlu0 %2066
        %v2068 = vadd.f32 %v1962, %v1964
        %2069 = vadd.xlane.f32.xlu0 %v2068
        %v2070 = vpop.xlane.xlu0 %2069
        %v2071 = vadd.f32 %v1966, %v1968
        %2072 = vadd.xlane.f32.xlu0 %v2071
        %v2073 = vpop.xlane.xlu0 %2072
        %v2074 = vadd.f32 %v1970, %v1972
        %2075 = vadd.xlane.f32.xlu0 %v2074
        %v2076 = vpop.xlane.xlu0 %2075
        %v2077 = vadd.f32 %v1974, %v1976
        %2078 = vadd.xlane.f32.xlu0 %v2077
        %v2079 = vpop.xlane.xlu0 %2078
        %v2080 = vadd.f32 %v1978, %v1980
        %2081 = vadd.xlane.f32.xlu0 %v2080
        %v2082 = vpop.xlane.xlu0 %2081
        %v2083 = vadd.f32 %v1982, %v1984
        %2084 = vadd.xlane.f32.xlu0 %v2083
        %v2085 = vpop.xlane.xlu0 %2084
        %v2086 = vadd.f32 %v1986, %v1988
        %2087 = vadd.xlane.f32.xlu0 %v2086
        %v2088 = vpop.xlane.xlu0 %2087
        %v2089 = vadd.f32 %v1990, %v1992
        %2090 = vadd.xlane.f32.xlu0 %v2089
        %v2091 = vpop.xlane.xlu0 %2090
        %v2092 = vadd.f32 %v1994, %v1996
        %2093 = vadd.xlane.f32.xlu0 %v2092
        %v2094 = vpop.xlane.xlu0 %2093
        %v2095 = vadd.f32 %v1998, %v2000
        %2096 = vadd.xlane.f32.xlu0 %v2095
        %v2097 = vpop.xlane.xlu0 %2096
        %v2098 = vadd.f32 %v2002, %v2004
        %2099 = vadd.xlane.f32.xlu0 %v2098
        %v2100 = vpop.xlane.xlu0 %2099
        %v2101 = vrcp.pop %v2007
        %v2102 = vrcp.pop %v2010
        %v2103 = vrcp.pop %v2013
        %v2104 = vrcp.pop %v2016
        %v2105 = vrcp.pop %v2019
        %v2106 = vrcp.pop %v2022
        %v2107 = vrcp.pop %v2025
        %v2108 = vrcp.pop %v2028
        %v2109 = vrcp.pop %v2031
        %v2110 = vrcp.pop %v2034
        %v2111 = vrcp.pop %v2037
        %v2112 = vrcp.pop %v2040
        %v2113 = vrcp.pop %v2043
        %v2114 = vrcp.pop %v2046
        %v2115 = vrcp.pop %v2049
        %v2116 = vrcp.pop %v2052
        %v2117 = vrcp.pop %v2055
        %v2118 = vrcp.pop %v2058
        %v2119 = vrcp.pop %v2061
        %v2120 = vrcp.pop %v2064
        %v2121 = vrcp.pop %v2067
        %v2122 = vrcp.pop %v2070
        %v2123 = vrcp.pop %v2073
        %v2124 = vrcp.pop %v2076
        %v2125 = vrcp.pop %v2079
        %v2126 = vrcp.pop %v2082
        %v2127 = vrcp.pop %v2085
        %v2128 = vrcp.pop %v2088
        %v2129 = vrcp.pop %v2091
        %v2130 = vrcp.pop %v2094
        %v2131 = vrcp.pop %v2097
        %v2132 = vrcp.pop %v2100
        %v2133 = vmul.f32 %v1878, %v2101
        %v2134 = vmul.f32 %v1880, %v2101
        %v2135 = vmul.f32 %v1882, %v2102
        %v2136 = vmul.f32 %v1884, %v2102
        %v2137 = vmul.f32 %v1886, %v2103
        %v2138 = vmul.f32 %v1888, %v2103
        %v2139 = vmul.f32 %v1890, %v2104
        %v2140 = vmul.f32 %v1892, %v2104
        %v2141 = vmul.f32 %v1894, %v2105
        %v2142 = vmul.f32 %v1896, %v2105
        %v2143 = vmul.f32 %v1898, %v2106
        %v2144 = vmul.f32 %v1900, %v2106
        %v2145 = vmul.f32 %v1902, %v2107
        %v2146 = vmul.f32 %v1904, %v2107
        %v2147 = vmul.f32 %v1906, %v2108
        %v2148 = vmul.f32 %v1908, %v2108
        %v2149 = vmul.f32 %v1910, %v2109
        %v2150 = vmul.f32 %v1912, %v2109
        %v2151 = vmul.f32 %v1914, %v2110
        %v2152 = vmul.f32 %v1916, %v2110
        %v2153 = vmul.f32 %v1918, %v2111
        %v2154 = vmul.f32 %v1920, %v2111
        %v2155 = vmul.f32 %v1922, %v2112
        %v2156 = vmul.f32 %v1924, %v2112
        %v2157 = vmul.f32 %v1926, %v2113
        %v2158 = vmul.f32 %v1928, %v2113
        %v2159 = vmul.f32 %v1930, %v2114
        %v2160 = vmul.f32 %v1932, %v2114
        %v2161 = vmul.f32 %v1934, %v2115
        %v2162 = vmul.f32 %v1936, %v2115
        %v2163 = vmul.f32 %v1938, %v2116
        %v2164 = vmul.f32 %v1940, %v2116
        %v2165 = vmul.f32 %v1942, %v2117
        %v2166 = vmul.f32 %v1944, %v2117
        %v2167 = vmul.f32 %v1946, %v2118
        %v2168 = vmul.f32 %v1948, %v2118
        %v2169 = vmul.f32 %v1950, %v2119
        %v2170 = vmul.f32 %v1952, %v2119
        %v2171 = vmul.f32 %v1954, %v2120
        %v2172 = vmul.f32 %v1956, %v2120
        %v2173 = vmul.f32 %v1958, %v2121
        %v2174 = vmul.f32 %v1960, %v2121
        %v2175 = vmul.f32 %v1962, %v2122
        %v2176 = vmul.f32 %v1964, %v2122
        %v2177 = vmul.f32 %v1966, %v2123
        %v2178 = vmul.f32 %v1968, %v2123
        %v2179 = vmul.f32 %v1970, %v2124
        %v2180 = vmul.f32 %v1972, %v2124
        %v2181 = vmul.f32 %v1974, %v2125
        %v2182 = vmul.f32 %v1976, %v2125
        %v2183 = vmul.f32 %v1978, %v2126
        %v2184 = vmul.f32 %v1980, %v2126
        %v2185 = vmul.f32 %v1982, %v2127
        %v2186 = vmul.f32 %v1984, %v2127
        %v2187 = vmul.f32 %v1986, %v2128
        %v2188 = vmul.f32 %v1988, %v2128
        %v2189 = vmul.f32 %v1990, %v2129
        %v2190 = vmul.f32 %v1992, %v2129
        %v2191 = vmul.f32 %v1994, %v2130
        %v2192 = vmul.f32 %v1996, %v2130
        %v2193 = vmul.f32 %v1998, %v2131
        %v2194 = vmul.f32 %v2000, %v2131
        %v2195 = vmul.f32 %v2002, %v2132
        %v2196 = vmul.f32 %v2004, %v2132
        %v2197 = vpack.c.bf16 %v2135, %v2133
        %v2198 = vpack.c.bf16 %v2136, %v2134
        %v2199 = vpack.c.bf16 %v2139, %v2137
        %v2200 = vpack.c.bf16 %v2140, %v2138
        %v2201 = vpack.c.bf16 %v2143, %v2141
        %v2202 = vpack.c.bf16 %v2144, %v2142
        %v2203 = vpack.c.bf16 %v2147, %v2145
        %v2204 = vpack.c.bf16 %v2148, %v2146
        %v2205 = vpack.c.bf16 %v2151, %v2149
        %v2206 = vpack.c.bf16 %v2152, %v2150
        %v2207 = vpack.c.bf16 %v2155, %v2153
        %v2208 = vpack.c.bf16 %v2156, %v2154
        %v2209 = vpack.c.bf16 %v2159, %v2157
        %v2210 = vpack.c.bf16 %v2160, %v2158
        %v2211 = vpack.c.bf16 %v2163, %v2161
        %v2212 = vpack.c.bf16 %v2164, %v2162
        %v2213 = vpack.c.bf16 %v2167, %v2165
        %v2214 = vpack.c.bf16 %v2168, %v2166
        %v2215 = vpack.c.bf16 %v2171, %v2169
        %v2216 = vpack.c.bf16 %v2172, %v2170
        %v2217 = vpack.c.bf16 %v2175, %v2173
        %v2218 = vpack.c.bf16 %v2176, %v2174
        %v2219 = vpack.c.bf16 %v2179, %v2177
        %v2220 = vpack.c.bf16 %v2180, %v2178
        %v2221 = vpack.c.bf16 %v2183, %v2181
        %v2222 = vpack.c.bf16 %v2184, %v2182
        %v2223 = vpack.c.bf16 %v2187, %v2185
        %v2224 = vpack.c.bf16 %v2188, %v2186
        %v2225 = vpack.c.bf16 %v2191, %v2189
        %v2226 = vpack.c.bf16 %v2192, %v2190
        %v2227 = vpack.c.bf16 %v2195, %v2193
        %v2228 = vpack.c.bf16 %v2196, %v2194
        %v2229 = vpack.c.bf16 %v1221, %v1219
        %v2230 = vpack.c.bf16 %v1226, %v1224
        %v2231 = vpack.c.bf16 %v1231, %v1229
        %v2232 = vpack.c.bf16 %v1236, %v1234
        %v2233 = vpack.c.bf16 %v1241, %v1239
        %v2234 = vpack.c.bf16 %v1246, %v1244
        %v2235 = vpack.c.bf16 %v1251, %v1249
        %v2236 = vpack.c.bf16 %v1256, %v1254
        %v2237 = vpack.c.bf16 %v1261, %v1259
        %v2238 = vpack.c.bf16 %v1266, %v1264
        %v2239 = vpack.c.bf16 %v1271, %v1269
        %v2240 = vpack.c.bf16 %v1276, %v1274
        %v2241 = vpack.c.bf16 %v1281, %v1279
        %v2242 = vpack.c.bf16 %v1286, %v1284
        %v2243 = vpack.c.bf16 %v1291, %v1289
        %v2244 = vpack.c.bf16 %v1296, %v1294
        %2245 = vmatpush.bf16.msra.mxu0 %v2236
        %2246 = vmatpush.bf16.msra.mxu0 %v2235
        %2247 = vmatpush.bf16.msra.mxu0 %v2234
        %2248 = vmatpush.bf16.msra.mxu0 %v2233
        %2249 = vmatpush.bf16.msra.mxu0 %v2232
        %2250 = vmatpush.bf16.msra.mxu0 %v2231
        %2251 = vmatpush.bf16.msra.mxu0 %v2230
        %2252 = vmatpush.bf16.msra.mxu0 %v2229
        %2253 = vmatmul.bf16.gmra.mxu0 %v2197
        %v2254 = vpop.f32.mrf.mxu0
        %v2255 = vadd.f32 0.0, %v2254
        %v2256 = vpop.f32.mrf.mxu0
        %v2257 = vadd.f32 0.0, %v2256
        %2258 = vmatmul.bf16.gmra.mxu0 %v2199
        %v2259 = vpop.f32.mrf.mxu0
        %v2260 = vadd.f32 0.0, %v2259
        %v2261 = vpop.f32.mrf.mxu0
        %v2262 = vadd.f32 0.0, %v2261
        %2263 = vmatmul.bf16.gmra.mxu0 %v2201
        %v2264 = vpop.f32.mrf.mxu0
        %v2265 = vadd.f32 0.0, %v2264
        %v2266 = vpop.f32.mrf.mxu0
        %v2267 = vadd.f32 0.0, %v2266
        %2268 = vmatmul.bf16.gmra.mxu0 %v2203
        %v2269 = vpop.f32.mrf.mxu0
        %v2270 = vadd.f32 0.0, %v2269
        %v2271 = vpop.f32.mrf.mxu0
        %v2272 = vadd.f32 0.0, %v2271
        %2273 = vmatmul.bf16.gmra.mxu0 %v2205
        %v2274 = vpop.f32.mrf.mxu0
        %v2275 = vadd.f32 0.0, %v2274
        %v2276 = vpop.f32.mrf.mxu0
        %v2277 = vadd.f32 0.0, %v2276
        %2278 = vmatmul.bf16.gmra.mxu0 %v2207
        %v2279 = vpop.f32.mrf.mxu0
        %v2280 = vadd.f32 0.0, %v2279
        %v2281 = vpop.f32.mrf.mxu0
        %v2282 = vadd.f32 0.0, %v2281
        %2283 = vmatmul.bf16.gmra.mxu0 %v2209
        %v2284 = vpop.f32.mrf.mxu0
        %v2285 = vadd.f32 0.0, %v2284
        %v2286 = vpop.f32.mrf.mxu0
        %v2287 = vadd.f32 0.0, %v2286
        %2288 = vmatmul.bf16.gmra.mxu0 %v2211
        %v2289 = vpop.f32.mrf.mxu0
        %v2290 = vadd.f32 0.0, %v2289
        %v2291 = vpop.f32.mrf.mxu0
        %v2292 = vadd.f32 0.0, %v2291
        %2293 = vmatmul.bf16.gmra.mxu0 %v2213
        %v2294 = vpop.f32.mrf.mxu0
        %v2295 = vadd.f32 0.0, %v2294
        %v2296 = vpop.f32.mrf.mxu0
        %v2297 = vadd.f32 0.0, %v2296
        %2298 = vmatmul.bf16.gmra.mxu0 %v2215
        %v2299 = vpop.f32.mrf.mxu0
        %v2300 = vadd.f32 0.0, %v2299
        %v2301 = vpop.f32.mrf.mxu0
        %v2302 = vadd.f32 0.0, %v2301
        %2303 = vmatmul.bf16.gmra.mxu0 %v2217
        %v2304 = vpop.f32.mrf.mxu0
        %v2305 = vadd.f32 0.0, %v2304
        %v2306 = vpop.f32.mrf.mxu0
        %v2307 = vadd.f32 0.0, %v2306
        %2308 = vmatmul.bf16.gmra.mxu0 %v2219
        %v2309 = vpop.f32.mrf.mxu0
        %v2310 = vadd.f32 0.0, %v2309
        %v2311 = vpop.f32.mrf.mxu0
        %v2312 = vadd.f32 0.0, %v2311
        %2313 = vmatmul.bf16.gmra.mxu0 %v2221
        %v2314 = vpop.f32.mrf.mxu0
        %v2315 = vadd.f32 0.0, %v2314
        %v2316 = vpop.f32.mrf.mxu0
        %v2317 = vadd.f32 0.0, %v2316
        %2318 = vmatmul.bf16.gmra.mxu0 %v2223
        %v2319 = vpop.f32.mrf.mxu0
        %v2320 = vadd.f32 0.0, %v2319
        %v2321 = vpop.f32.mrf.mxu0
        %v2322 = vadd.f32 0.0, %v2321
        %2323 = vmatmul.bf16.gmra.mxu0 %v2225
        %v2324 = vpop.f32.mrf.mxu0
        %v2325 = vadd.f32 0.0, %v2324
        %v2326 = vpop.f32.mrf.mxu0
        %v2327 = vadd.f32 0.0, %v2326
        %2328 = vmatmul.bf16.gmra.mxu0 %v2227
        %v2329 = vpop.f32.mrf.mxu0
        %v2330 = vadd.f32 0.0, %v2329
        %v2331 = vpop.f32.mrf.mxu0
        %v2332 = vadd.f32 0.0, %v2331
        %2333 = vdwg.mxu0
        %2334 = vmatpush.bf16.msra.mxu0 %v2244
        %2335 = vmatpush.bf16.msra.mxu0 %v2243
        %2336 = vmatpush.bf16.msra.mxu0 %v2242
        %2337 = vmatpush.bf16.msra.mxu0 %v2241
        %2338 = vmatpush.bf16.msra.mxu0 %v2240
        %2339 = vmatpush.bf16.msra.mxu0 %v2239
        %2340 = vmatpush.bf16.msra.mxu0 %v2238
        %2341 = vmatpush.bf16.msra.mxu0 %v2237
        %2342 = vmatmul.bf16.gmra.mxu0 %v2198
        %v2343 = vpop.f32.mrf.mxu0
        %v2344 = vadd.f32 %v2255, %v2343
        %v2345 = vpop.f32.mrf.mxu0
        %v2346 = vadd.f32 %v2257, %v2345
        %2347 = vmatmul.bf16.gmra.mxu0 %v2200
        %v2348 = vpop.f32.mrf.mxu0
        %v2349 = vadd.f32 %v2260, %v2348
        %v2350 = vpop.f32.mrf.mxu0
        %v2351 = vadd.f32 %v2262, %v2350
        %2352 = vmatmul.bf16.gmra.mxu0 %v2202
        %v2353 = vpop.f32.mrf.mxu0
        %v2354 = vadd.f32 %v2265, %v2353
        %v2355 = vpop.f32.mrf.mxu0
        %v2356 = vadd.f32 %v2267, %v2355
        %2357 = vmatmul.bf16.gmra.mxu0 %v2204
        %v2358 = vpop.f32.mrf.mxu0
        %v2359 = vadd.f32 %v2270, %v2358
        %v2360 = vpop.f32.mrf.mxu0
        %v2361 = vadd.f32 %v2272, %v2360
        %2362 = vmatmul.bf16.gmra.mxu0 %v2206
        %v2363 = vpop.f32.mrf.mxu0
        %v2364 = vadd.f32 %v2275, %v2363
        %v2365 = vpop.f32.mrf.mxu0
        %v2366 = vadd.f32 %v2277, %v2365
        %2367 = vmatmul.bf16.gmra.mxu0 %v2208
        %v2368 = vpop.f32.mrf.mxu0
        %v2369 = vadd.f32 %v2280, %v2368
        %v2370 = vpop.f32.mrf.mxu0
        %v2371 = vadd.f32 %v2282, %v2370
        %2372 = vmatmul.bf16.gmra.mxu0 %v2210
        %v2373 = vpop.f32.mrf.mxu0
        %v2374 = vadd.f32 %v2285, %v2373
        %v2375 = vpop.f32.mrf.mxu0
        %v2376 = vadd.f32 %v2287, %v2375
        %2377 = vmatmul.bf16.gmra.mxu0 %v2212
        %v2378 = vpop.f32.mrf.mxu0
        %v2379 = vadd.f32 %v2290, %v2378
        %v2380 = vpop.f32.mrf.mxu0
        %v2381 = vadd.f32 %v2292, %v2380
        %2382 = vmatmul.bf16.gmra.mxu0 %v2214
        %v2383 = vpop.f32.mrf.mxu0
        %v2384 = vadd.f32 %v2295, %v2383
        %v2385 = vpop.f32.mrf.mxu0
        %v2386 = vadd.f32 %v2297, %v2385
        %2387 = vmatmul.bf16.gmra.mxu0 %v2216
        %v2388 = vpop.f32.mrf.mxu0
        %v2389 = vadd.f32 %v2300, %v2388
        %v2390 = vpop.f32.mrf.mxu0
        %v2391 = vadd.f32 %v2302, %v2390
        %2392 = vmatmul.bf16.gmra.mxu0 %v2218
        %v2393 = vpop.f32.mrf.mxu0
        %v2394 = vadd.f32 %v2305, %v2393
        %v2395 = vpop.f32.mrf.mxu0
        %v2396 = vadd.f32 %v2307, %v2395
        %2397 = vmatmul.bf16.gmra.mxu0 %v2220
        %v2398 = vpop.f32.mrf.mxu0
        %v2399 = vadd.f32 %v2310, %v2398
        %v2400 = vpop.f32.mrf.mxu0
        %v2401 = vadd.f32 %v2312, %v2400
        %2402 = vmatmul.bf16.gmra.mxu0 %v2222
        %v2403 = vpop.f32.mrf.mxu0
        %v2404 = vadd.f32 %v2315, %v2403
        %v2405 = vpop.f32.mrf.mxu0
        %v2406 = vadd.f32 %v2317, %v2405
        %2407 = vmatmul.bf16.gmra.mxu0 %v2224
        %v2408 = vpop.f32.mrf.mxu0
        %v2409 = vadd.f32 %v2320, %v2408
        %v2410 = vpop.f32.mrf.mxu0
        %v2411 = vadd.f32 %v2322, %v2410
        %2412 = vmatmul.bf16.gmra.mxu0 %v2226
        %v2413 = vpop.f32.mrf.mxu0
        %v2414 = vadd.f32 %v2325, %v2413
        %v2415 = vpop.f32.mrf.mxu0
        %v2416 = vadd.f32 %v2327, %v2415
        %2417 = vmatmul.bf16.gmra.mxu0 %v2228
        %v2418 = vpop.f32.mrf.mxu0
        %v2419 = vadd.f32 %v2330, %v2418
        %v2420 = vpop.f32.mrf.mxu0
        %v2421 = vadd.f32 %v2332, %v2420
        %2422 = vdwg.mxu0
        %s2423 = sld [smem:[#allocation2]]
        %v2424 = vstv %s2423
        %v2425 = vmul.f32 %v2424, %v2344
        %v2426 = vmul.f32 %v2424, %v2346
        %v2427 = vmul.f32 %v2424, %v2349
        %v2428 = vmul.f32 %v2424, %v2351
        %v2429 = vmul.f32 %v2424, %v2354
        %v2430 = vmul.f32 %v2424, %v2356
        %v2431 = vmul.f32 %v2424, %v2359
        %v2432 = vmul.f32 %v2424, %v2361
        %v2433 = vmul.f32 %v2424, %v2364
        %v2434 = vmul.f32 %v2424, %v2366
        %v2435 = vmul.f32 %v2424, %v2369
        %v2436 = vmul.f32 %v2424, %v2371
        %v2437 = vmul.f32 %v2424, %v2374
        %v2438 = vmul.f32 %v2424, %v2376
        %v2439 = vmul.f32 %v2424, %v2379
        %v2440 = vmul.f32 %v2424, %v2381
        %v2441 = vmul.f32 %v2424, %v2384
        %v2442 = vmul.f32 %v2424, %v2386
        %v2443 = vmul.f32 %v2424, %v2389
        %v2444 = vmul.f32 %v2424, %v2391
        %v2445 = vmul.f32 %v2424, %v2394
        %v2446 = vmul.f32 %v2424, %v2396
        %v2447 = vmul.f32 %v2424, %v2399
        %v2448 = vmul.f32 %v2424, %v2401
        %v2449 = vmul.f32 %v2424, %v2404
        %v2450 = vmul.f32 %v2424, %v2406
        %v2451 = vmul.f32 %v2424, %v2409
        %v2452 = vmul.f32 %v2424, %v2411
        %v2453 = vmul.f32 %v2424, %v2414
        %v2454 = vmul.f32 %v2424, %v2416
        %v2455 = vmul.f32 %v2424, %v2419
        %v2456 = vmul.f32 %v2424, %v2421
        %v2457 = vadd.f32 %v2425, %v921
        %v2458 = vadd.f32 %v2426, %v922
        %v2459 = vadd.f32 %v2427, %v923
        %v2460 = vadd.f32 %v2428, %v924
        %v2461 = vadd.f32 %v2429, %v925
        %v2462 = vadd.f32 %v2430, %v926
        %v2463 = vadd.f32 %v2431, %v927
        %v2464 = vadd.f32 %v2432, %v928
        %v2465 = vadd.f32 %v2433, %v929
        %v2466 = vadd.f32 %v2434, %v930
        %v2467 = vadd.f32 %v2435, %v931
        %v2468 = vadd.f32 %v2436, %v932
        %v2469 = vadd.f32 %v2437, %v933
        %v2470 = vadd.f32 %v2438, %v934
        %v2471 = vadd.f32 %v2439, %v935
        %v2472 = vadd.f32 %v2440, %v936
        %v2473 = vadd.f32 %v2441, %v937
        %v2474 = vadd.f32 %v2442, %v938
        %v2475 = vadd.f32 %v2443, %v939
        %v2476 = vadd.f32 %v2444, %v940
        %v2477 = vadd.f32 %v2445, %v941
        %v2478 = vadd.f32 %v2446, %v942
        %v2479 = vadd.f32 %v2447, %v943
        %v2480 = vadd.f32 %v2448, %v944
        %v2481 = vadd.f32 %v2449, %v945
        %v2482 = vadd.f32 %v2450, %v946
        %v2483 = vadd.f32 %v2451, %v947
        %v2484 = vadd.f32 %v2452, %v948
        %v2485 = vadd.f32 %v2453, %v949
        %v2486 = vadd.f32 %v2454, %v950
        %v2487 = vadd.f32 %v2455, %v951
        %v2488 = vadd.f32 %v2456, %v952
        %2489 = vst.msk [vmem:[%s317] sm:$0xff] %vm970, %v2457
        %2490 = vst.msk [vmem:[%s317 + $0x8] sm:$0xff] %vm970, %v2458
        %2491 = vst.msk [vmem:[%s317 + $0x10] sm:$0xff] %vm970, %v2459
        %2492 = vst.msk [vmem:[%s317 + $0x18] sm:$0xff] %vm970, %v2460
        %2493 = vst.msk [vmem:[%s317 + $0x20] sm:$0xff] %vm970, %v2461
        %2494 = vst.msk [vmem:[%s317 + $0x28] sm:$0xff] %vm970, %v2462
        %2495 = vst.msk [vmem:[%s317 + $0x30] sm:$0xff] %vm970, %v2463
        %2496 = vst.msk [vmem:[%s317 + $0x38] sm:$0xff] %vm970, %v2464
        %2497 = vst.msk [vmem:[%s317 + $0x40] sm:$0xff] %vm970, %v2465
        %2498 = vst.msk [vmem:[%s317 + $0x48] sm:$0xff] %vm970, %v2466
        %2499 = vst.msk [vmem:[%s317 + $0x50] sm:$0xff] %vm970, %v2467
        %2500 = vst.msk [vmem:[%s317 + $0x58] sm:$0xff] %vm970, %v2468
        %2501 = vst.msk [vmem:[%s317 + $0x60] sm:$0xff] %vm970, %v2469
        %2502 = vst.msk [vmem:[%s317 + $0x68] sm:$0xff] %vm970, %v2470
        %2503 = vst.msk [vmem:[%s317 + $0x70] sm:$0xff] %vm970, %v2471
        %2504 = vst.msk [vmem:[%s317 + $0x78] sm:$0xff] %vm970, %v2472
        %2505 = vst.msk [vmem:[%s317 + $0x80] sm:$0xff] %vm970, %v2473
        %2506 = vst.msk [vmem:[%s317 + $0x88] sm:$0xff] %vm970, %v2474
        %2507 = vst.msk [vmem:[%s317 + $0x90] sm:$0xff] %vm970, %v2475
        %2508 = vst.msk [vmem:[%s317 + $0x98] sm:$0xff] %vm970, %v2476
        %2509 = vst.msk [vmem:[%s317 + $0xa0] sm:$0xff] %vm970, %v2477
        %2510 = vst.msk [vmem:[%s317 + $0xa8] sm:$0xff] %vm970, %v2478
        %2511 = vst.msk [vmem:[%s317 + $0xb0] sm:$0xff] %vm970, %v2479
        %2512 = vst.msk [vmem:[%s317 + $0xb8] sm:$0xff] %vm970, %v2480
        %2513 = vst.msk [vmem:[%s317 + $0xc0] sm:$0xff] %vm970, %v2481
        %2514 = vst.msk [vmem:[%s317 + $0xc8] sm:$0xff] %vm970, %v2482
        %2515 = vst.msk [vmem:[%s317 + $0xd0] sm:$0xff] %vm970, %v2483
        %2516 = vst.msk [vmem:[%s317 + $0xd8] sm:$0xff] %vm970, %v2484
        %2517 = vst.msk [vmem:[%s317 + $0xe0] sm:$0xff] %vm970, %v2485
        %2518 = vst.msk [vmem:[%s317 + $0xe8] sm:$0xff] %vm970, %v2486
        %2519 = vst.msk [vmem:[%s317 + $0xf0] sm:$0xff] %vm970, %v2487
        %2520 = vst.msk [vmem:[%s317 + $0xf8] sm:$0xff] %vm970, %v2488
        %2521 = vst [vmem:[%s307] sm:$0xff] %v2133
        %2522 = vst [vmem:[%s307 + $0x8] sm:$0xff] %v2134
        %2523 = vst [vmem:[%s307 + $0x10] sm:$0xff] %v2135
        %2524 = vst [vmem:[%s307 + $0x18] sm:$0xff] %v2136
        %2525 = vst [vmem:[%s307 + $0x20] sm:$0xff] %v2137
        %2526 = vst [vmem:[%s307 + $0x28] sm:$0xff] %v2138
        %2527 = vst [vmem:[%s307 + $0x30] sm:$0xff] %v2139
        %2528 = vst [vmem:[%s307 + $0x38] sm:$0xff] %v2140
        %2529 = vst [vmem:[%s307 + $0x40] sm:$0xff] %v2141
        %2530 = vst [vmem:[%s307 + $0x48] sm:$0xff] %v2142
        %2531 = vst [vmem:[%s307 + $0x50] sm:$0xff] %v2143
        %2532 = vst [vmem:[%s307 + $0x58] sm:$0xff] %v2144
        %2533 = vst [vmem:[%s307 + $0x60] sm:$0xff] %v2145
        %2534 = vst [vmem:[%s307 + $0x68] sm:$0xff] %v2146
        %2535 = vst [vmem:[%s307 + $0x70] sm:$0xff] %v2147
        %2536 = vst [vmem:[%s307 + $0x78] sm:$0xff] %v2148
        %2537 = vst [vmem:[%s307 + $0x80] sm:$0xff] %v2149
        %2538 = vst [vmem:[%s307 + $0x88] sm:$0xff] %v2150
        %2539 = vst [vmem:[%s307 + $0x90] sm:$0xff] %v2151
        %2540 = vst [vmem:[%s307 + $0x98] sm:$0xff] %v2152
        %2541 = vst [vmem:[%s307 + $0xa0] sm:$0xff] %v2153
        %2542 = vst [vmem:[%s307 + $0xa8] sm:$0xff] %v2154
        %2543 = vst [vmem:[%s307 + $0xb0] sm:$0xff] %v2155
        %2544 = vst [vmem:[%s307 + $0xb8] sm:$0xff] %v2156
        %2545 = vst [vmem:[%s307 + $0xc0] sm:$0xff] %v2157
        %2546 = vst [vmem:[%s307 + $0xc8] sm:$0xff] %v2158
        %2547 = vst [vmem:[%s307 + $0xd0] sm:$0xff] %v2159
        %2548 = vst [vmem:[%s307 + $0xd8] sm:$0xff] %v2160
        %2549 = vst [vmem:[%s307 + $0xe0] sm:$0xff] %v2161
        %2550 = vst [vmem:[%s307 + $0xe8] sm:$0xff] %v2162
        %2551 = vst [vmem:[%s307 + $0xf0] sm:$0xff] %v2163
        %2552 = vst [vmem:[%s307 + $0xf8] sm:$0xff] %v2164
        %2553 = vst [vmem:[%s307 + $0x100] sm:$0xff] %v2165
        %2554 = vst [vmem:[%s307 + $0x108] sm:$0xff] %v2166
        %2555 = vst [vmem:[%s307 + $0x110] sm:$0xff] %v2167
        %2556 = vst [vmem:[%s307 + $0x118] sm:$0xff] %v2168
        %2557 = vst [vmem:[%s307 + $0x120] sm:$0xff] %v2169
        %2558 = vst [vmem:[%s307 + $0x128] sm:$0xff] %v2170
        %2559 = vst [vmem:[%s307 + $0x130] sm:$0xff] %v2171
        %2560 = vst [vmem:[%s307 + $0x138] sm:$0xff] %v2172
        %2561 = vst [vmem:[%s307 + $0x140] sm:$0xff] %v2173
        %2562 = vst [vmem:[%s307 + $0x148] sm:$0xff] %v2174
        %2563 = vst [vmem:[%s307 + $0x150] sm:$0xff] %v2175
        %2564 = vst [vmem:[%s307 + $0x158] sm:$0xff] %v2176
        %2565 = vst [vmem:[%s307 + $0x160] sm:$0xff] %v2177
        %2566 = vst [vmem:[%s307 + $0x168] sm:$0xff] %v2178
        %2567 = vst [vmem:[%s307 + $0x170] sm:$0xff] %v2179
        %2568 = vst [vmem:[%s307 + $0x178] sm:$0xff] %v2180
        %2569 = vst [vmem:[%s307 + $0x180] sm:$0xff] %v2181
        %2570 = vst [vmem:[%s307 + $0x188] sm:$0xff] %v2182
        %2571 = vst [vmem:[%s307 + $0x190] sm:$0xff] %v2183
        %2572 = vst [vmem:[%s307 + $0x198] sm:$0xff] %v2184
        %2573 = vst [vmem:[%s307 + $0x1a0] sm:$0xff] %v2185
        %2574 = vst [vmem:[%s307 + $0x1a8] sm:$0xff] %v2186
        %2575 = vst [vmem:[%s307 + $0x1b0] sm:$0xff] %v2187
        %2576 = vst [vmem:[%s307 + $0x1b8] sm:$0xff] %v2188
        %2577 = vst [vmem:[%s307 + $0x1c0] sm:$0xff] %v2189
        %2578 = vst [vmem:[%s307 + $0x1c8] sm:$0xff] %v2190
        %2579 = vst [vmem:[%s307 + $0x1d0] sm:$0xff] %v2191
        %2580 = vst [vmem:[%s307 + $0x1d8] sm:$0xff] %v2192
        %2581 = vst [vmem:[%s307 + $0x1e0] sm:$0xff] %v2193
        %2582 = vst [vmem:[%s307 + $0x1e8] sm:$0xff] %v2194
        %2583 = vst [vmem:[%s307 + $0x1f0] sm:$0xff] %v2195
        %2584 = vst [vmem:[%s307 + $0x1f8] sm:$0xff] %v2196
        %p2585 = scmp.lt.s32.totalorder %s24, 1
        %s2586 = scalar_select %p2585, %s24, 1
        %s2587 = smul.addr %s2586, 32
        %s2588 = smul.addr %s2587, 8
        %s2589 = scalar_lea.vmem %s7, %s2588
        %s2590 = sand.u32 %s210, 1
        %s2591 = scalar_lea.sflag [#allocation4], %s2590
        %s2592 = sand.u32 %s210, 1
        %s2593 = smul.addr %s2592, 512
        %s2594 = scalar_lea.vmem [#allocation3], %s2593
        // Predicated region
        $region49: #{_lambda_.3} parent=47 // pred_check
          %p2595 = pneg %p194
        $region50: #{_lambda_.3} parent=47 // pred_check_branch
          %2597 = sbr.rel (%p2595) target = $region52
        $region51: #{_lambda_.3} parent=47 // pred_region
          _
        $region52: #{_lambda_.3} parent=47 // pred_fallthru
          _
        // Predicated region
        $region53: #{_lambda_.3} parent=47 // pred_check
          %p2598 = pneg %p220
        $region54: #{_lambda_.3} parent=47 // pred_check_branch
          %2600 = sbr.rel (%p2598) target = $region56
        $region55: #{_lambda_.3} parent=47 // pred_region
          %2602 = vsyncadd %s2591, 0
          %s2603 = smul.addr %s24, 64
          %s2604 = smul.addr %s2603, 8
          %s2605 = scalar_lea.hbm %s8, %s2604
          %s2606 = sshll.u32 %s2594, 4
          %s2607 = int_to_ptr.vmem [resolvable:$true] %s2606
          %s2608 = sshll.u32 %s2605, 4
          %s2609 = int_to_ptr.hbm [resolvable:$true] %s2608
          %2614 = dma.vmem_to_hbm [thread:$0]  %s2607, 8192, %s2609, %s2591, 256, 256, 16
        $region56: #{_lambda_.3} parent=47 // pred_fallthru
          _
      $region48: #{_lambda_.3} parent=5 // pred_fallthru
        _
      %p2615 = scmp.le.s32.totalorder 2, %s19
      // Predicated region
      $region57: #{_lambda_.3} parent=5 // pred_check
        %p2616 = pneg %p2615
      $region58: #{_lambda_.3} parent=5 // pred_check_branch
        %2618 = sbr.rel (%p2616) target = $region60
      $region59: #{_lambda_.3} parent=5 // pred_region
        %s2619 = ssub.s32 %s19, 2
        // Predicated region
        $region61: #{_lambda_.3} parent=59 // pred_check
          %p2620 = pneg %p200
        $region62: #{_lambda_.3} parent=59 // pred_check_branch
          %2622 = sbr.rel (%p2620) target = $region64
        $region63: #{_lambda_.3} parent=59 // pred_region
          %p2623 = scmp.lt.s32.totalorder %s25, 1
          %s2624 = scalar_select %p2623, %s25, 1
          %s2625 = smul.addr %s2624, 32
          %s2626 = smul.addr %s2625, 8
          %s2627 = scalar_lea.vmem %s7, %s2626
        $region64: #{_lambda_.3} parent=59 // pred_fallthru
          _
        // Predicated region
        $region65: #{_lambda_.3} parent=59 // pred_check
          %p2628 = pneg %p226
        $region66: #{_lambda_.3} parent=59 // pred_check_branch
          %2630 = sbr.rel (%p2628) target = $region68
        $region67: #{_lambda_.3} parent=59 // pred_region
          %s2631 = sand.u32 %s211, 1
          %s2632 = scalar_lea.sflag [#allocation4], %s2631
          %s2633 = sand.u32 %s211, 1
          %s2634 = smul.addr %s2633, 512
          %s2635 = scalar_lea.vmem [#allocation3], %s2634
          %2637 = dma.done %s2632, 8192
        $region68: #{_lambda_.3} parent=59 // pred_fallthru
          _
      $region60: #{_lambda_.3} parent=5 // pred_fallthru
        _
    $region6: #{_lambda_.3} parent=1 // loop_footer
      %s23 = sadd.s32 1, %s19
    $region7: #{_lambda_.3} parent=1 // loop_footer_branch
      %18 = sbr.rel target = $region3
    $region8: #{_lambda_.3} parent=1 // loop_exit
      _
    %2638 = vsyncpa [#allocation4], 1
    %s2639 = scalar_lea.sflag [#allocation4], 1
    %2640 = vsyncpa %s2639, 1

// kernel: _lambda_.5
$region0: #{_lambda_.5}
  #allocation0 [shape = 'u32[]', space=smem, size = 0x4, offset = 0x4, fixed_abs, tag = 'smem constant byte address 0x4 - core index']
  #allocation1 [shape = 'u32[72,128]{1,0:T(1,128)}', space=vmem, size = 0x9000, scoped, tag = 'internal scratch']
  #allocation2 [shape = 'f32[1,1]{1,0:T(1,128)S(1)}', space=vmem, size = 0x200, scoped, tag = 'scoped memory for _lambda_.5']
  %s0 = inlined_call_operand.vmem [shape: f32[2,64,16], index: 0, kind: input, shape index: {}]
  %s1 = inlined_call_operand.vmem [shape: f32[16,32], index: 1, kind: input, shape index: {}]
  %s2 = inlined_call_operand.vmem [shape: f32[1,32], index: 2, kind: input, shape index: {}]
  %s3 = inlined_call_operand.vmem [shape: f32[1,32], index: 3, kind: input, shape index: {}]
  %s4 = inlined_call_operand.<no memory space> [shape: f32[1,1], index: 4, kind: input, shape index: {}]
  %s5 = inlined_call_operand.hbm [shape: f32[2,1,32], index: 5, kind: output, shape index: {0}]
  %s6 = inlined_call_operand.vmem [shape: f32[2,1,1], index: 6, kind: output, shape index: {1}]
  %7 = xla_tuple %s5, %s6
  %s8 = sld [smem:[#allocation0]]
  $region61: #{_lambda_.5} parent=0
    _
  %s10 = ssub.s32 1, %s8
  %s11 = scalar_select 0, %s10, %s8
  %v12 = vstv %s4
  %13 = vst [vmem:[#allocation2] sm:$0x1] %v12
  $region1: #{_lambda_.5} parent=0
    #allocation3 [shape = 'u8[1024]{0}', space=vmem, size = 0x400, scoped, tag = 'output window, operand 0']
    #allocation4 [shape = 's32[2]{0}', space=sflag, size = 0x8, scoped, tag = 'scoped memory for _lambda_.5']
    %14 = vsyncpa [#allocation4], 0
    %s15 = scalar_lea.sflag [#allocation4], 1
    %16 = vsyncpa %s15, 0
    loop: start=0, step=1, limit=4
    $region2: #{_lambda_.5} parent=1 // loop_pre_header
      _
    $region3: #{_lambda_.5} parent=1 // loop_header
      %s18 = sphi 0, %s22
      %p19 = scmp.ge.s32.totalorder %s18, 4
      %s28 = sphi 0, %s30
      %s31 = sphi 0, %s28
      %s32 = sphi 0, %s31
      %s48 = sphi 0, %s32
      %s52 = sphi 0, %s52
      %s54 = sphi 0, %s52
      %s55 = sphi 0, %s54
      %s69 = sphi 0, %s55
      %s73 = sphi 0, %s73
      %s75 = sphi 0, %s73
      %s76 = sphi 0, %s75
      %s90 = sphi 0, %s76
      %s94 = sphi 0, %s94
      %s96 = sphi 0, %s94
      %s97 = sphi 0, %s96
      %s111 = sphi 0, %s97
      %s115 = sphi 0, %s115
      %s117 = sphi 0, %s115
      %s118 = sphi 0, %s117
      %s132 = sphi 0, %s118
      %s138 = sphi 0, %s140
      %s141 = sphi 0, %s138
      %s142 = sphi 0, %s141
      %s158 = sphi 0, %s142
      %s164 = sphi 0, %s166
      %s167 = sphi 0, %s164
      %s168 = sphi 0, %s167
      %s184 = sphi 0, %s168
    $region4: #{_lambda_.5} parent=1 // loop_header_branch
      %21 = sbr.rel (%p19) target = $region8
    $region5: #{_lambda_.5} parent=1 // loop_body
      %s23 = ssub.s32 %s18, 1
      %s24 = ssub.s32 %s18, 2
      %s25 = sadd.s32 %s18, 1
      %s26 = ssub.s32 %s18, %s25
      %p27 = scmp.eq.s32.totalorder %s26, 0
      %s29 = sadd.s32 %s28, 1
      %s30 = scalar_select %p27, %s28, %s29
      %p33 = pneg %p27
      %p34 = scmp.eq.s32.totalorder %s18, 1
      %p35 = por %p33, %p34
      %p36 = scmp.ne.s32.totalorder %s28, %s31
      %p37 = scmp.eq.s32.totalorder %s18, 0
      %p38 = por %p36, %p37
      %p39 = scmp.ne.s32.totalorder %s28, %s31
      %p40 = scmp.eq.s32.totalorder %s23, 1
      %p41 = por %p39, %p40
      %p42 = scmp.ne.s32.totalorder %s31, %s32
      %p43 = scmp.eq.s32.totalorder %s23, 0
      %p44 = por %p42, %p43
      %p45 = scmp.ne.s32.totalorder %s31, %s32
      %p46 = scmp.eq.s32.totalorder %s24, 1
      %p47 = por %p45, %p46
      %p49 = scmp.ne.s32.totalorder %s32, %s48
      %p50 = scmp.eq.s32.totalorder %s24, 0
      %p51 = por %p49, %p50
      %s53 = sadd.s32 %s52, 1
      %p56 = scmp.eq.s32.totalorder %s18, 1
      %p57 = scmp.ne.s32.totalorder %s52, %s54
      %p58 = scmp.eq.s32.totalorder %s18, 0
      %p59 = por %p57, %p58
      %p60 = scmp.ne.s32.totalorder %s52, %s54
      %p61 = scmp.eq.s32.totalorder %s23, 1
      %p62 = por %p60, %p61
      %p63 = scmp.ne.s32.totalorder %s54, %s55
      %p64 = scmp.eq.s32.totalorder %s23, 0
      %p65 = por %p63, %p64
      %p66 = scmp.ne.s32.totalorder %s54, %s55
      %p67 = scmp.eq.s32.totalorder %s24, 1
      %p68 = por %p66, %p67
      %p70 = scmp.ne.s32.totalorder %s55, %s69
      %p71 = scmp.eq.s32.totalorder %s24, 0
      %p72 = por %p70, %p71
      %s74 = sadd.s32 %s73, 1
      %p77 = scmp.eq.s32.totalorder %s18, 1
      %p78 = scmp.ne.s32.totalorder %s73, %s75
      %p79 = scmp.eq.s32.totalorder %s18, 0
      %p80 = por %p78, %p79
      %p81 = scmp.ne.s32.totalorder %s73, %s75
      %p82 = scmp.eq.s32.totalorder %s23, 1
      %p83 = por %p81, %p82
      %p84 = scmp.ne.s32.totalorder %s75, %s76
      %p85 = scmp.eq.s32.totalorder %s23, 0
      %p86 = por %p84, %p85
      %p87 = scmp.ne.s32.totalorder %s75, %s76
      %p88 = scmp.eq.s32.totalorder %s24, 1
      %p89 = por %p87, %p88
      %p91 = scmp.ne.s32.totalorder %s76, %s90
      %p92 = scmp.eq.s32.totalorder %s24, 0
      %p93 = por %p91, %p92
      %s95 = sadd.s32 %s94, 1
      %p98 = scmp.eq.s32.totalorder %s18, 1
      %p99 = scmp.ne.s32.totalorder %s94, %s96
      %p100 = scmp.eq.s32.totalorder %s18, 0
      %p101 = por %p99, %p100
      %p102 = scmp.ne.s32.totalorder %s94, %s96
      %p103 = scmp.eq.s32.totalorder %s23, 1
      %p104 = por %p102, %p103
      %p105 = scmp.ne.s32.totalorder %s96, %s97
      %p106 = scmp.eq.s32.totalorder %s23, 0
      %p107 = por %p105, %p106
      %p108 = scmp.ne.s32.totalorder %s96, %s97
      %p109 = scmp.eq.s32.totalorder %s24, 1
      %p110 = por %p108, %p109
      %p112 = scmp.ne.s32.totalorder %s97, %s111
      %p113 = scmp.eq.s32.totalorder %s24, 0
      %p114 = por %p112, %p113
      %s116 = sadd.s32 %s115, 1
      %p119 = scmp.eq.s32.totalorder %s18, 1
      %p120 = scmp.ne.s32.totalorder %s115, %s117
      %p121 = scmp.eq.s32.totalorder %s18, 0
      %p122 = por %p120, %p121
      %p123 = scmp.ne.s32.totalorder %s115, %s117
      %p124 = scmp.eq.s32.totalorder %s23, 1
      %p125 = por %p123, %p124
      %p126 = scmp.ne.s32.totalorder %s117, %s118
      %p127 = scmp.eq.s32.totalorder %s23, 0
      %p128 = por %p126, %p127
      %p129 = scmp.ne.s32.totalorder %s117, %s118
      %p130 = scmp.eq.s32.totalorder %s24, 1
      %p131 = por %p129, %p130
      %p133 = scmp.ne.s32.totalorder %s118, %s132
      %p134 = scmp.eq.s32.totalorder %s24, 0
      %p135 = por %p133, %p134
      %s136 = ssub.s32 %s18, %s25
      %p137 = scmp.eq.s32.totalorder %s136, 0
      %s139 = sadd.s32 %s138, 1
      %s140 = scalar_select %p137, %s138, %s139
      %p143 = pneg %p137
      %p144 = scmp.eq.s32.totalorder %s18, 1
      %p145 = por %p143, %p144
      %p146 = scmp.ne.s32.totalorder %s138, %s141
      %p147 = scmp.eq.s32.totalorder %s18, 0
      %p148 = por %p146, %p147
      %p149 = scmp.ne.s32.totalorder %s138, %s141
      %p150 = scmp.eq.s32.totalorder %s23, 1
      %p151 = por %p149, %p150
      %p152 = scmp.ne.s32.totalorder %s141, %s142
      %p153 = scmp.eq.s32.totalorder %s23, 0
      %p154 = por %p152, %p153
      %p155 = scmp.ne.s32.totalorder %s141, %s142
      %p156 = scmp.eq.s32.totalorder %s24, 1
      %p157 = por %p155, %p156
      %p159 = scmp.ne.s32.totalorder %s142, %s158
      %p160 = scmp.eq.s32.totalorder %s24, 0
      %p161 = por %p159, %p160
      %s162 = ssub.s32 %s18, %s25
      %p163 = scmp.eq.s32.totalorder %s162, 0
      %s165 = sadd.s32 %s164, 1
      %s166 = scalar_select %p163, %s164, %s165
      %p169 = pneg %p163
      %p170 = scmp.eq.s32.totalorder %s18, 1
      %p171 = por %p169, %p170
      %p172 = scmp.ne.s32.totalorder %s164, %s167
      %p173 = scmp.eq.s32.totalorder %s18, 0
      %p174 = por %p172, %p173
      %p175 = scmp.ne.s32.totalorder %s164, %s167
      %p176 = scmp.eq.s32.totalorder %s23, 1
      %p177 = por %p175, %p176
      %p178 = scmp.ne.s32.totalorder %s167, %s168
      %p179 = scmp.eq.s32.totalorder %s23, 0
      %p180 = por %p178, %p179
      %p181 = scmp.ne.s32.totalorder %s167, %s168
      %p182 = scmp.eq.s32.totalorder %s24, 1
      %p183 = por %p181, %p182
      %p185 = scmp.ne.s32.totalorder %s168, %s184
      %p186 = scmp.eq.s32.totalorder %s24, 0
      %p187 = por %p185, %p186
      %p188 = scmp.le.s32.totalorder 1, %s18
      %p189 = scmp.lt.s32.totalorder %s18, 3
      %p190 = pnand %p188, %p189
      %p191 = pneg %p190
      // Predicated region
      $region9: #{_lambda_.5} parent=5 // pred_check
        _
      $region10: #{_lambda_.5} parent=5 // pred_check_branch
        %193 = sbr.rel (%p190) target = $region12
      $region11: #{_lambda_.5} parent=5 // pred_region
        %s194 = ssub.s32 %s18, 1
        // Predicated region
        $region13: #{_lambda_.5} parent=11 // pred_check
          %p195 = pneg %p65
        $region14: #{_lambda_.5} parent=11 // pred_check_branch
          %197 = sbr.rel (%p195) target = $region16
        $region15: #{_lambda_.5} parent=11 // pred_region
          _
        $region16: #{_lambda_.5} parent=11 // pred_fallthru
          _
        // Predicated region
        $region17: #{_lambda_.5} parent=11 // pred_check
          %p198 = pneg %p86
        $region18: #{_lambda_.5} parent=11 // pred_check_branch
          %200 = sbr.rel (%p198) target = $region20
        $region19: #{_lambda_.5} parent=11 // pred_region
          _
        $region20: #{_lambda_.5} parent=11 // pred_fallthru
          _
        // Predicated region
        $region21: #{_lambda_.5} parent=11 // pred_check
          %p201 = pneg %p107
        $region22: #{_lambda_.5} parent=11 // pred_check_branch
          %203 = sbr.rel (%p201) target = $region24
        $region23: #{_lambda_.5} parent=11 // pred_region
          _
        $region24: #{_lambda_.5} parent=11 // pred_fallthru
          _
        // Predicated region
        $region25: #{_lambda_.5} parent=11 // pred_check
          %p204 = pneg %p128
        $region26: #{_lambda_.5} parent=11 // pred_check_branch
          %206 = sbr.rel (%p204) target = $region28
        $region27: #{_lambda_.5} parent=11 // pred_region
          _
        $region28: #{_lambda_.5} parent=11 // pred_fallthru
          _
      $region12: #{_lambda_.5} parent=5 // pred_fallthru
        _
      %p207 = scmp.lt.s32.totalorder %s18, 2
      // Predicated region
      $region29: #{_lambda_.5} parent=5 // pred_check
        %p208 = pneg %p207
      $region30: #{_lambda_.5} parent=5 // pred_check_branch
        %210 = sbr.rel (%p208) target = $region32
      $region31: #{_lambda_.5} parent=5 // pred_region
        // Predicated region
        $region33: #{_lambda_.5} parent=31 // pred_check
          %p211 = pneg %p38
        $region34: #{_lambda_.5} parent=31 // pred_check_branch
          %213 = sbr.rel (%p211) target = $region36
        $region35: #{_lambda_.5} parent=31 // pred_region
          %p214 = scmp.lt.s32.totalorder %s18, 1
          %s215 = scalar_select %p214, %s18, 1
          %s216 = smul.addr %s215, 8
          %s217 = smul.addr %s216, 8
          %s218 = scalar_lea.vmem %s0, %s217
        $region36: #{_lambda_.5} parent=31 // pred_fallthru
          _
      $region32: #{_lambda_.5} parent=5 // pred_fallthru
        _
      %p219 = scmp.le.s32.totalorder 1, %s18
      %p220 = scmp.lt.s32.totalorder %s18, 3
      %p221 = pnand %p219, %p220
      %p222 = pneg %p221
      // Predicated region
      $region37: #{_lambda_.5} parent=5 // pred_check
        _
      $region38: #{_lambda_.5} parent=5 // pred_check_branch
        %224 = sbr.rel (%p221) target = $region40
      $region39: #{_lambda_.5} parent=5 // pred_region
        %s225 = ssub.s32 %s18, 1
        %p226 = scmp.lt.s32.totalorder %s23, 1
        %s227 = scalar_select %p226, %s23, 1
        %s228 = smul.addr %s227, 8
        %s229 = smul.addr %s228, 8
        %s230 = scalar_lea.vmem %s0, %s229
        %p231 = pneg %p44
        %p232 = pneg %p41
        %p233 = pneg %p65
        %p234 = pneg %p62
        %p235 = pneg %p86
        %p236 = pneg %p83
        %p237 = pneg %p107
        %p238 = pneg %p104
        %p239 = pneg %p128
        %p240 = pneg %p125
        %p241 = pneg %p154
        %p242 = pneg %p151
        %s243 = sand.u32 %s141, 1
        %s244 = scalar_lea.sflag [#allocation4], %s243
        %s245 = sand.u32 %s141, 1
        %s246 = scalar_lea.vmem [#allocation3], %s245
        %p247 = pneg %p180
        %p248 = pneg %p177
        %p249 = scmp.lt.s32.totalorder %s23, 1
        %s250 = scalar_select %p249, %s23, 1
        %s251 = scalar_lea.vmem %s6, %s250
        %p252 = scmp.lt.s32.totalorder %s23, 1
        %s253 = scalar_select %p252, %s23, 1
        %s254 = smul.addr %s253, 8
        %s255 = smul.addr %s254, 8
        %s256 = scalar_lea.vmem %s0, %s255
        %p257 = scmp.lt.s32.totalorder %s23, 1
        %s258 = scalar_select %p257, %s23, 1
        %s259 = scalar_lea.vmem %s6, %s258
        %v260 = vld [vmem:[%s256] sm:$0xff]
        %v261 = vld [vmem:[%s256 + $0x8] sm:$0xff]
        %v262 = vld [vmem:[%s256 + $0x10] sm:$0xff]
        %v263 = vld [vmem:[%s256 + $0x18] sm:$0xff]
        %v264 = vld [vmem:[%s256 + $0x20] sm:$0xff]
        %v265 = vld [vmem:[%s256 + $0x28] sm:$0xff]
        %v266 = vld [vmem:[%s256 + $0x30] sm:$0xff]
        %v267 = vld [vmem:[%s256 + $0x38] sm:$0xff]
        %v268 = vld [vmem:[%s1] sm:$0xff]
        %v269 = vld [vmem:[%s1 + $0x8] sm:$0xff]
        %vm270 = vcmask 130048
        %v272 = vsel %vm270, %v260, 0
        %v275 = vsel %vm270, %v261, 0
        %v278 = vsel %vm270, %v262, 0
        %v281 = vsel %vm270, %v263, 0
        %v284 = vsel %vm270, %v264, 0
        %v287 = vsel %vm270, %v265, 0
        %v290 = vsel %vm270, %v266, 0
        %v293 = vsel %vm270, %v267, 0
        %295 = vmatpush.msra.mxu0 0.0
        %296 = vmatpush.msra.mxu0 0.0
        %297 = vmatpush.msra.mxu0 0.0
        %298 = vmatpush.msra.mxu0 0.0
        %299 = vmatpush.msra.mxu0 0.0
        %300 = vmatpush.msra.mxu0 0.0
        %301 = vmatpush.msra.mxu0 0.0
        %302 = vmatpush.msra.mxu0 0.0
        %303 = vmatpush.msra.mxu0 0.0
        %304 = vmatpush.msra.mxu0 0.0
        %305 = vmatpush.msra.mxu0 0.0
        %306 = vmatpush.msra.mxu0 0.0
        %307 = vmatpush.msra.mxu0 0.0
        %308 = vmatpush.msra.mxu0 0.0
        %309 = vmatpush.msra.mxu0 %v269
        %310 = vmatpush.msra.mxu0 %v268
        %311 = vmatmul.f32.gmra.mxu0 %v272
        %v312 = vpop.f32.mrf.mxu0
        %v313 = vadd.f32 0.0, %v312
        %314 = vmatmul.f32.gmra.mxu0 %v275
        %v315 = vpop.f32.mrf.mxu0
        %v316 = vadd.f32 0.0, %v315
        %317 = vmatmul.f32.gmra.mxu0 %v278
        %v318 = vpop.f32.mrf.mxu0
        %v319 = vadd.f32 0.0, %v318
        %320 = vmatmul.f32.gmra.mxu0 %v281
        %v321 = vpop.f32.mrf.mxu0
        %v322 = vadd.f32 0.0, %v321
        %323 = vmatmul.f32.gmra.mxu0 %v284
        %v324 = vpop.f32.mrf.mxu0
        %v325 = vadd.f32 0.0, %v324
        %326 = vmatmul.f32.gmra.mxu0 %v287
        %v327 = vpop.f32.mrf.mxu0
        %v328 = vadd.f32 0.0, %v327
        %329 = vmatmul.f32.gmra.mxu0 %v290
        %v330 = vpop.f32.mrf.mxu0
        %v331 = vadd.f32 0.0, %v330
        %332 = vmatmul.f32.gmra.mxu0 %v293
        %v333 = vpop.f32.mrf.mxu0
        %v334 = vadd.f32 0.0, %v333
        %335 = vdwg.mxu0
        %vm336 = vcmask 261120
        %v337 = vsel %vm336, %v313, 0.0
        %v338 = vsel %vm336, %v316, 0.0
        %v339 = vadd.f32 %v337, %v338
        %v340 = vsel %vm336, %v319, 0.0
        %v341 = vadd.f32 %v339, %v340
        %v342 = vsel %vm336, %v322, 0.0
        %v343 = vadd.f32 %v341, %v342
        %v344 = vsel %vm336, %v325, 0.0
        %v345 = vadd.f32 %v343, %v344
        %v346 = vsel %vm336, %v328, 0.0
        %v347 = vadd.f32 %v345, %v346
        %v348 = vsel %vm336, %v331, 0.0
        %v349 = vadd.f32 %v347, %v348
        %v350 = vsel %vm336, %v334, 0.0
        %v351 = vadd.f32 %v349, %v350
        %v352 = vrot.slane %v351, 4
        %v353 = vadd.f32 %v351, %v352
        %v354 = vrot.slane %v353, 2
        %v355 = vadd.f32 %v353, %v354
        %v356 = vrot.slane %v355, 1
        %v357 = vadd.f32 %v355, %v356
        %v358 = vrcp.pop 64.0
        %v359 = vmul.f32 64.0, %v358
        %v360 = vsub.f32 1.0, %v359
        %v361 = vmul.f32 %v358, %v360
        %v362 = vadd.f32 %v358, %v361
        %vm363 = vweird.f32 %v358
        %v364 = vsel %vm363, %v358, %v362
        %v365 = vmul.f32 %v357, %v364
        %v366 = vld [vmem:[%s2] sm:$0x1]
        %v367 = vadd.f32 %v365, %v366
        %v368 = vld [vmem:[%s3] sm:$0x1]
        %v369 = vmul.f32 %v367, %v368
        %vm370 = vcmask 253952
        %v371 = vsel %vm370, %v369, 0.0
        %372 = vadd.xlane.f32.xlu0 %v371
        %v373 = vpop.xlane.xlu0 %372
        %v374 = vld [vmem:[#allocation2] sm:$0x1]
        %v375 = vadd.f32 %v373, %v374
        %376 = vst.msk [vmem:[%s246] sm:$0x1] %vm370, %v367
        %vm377 = vcmask 0
        %378 = vst.msk [vmem:[%s259] sm:$0x1] %vm377, %v375
        %s379 = sand.u32 %s141, 1
        %s380 = scalar_lea.sflag [#allocation4], %s379
        %s381 = sand.u32 %s141, 1
        %s382 = scalar_lea.vmem [#allocation3], %s381
        %p383 = scmp.lt.s32.totalorder %s23, 1
        %s384 = scalar_select %p383, %s23, 1
        %s385 = scalar_lea.vmem %s6, %s384
        // Predicated region
        $region41: #{_lambda_.5} parent=39 // pred_check
          %p386 = pneg %p151
        $region42: #{_lambda_.5} parent=39 // pred_check_branch
          %388 = sbr.rel (%p386) target = $region44
        $region43: #{_lambda_.5} parent=39 // pred_region
          %390 = vsyncadd %s380, 0
          %s391 = scalar_lea.hbm %s5, %s23
          %s393 = sshll.u32 %s382, 4
          %s394 = int_to_ptr.vmem [resolvable:$true] %s393
          %s395 = sshll.u32 %s391, 4
          %s396 = int_to_ptr.hbm [resolvable:$true] %s395
          %398 = dma.vmem_to_hbm [thread:$0]  %s394, 16, %s396, %s380
        $region44: #{_lambda_.5} parent=39 // pred_fallthru
          _
        // Predicated region
        $region45: #{_lambda_.5} parent=39 // pred_check
          %p399 = pneg %p177
        $region46: #{_lambda_.5} parent=39 // pred_check_branch
          %401 = sbr.rel (%p399) target = $region48
        $region47: #{_lambda_.5} parent=39 // pred_region
          _
        $region48: #{_lambda_.5} parent=39 // pred_fallthru
          _
      $region40: #{_lambda_.5} parent=5 // pred_fallthru
        _
      %p402 = scmp.le.s32.totalorder 2, %s18
      // Predicated region
      $region49: #{_lambda_.5} parent=5 // pred_check
        %p403 = pneg %p402
      $region50: #{_lambda_.5} parent=5 // pred_check_branch
        %405 = sbr.rel (%p403) target = $region52
      $region51: #{_lambda_.5} parent=5 // pred_region
        %s406 = ssub.s32 %s18, 2
        // Predicated region
        $region53: #{_lambda_.5} parent=51 // pred_check
          %p407 = pneg %p157
        $region54: #{_lambda_.5} parent=51 // pred_check_branch
          %409 = sbr.rel (%p407) target = $region56
        $region55: #{_lambda_.5} parent=51 // pred_region
          %s410 = sand.u32 %s142, 1
          %s411 = scalar_lea.sflag [#allocation4], %s410
          %s412 = sand.u32 %s142, 1
          %s413 = scalar_lea.vmem [#allocation3], %s412
          %415 = dma.done %s411, 16
        $region56: #{_lambda_.5} parent=51 // pred_fallthru
          _
        // Predicated region
        $region57: #{_lambda_.5} parent=51 // pred_check
          %p416 = pneg %p183
        $region58: #{_lambda_.5} parent=51 // pred_check_branch
          %418 = sbr.rel (%p416) target = $region60
        $region59: #{_lambda_.5} parent=51 // pred_region
          %p419 = scmp.lt.s32.totalorder %s24, 1
          %s420 = scalar_select %p419, %s24, 1
          %s421 = scalar_lea.vmem %s6, %s420
        $region60: #{_lambda_.5} parent=51 // pred_fallthru
          _
      $region52: #{_lambda_.5} parent=5 // pred_fallthru
        _
    $region6: #{_lambda_.5} parent=1 // loop_footer
      %s22 = sadd.s32 1, %s18
    $region7: #{_lambda_.5} parent=1 // loop_footer_branch
      %17 = sbr.rel target = $region3
    $region8: #{_lambda_.5} parent=1 // loop_exit
      _
    %422 = vsyncpa [#allocation4], 1
    %s423 = scalar_lea.sflag [#allocation4], 1
    %424 = vsyncpa %s423, 1

// kernel: _lambda_.4
$region0: #{_lambda_.4}
  #allocation0 [shape = 'u32[]', space=smem, size = 0x4, offset = 0x4, fixed_abs, tag = 'smem constant byte address 0x4 - core index']
  #allocation1 [shape = 'u32[72,128]{1,0:T(1,128)}', space=vmem, size = 0x9000, scoped, tag = 'internal scratch']
  %s0 = inlined_call_operand.vmem [shape: f32[2,96,72], index: 0, kind: input, shape index: {}]
  %s1 = inlined_call_operand.vmem [shape: bf16[3,72,16], index: 1, kind: input, shape index: {}]
  %s2 = inlined_call_operand.vmem [shape: f32[1,16], index: 2, kind: input, shape index: {}]
  %s3 = inlined_call_operand.vmem [shape: f32[2,64,16], index: 3, kind: output, shape index: {}]
  %s4 = sld [smem:[#allocation0]]
  $region45: #{_lambda_.4} parent=0
    _
  %s6 = ssub.s32 1, %s4
  %s7 = scalar_select 0, %s6, %s4
  loop: start=0, step=1, limit=4
  $region2: #{_lambda_.4} parent=0 // loop_pre_header
    _
  $region3: #{_lambda_.4} parent=0 // loop_header
    %s9 = sphi 0, %s13
    %p10 = scmp.ge.s32.totalorder %s9, 4
    %s19 = sphi 0, %s21
    %s22 = sphi 0, %s19
    %s23 = sphi 0, %s22
    %s39 = sphi 0, %s23
    %s43 = sphi 0, %s43
    %s45 = sphi 0, %s43
    %s46 = sphi 0, %s45
    %s60 = sphi 0, %s46
    %s64 = sphi 0, %s64
    %s66 = sphi 0, %s64
    %s67 = sphi 0, %s66
    %s81 = sphi 0, %s67
    %s87 = sphi 0, %s89
    %s90 = sphi 0, %s87
    %s91 = sphi 0, %s90
    %s107 = sphi 0, %s91
  $region4: #{_lambda_.4} parent=0 // loop_header_branch
    %12 = sbr.rel (%p10) target = $region8
  $region5: #{_lambda_.4} parent=0 // loop_body
    %s14 = ssub.s32 %s9, 1
    %s15 = ssub.s32 %s9, 2
    %s16 = sadd.s32 %s9, 1
    %s17 = ssub.s32 %s9, %s16
    %p18 = scmp.eq.s32.totalorder %s17, 0
    %s20 = sadd.s32 %s19, 1
    %s21 = scalar_select %p18, %s19, %s20
    %p24 = pneg %p18
    %p25 = scmp.eq.s32.totalorder %s9, 1
    %p26 = por %p24, %p25
    %p27 = scmp.ne.s32.totalorder %s19, %s22
    %p28 = scmp.eq.s32.totalorder %s9, 0
    %p29 = por %p27, %p28
    %p30 = scmp.ne.s32.totalorder %s19, %s22
    %p31 = scmp.eq.s32.totalorder %s14, 1
    %p32 = por %p30, %p31
    %p33 = scmp.ne.s32.totalorder %s22, %s23
    %p34 = scmp.eq.s32.totalorder %s14, 0
    %p35 = por %p33, %p34
    %p36 = scmp.ne.s32.totalorder %s22, %s23
    %p37 = scmp.eq.s32.totalorder %s15, 1
    %p38 = por %p36, %p37
    %p40 = scmp.ne.s32.totalorder %s23, %s39
    %p41 = scmp.eq.s32.totalorder %s15, 0
    %p42 = por %p40, %p41
    %s44 = sadd.s32 %s43, 1
    %p47 = scmp.eq.s32.totalorder %s9, 1
    %p48 = scmp.ne.s32.totalorder %s43, %s45
    %p49 = scmp.eq.s32.totalorder %s9, 0
    %p50 = por %p48, %p49
    %p51 = scmp.ne.s32.totalorder %s43, %s45
    %p52 = scmp.eq.s32.totalorder %s14, 1
    %p53 = por %p51, %p52
    %p54 = scmp.ne.s32.totalorder %s45, %s46
    %p55 = scmp.eq.s32.totalorder %s14, 0
    %p56 = por %p54, %p55
    %p57 = scmp.ne.s32.totalorder %s45, %s46
    %p58 = scmp.eq.s32.totalorder %s15, 1
    %p59 = por %p57, %p58
    %p61 = scmp.ne.s32.totalorder %s46, %s60
    %p62 = scmp.eq.s32.totalorder %s15, 0
    %p63 = por %p61, %p62
    %s65 = sadd.s32 %s64, 1
    %p68 = scmp.eq.s32.totalorder %s9, 1
    %p69 = scmp.ne.s32.totalorder %s64, %s66
    %p70 = scmp.eq.s32.totalorder %s9, 0
    %p71 = por %p69, %p70
    %p72 = scmp.ne.s32.totalorder %s64, %s66
    %p73 = scmp.eq.s32.totalorder %s14, 1
    %p74 = por %p72, %p73
    %p75 = scmp.ne.s32.totalorder %s66, %s67
    %p76 = scmp.eq.s32.totalorder %s14, 0
    %p77 = por %p75, %p76
    %p78 = scmp.ne.s32.totalorder %s66, %s67
    %p79 = scmp.eq.s32.totalorder %s15, 1
    %p80 = por %p78, %p79
    %p82 = scmp.ne.s32.totalorder %s67, %s81
    %p83 = scmp.eq.s32.totalorder %s15, 0
    %p84 = por %p82, %p83
    %s85 = ssub.s32 %s9, %s16
    %p86 = scmp.eq.s32.totalorder %s85, 0
    %s88 = sadd.s32 %s87, 1
    %s89 = scalar_select %p86, %s87, %s88
    %p92 = pneg %p86
    %p93 = scmp.eq.s32.totalorder %s9, 1
    %p94 = por %p92, %p93
    %p95 = scmp.ne.s32.totalorder %s87, %s90
    %p96 = scmp.eq.s32.totalorder %s9, 0
    %p97 = por %p95, %p96
    %p98 = scmp.ne.s32.totalorder %s87, %s90
    %p99 = scmp.eq.s32.totalorder %s14, 1
    %p100 = por %p98, %p99
    %p101 = scmp.ne.s32.totalorder %s90, %s91
    %p102 = scmp.eq.s32.totalorder %s14, 0
    %p103 = por %p101, %p102
    %p104 = scmp.ne.s32.totalorder %s90, %s91
    %p105 = scmp.eq.s32.totalorder %s15, 1
    %p106 = por %p104, %p105
    %p108 = scmp.ne.s32.totalorder %s91, %s107
    %p109 = scmp.eq.s32.totalorder %s15, 0
    %p110 = por %p108, %p109
    %p111 = scmp.le.s32.totalorder 1, %s9
    %p112 = scmp.lt.s32.totalorder %s9, 3
    %p113 = pnand %p111, %p112
    %p114 = pneg %p113
    // Predicated region
    $region9: #{_lambda_.4} parent=5 // pred_check
      _
    $region10: #{_lambda_.4} parent=5 // pred_check_branch
      %116 = sbr.rel (%p113) target = $region12
    $region11: #{_lambda_.4} parent=5 // pred_region
      %s117 = ssub.s32 %s9, 1
      // Predicated region
      $region13: #{_lambda_.4} parent=11 // pred_check
        %p118 = pneg %p56
      $region14: #{_lambda_.4} parent=11 // pred_check_branch
        %120 = sbr.rel (%p118) target = $region16
      $region15: #{_lambda_.4} parent=11 // pred_region
        _
      $region16: #{_lambda_.4} parent=11 // pred_fallthru
        _
      // Predicated region
      $region17: #{_lambda_.4} parent=11 // pred_check
        %p121 = pneg %p77
      $region18: #{_lambda_.4} parent=11 // pred_check_branch
        %123 = sbr.rel (%p121) target = $region20
      $region19: #{_lambda_.4} parent=11 // pred_region
        _
      $region20: #{_lambda_.4} parent=11 // pred_fallthru
        _
    $region12: #{_lambda_.4} parent=5 // pred_fallthru
      _
    %p124 = scmp.lt.s32.totalorder %s9, 2
    // Predicated region
    $region21: #{_lambda_.4} parent=5 // pred_check
      %p125 = pneg %p124
    $region22: #{_lambda_.4} parent=5 // pred_check_branch
      %127 = sbr.rel (%p125) target = $region24
    $region23: #{_lambda_.4} parent=5 // pred_region
      // Predicated region
      $region25: #{_lambda_.4} parent=23 // pred_check
        %p128 = pneg %p29
      $region26: #{_lambda_.4} parent=23 // pred_check_branch
        %130 = sbr.rel (%p128) target = $region28
      $region27: #{_lambda_.4} parent=23 // pred_region
        %p131 = scmp.lt.s32.totalorder %s9, 1
        %s132 = scalar_select %p131, %s9, 1
        %s133 = smul.addr %s132, 12
        %s134 = smul.addr %s133, 8
        %s135 = scalar_lea.vmem %s0, %s134
      $region28: #{_lambda_.4} parent=23 // pred_fallthru
        _
    $region24: #{_lambda_.4} parent=5 // pred_fallthru
      _
    %p136 = scmp.le.s32.totalorder 1, %s9
    %p137 = scmp.lt.s32.totalorder %s9, 3
    %p138 = pnand %p136, %p137
    %p139 = pneg %p138
    // Predicated region
    $region29: #{_lambda_.4} parent=5 // pred_check
      _
    $region30: #{_lambda_.4} parent=5 // pred_check_branch
      %141 = sbr.rel (%p138) target = $region32
    $region31: #{_lambda_.4} parent=5 // pred_region
      %s142 = ssub.s32 %s9, 1
      %p143 = scmp.lt.s32.totalorder %s14, 1
      %s144 = scalar_select %p143, %s14, 1
      %s145 = smul.addr %s144, 12
      %s146 = smul.addr %s145, 8
      %s147 = scalar_lea.vmem %s0, %s146
      %p148 = pneg %p35
      %p149 = pneg %p32
      %p150 = pneg %p56
      %p151 = pneg %p53
      %p152 = pneg %p77
      %p153 = pneg %p74
      %p154 = pneg %p103
      %p155 = pneg %p100
      %p156 = scmp.lt.s32.totalorder %s14, 1
      %s157 = scalar_select %p156, %s14, 1
      %s158 = smul.addr %s157, 8
      %s159 = smul.addr %s158, 8
      %s160 = scalar_lea.vmem %s3, %s159
      %p161 = scmp.lt.s32.totalorder %s14, 1
      %s162 = scalar_select %p161, %s14, 1
      %s163 = smul.addr %s162, 12
      %s164 = smul.addr %s163, 8
      %s165 = scalar_lea.vmem %s0, %s164
      %p166 = scmp.lt.s32.totalorder %s14, 1
      %s167 = scalar_select %p166, %s14, 1
      %s168 = smul.addr %s167, 8
      %s169 = smul.addr %s168, 8
      %s170 = scalar_lea.vmem %s3, %s169
      %v172 = vld [vmem:[%s165] sm:$0xff]
      %v173 = vld [vmem:[%s165 + $0x8] sm:$0xff]
      %v174 = vld [vmem:[%s165 + $0x10] sm:$0xff]
      %v175 = vld [vmem:[%s165 + $0x18] sm:$0xff]
      %v176 = vld [vmem:[%s165 + $0x20] sm:$0xff]
      %v177 = vld [vmem:[%s165 + $0x28] sm:$0xff]
      %v178 = vld [vmem:[%s165 + $0x30] sm:$0xff]
      %v179 = vld [vmem:[%s165 + $0x38] sm:$0xff]
      %v180 = vld [vmem:[%s165 + $0x40] sm:$0xff]
      %v181 = vld [vmem:[%s165 + $0x48] sm:$0xff]
      %v182 = vld [vmem:[%s165 + $0x50] sm:$0xff]
      %v183 = vld [vmem:[%s165 + $0x58] sm:$0xff]
      %v184 = vld [vmem:[%s1] sm:$0xf]
      %v185 = vld [vmem:[%s1 + $0x4] sm:$0xf]
      %v186 = vld [vmem:[%s1 + $0x8] sm:$0xf]
      %v187 = vld [vmem:[%s1 + $0xc] sm:$0xf]
      %v188 = vld [vmem:[%s1 + $0x10] sm:$0xf]
      %v189 = vld [vmem:[%s1 + $0x14] sm:$0xf]
      %v190 = vld [vmem:[%s1 + $0x18] sm:$0xf]
      %v191 = vld [vmem:[%s1 + $0x1c] sm:$0xf]
      %v192 = vld [vmem:[%s1 + $0x20] sm:$0xf]
      %v193 = vld [vmem:[%s1 + $0x24] sm:$0xf]
      %v194 = vld [vmem:[%s1 + $0x28] sm:$0xf]
      %v195 = vld [vmem:[%s1 + $0x2c] sm:$0xf]
      %v196 = vld [vmem:[%s1 + $0x30] sm:$0xf]
      %v197 = vld [vmem:[%s1 + $0x34] sm:$0xf]
      %v198 = vld [vmem:[%s1 + $0x38] sm:$0xf]
      %v199 = vld [vmem:[%s1 + $0x3c] sm:$0xf]
      %v200 = vld [vmem:[%s1 + $0x40] sm:$0xf]
      %v201 = vld [vmem:[%s1 + $0x44] sm:$0xf]
      %v202 = vld [vmem:[%s1 + $0x48] sm:$0xf]
      %v203 = vld [vmem:[%s1 + $0x4c] sm:$0xf]
      %v204 = vld [vmem:[%s1 + $0x50] sm:$0xf]
      %v205 = vld [vmem:[%s1 + $0x54] sm:$0xf]
      %v206 = vld [vmem:[%s1 + $0x58] sm:$0xf]
      %v207 = vld [vmem:[%s1 + $0x5c] sm:$0xf]
      %v208 = vld [vmem:[%s1 + $0x60] sm:$0xf]
      %v209 = vld [vmem:[%s1 + $0x64] sm:$0xf]
      %v210 = vld [vmem:[%s1 + $0x68] sm:$0xf]
      %v211 = vpack.c.bf16 %v173, %v172
      %v212 = vpack.c.bf16 %v175, %v174
      %v213 = vpack.c.bf16 %v177, %v176
      %v214 = vpack.c.bf16 %v179, %v178
      %v215 = vpack.c.bf16 %v181, %v180
      %v225 = vunpack.c.l.b16 %v193
      %v226 = vunpack.c.l.b16 %v194
      %v227 = vunpack.c.l.b16 %v195
      %v228 = vunpack.c.l.b16 %v196
      %v229 = vunpack.c.l.b16 %v197
      %v230 = vunpack.c.l.b16 %v198
      %v231 = vunpack.c.l.b16 %v199
      %v232 = vunpack.c.l.b16 %v200
      %v233 = vunpack.c.l.b16 %v201
      %v234 = vpack.c.b16 %v226, %v225
      %v235 = vpack.c.b16 %v228, %v227
      %v236 = vpack.c.b16 %v230, %v229
      %v237 = vpack.c.b16 %v232, %v231
      %v238 = vpack.c.b16 %v233, %v233
      %vm243 = vcmask 588800
      %v245 = vsel %vm243, %v212, 0
      %v248 = vsel %vm243, %v213, 0
      %v251 = vsel %vm243, %v214, 0
      %v254 = vsel %vm243, %v215, 0
      %vm256 = vcmask 1043456
      %v258 = vsel %vm256, %v238, 0
      %260 = vmatpush.bf16.msra.mxu0 0
      %261 = vmatpush.bf16.msra.mxu0 0
      %262 = vmatpush.bf16.msra.mxu0 0
      %263 = vmatpush.bf16.msra.mxu0 %v258
      %264 = vmatpush.bf16.msra.mxu0 %v237
      %265 = vmatpush.bf16.msra.mxu0 %v236
      %266 = vmatpush.bf16.msra.mxu0 %v235
      %267 = vmatpush.bf16.msra.mxu0 %v234
      %268 = vmatmul.bf16.gmra.mxu0 %v245
      %v269 = vpop.f32.mrf.mxu0
      %v270 = vadd.f32 0.0, %v269
      %v271 = vpop.f32.mrf.mxu0
      %v272 = vadd.f32 0.0, %v271
      %273 = vmatmul.bf16.gmra.mxu0 %v248
      %v274 = vpop.f32.mrf.mxu0
      %v275 = vadd.f32 0.0, %v274
      %v276 = vpop.f32.mrf.mxu0
      %v277 = vadd.f32 0.0, %v276
      %278 = vmatmul.bf16.gmra.mxu0 %v251
      %v279 = vpop.f32.mrf.mxu0
      %v280 = vadd.f32 0.0, %v279
      %v281 = vpop.f32.mrf.mxu0
      %v282 = vadd.f32 0.0, %v281
      %283 = vmatmul.bf16.gmra.mxu0 %v254
      %v284 = vpop.f32.mrf.mxu0
      %v285 = vadd.f32 0.0, %v284
      %v286 = vpop.f32.mrf.mxu0
      %v287 = vadd.f32 0.0, %v286
      %288 = vdwg.mxu0
      %v298 = vunpack.c.l.b16 %v184
      %v299 = vunpack.c.l.b16 %v185
      %v300 = vunpack.c.l.b16 %v186
      %v301 = vunpack.c.l.b16 %v187
      %v302 = vunpack.c.l.b16 %v188
      %v303 = vunpack.c.l.b16 %v189
      %v304 = vunpack.c.l.b16 %v190
      %v305 = vunpack.c.l.b16 %v191
      %v306 = vunpack.c.l.b16 %v192
      %v307 = vpack.c.b16 %v299, %v298
      %v308 = vpack.c.b16 %v301, %v300
      %v309 = vpack.c.b16 %v303, %v302
      %v310 = vpack.c.b16 %v305, %v304
      %v311 = vpack.c.b16 %v306, %v306
      %v317 = vsel %vm243, %v211, 0
      %v320 = vsel %vm256, %v311, 0
      %322 = vmatpush.bf16.msra.mxu0 0
      %323 = vmatpush.bf16.msra.mxu0 0
      %324 = vmatpush.bf16.msra.mxu0 0
      %325 = vmatpush.bf16.msra.mxu0 %v320
      %326 = vmatpush.bf16.msra.mxu0 %v310
      %327 = vmatpush.bf16.msra.mxu0 %v309
      %328 = vmatpush.bf16.msra.mxu0 %v308
      %329 = vmatpush.bf16.msra.mxu0 %v307
      %330 = vmatmul.bf16.gmra.mxu0 %v317
      %v331 = vpop.f32.mrf.mxu0
      %v332 = vadd.f32 %v270, %v331
      %v333 = vpop.f32.mrf.mxu0
      %v334 = vadd.f32 %v272, %v333
      %335 = vmatmul.bf16.gmra.mxu0 %v245
      %v336 = vpop.f32.mrf.mxu0
      %v337 = vadd.f32 %v275, %v336
      %v338 = vpop.f32.mrf.mxu0
      %v339 = vadd.f32 %v277, %v338
      %340 = vmatmul.bf16.gmra.mxu0 %v248
      %v341 = vpop.f32.mrf.mxu0
      %v342 = vadd.f32 %v280, %v341
      %v343 = vpop.f32.mrf.mxu0
      %v344 = vadd.f32 %v282, %v343
      %345 = vmatmul.bf16.gmra.mxu0 %v251
      %v346 = vpop.f32.mrf.mxu0
      %v347 = vadd.f32 %v285, %v346
      %v348 = vpop.f32.mrf.mxu0
      %v349 = vadd.f32 %v287, %v348
      %350 = vdwg.mxu0
      %v351 = vpack.c.bf16 %v183, %v182
      %v361 = vunpack.c.l.b16 %v202
      %v362 = vunpack.c.l.b16 %v203
      %v363 = vunpack.c.l.b16 %v204
      %v364 = vunpack.c.l.b16 %v205
      %v365 = vunpack.c.l.b16 %v206
      %v366 = vunpack.c.l.b16 %v207
      %v367 = vunpack.c.l.b16 %v208
      %v368 = vunpack.c.l.b16 %v209
      %v369 = vunpack.c.l.b16 %v210
      %v370 = vpack.c.b16 %v362, %v361
      %v371 = vpack.c.b16 %v364, %v363
      %v372 = vpack.c.b16 %v366, %v365
      %v373 = vpack.c.b16 %v368, %v367
      %v374 = vpack.c.b16 %v369, %v369
      %v380 = vsel %vm243, %v351, 0
      %v383 = vsel %vm256, %v374, 0
      %385 = vmatpush.bf16.msra.mxu0 0
      %386 = vmatpush.bf16.msra.mxu0 0
      %387 = vmatpush.bf16.msra.mxu0 0
      %388 = vmatpush.bf16.msra.mxu0 %v383
      %389 = vmatpush.bf16.msra.mxu0 %v373
      %390 = vmatpush.bf16.msra.mxu0 %v372
      %391 = vmatpush.bf16.msra.mxu0 %v371
      %392 = vmatpush.bf16.msra.mxu0 %v370
      %393 = vmatmul.bf16.gmra.mxu0 %v248
      %v394 = vpop.f32.mrf.mxu0
      %v395 = vadd.f32 0.0, %v394
      %v396 = vpop.f32.mrf.mxu0
      %v397 = vadd.f32 0.0, %v396
      %398 = vmatmul.bf16.gmra.mxu0 %v251
      %v399 = vpop.f32.mrf.mxu0
      %v400 = vadd.f32 0.0, %v399
      %v401 = vpop.f32.mrf.mxu0
      %v402 = vadd.f32 0.0, %v401
      %403 = vmatmul.bf16.gmra.mxu0 %v254
      %v404 = vpop.f32.mrf.mxu0
      %v405 = vadd.f32 0.0, %v404
      %v406 = vpop.f32.mrf.mxu0
      %v407 = vadd.f32 0.0, %v406
      %408 = vmatmul.bf16.gmra.mxu0 %v380
      %v409 = vpop.f32.mrf.mxu0
      %v410 = vadd.f32 0.0, %v409
      %v411 = vpop.f32.mrf.mxu0
      %v412 = vadd.f32 0.0, %v411
      %413 = vdwg.mxu0
      %v414 = vadd.f32 %v332, %v395
      %v415 = vadd.f32 %v334, %v397
      %v416 = vadd.f32 %v337, %v400
      %v417 = vadd.f32 %v339, %v402
      %v418 = vadd.f32 %v342, %v405
      %v419 = vadd.f32 %v344, %v407
      %v420 = vadd.f32 %v347, %v410
      %v421 = vadd.f32 %v349, %v412
      %v422 = vld [vmem:[%s2] sm:$0x1]
      %v424 = vperm.slane %v422, 0
      %v426 = vadd.f32 %v414, %v424
      %v427 = vadd.f32 %v415, %v424
      %v428 = vadd.f32 %v416, %v424
      %v429 = vadd.f32 %v417, %v424
      %v430 = vadd.f32 %v418, %v424
      %v431 = vadd.f32 %v419, %v424
      %v432 = vadd.f32 %v420, %v424
      %v433 = vadd.f32 %v421, %v424
      %vm434 = vcmp.ge.f32.partialorder %v426, 0.0
      %vm435 = vcmp.ge.f32.partialorder %v427, 0.0
      %vm436 = vcmp.ge.f32.partialorder %v428, 0.0
      %vm437 = vcmp.ge.f32.partialorder %v429, 0.0
      %vm438 = vcmp.ge.f32.partialorder %v430, 0.0
      %vm439 = vcmp.ge.f32.partialorder %v431, 0.0
      %vm440 = vcmp.ge.f32.partialorder %v432, 0.0
      %vm441 = vcmp.ge.f32.partialorder %v433, 0.0
      %v442 = vmul.f32 %v426, 0.2
      %v443 = vmul.f32 %v427, 0.2
      %v444 = vmul.f32 %v428, 0.2
      %v445 = vmul.f32 %v429, 0.2
      %v446 = vmul.f32 %v430, 0.2
      %v447 = vmul.f32 %v431, 0.2
      %v448 = vmul.f32 %v432, 0.2
      %v449 = vmul.f32 %v433, 0.2
      %v450 = vsel %vm434, %v426, %v442
      %v451 = vsel %vm435, %v427, %v443
      %v452 = vsel %vm436, %v428, %v444
      %v453 = vsel %vm437, %v429, %v445
      %v454 = vsel %vm438, %v430, %v446
      %v455 = vsel %vm439, %v431, %v447
      %v456 = vsel %vm440, %v432, %v448
      %v457 = vsel %vm441, %v433, %v449
      %vm458 = vcmask 130048
      %459 = vst.msk [vmem:[%s170] sm:$0xff] %vm458, %v450
      %460 = vst.msk [vmem:[%s170 + $0x8] sm:$0xff] %vm458, %v451
      %461 = vst.msk [vmem:[%s170 + $0x10] sm:$0xff] %vm458, %v452
      %462 = vst.msk [vmem:[%s170 + $0x18] sm:$0xff] %vm458, %v453
      %463 = vst.msk [vmem:[%s170 + $0x20] sm:$0xff] %vm458, %v454
      %464 = vst.msk [vmem:[%s170 + $0x28] sm:$0xff] %vm458, %v455
      %465 = vst.msk [vmem:[%s170 + $0x30] sm:$0xff] %vm458, %v456
      %466 = vst.msk [vmem:[%s170 + $0x38] sm:$0xff] %vm458, %v457
      %p467 = scmp.lt.s32.totalorder %s14, 1
      %s468 = scalar_select %p467, %s14, 1
      %s469 = smul.addr %s468, 8
      %s470 = smul.addr %s469, 8
      %s471 = scalar_lea.vmem %s3, %s470
      // Predicated region
      $region33: #{_lambda_.4} parent=31 // pred_check
        %p472 = pneg %p100
      $region34: #{_lambda_.4} parent=31 // pred_check_branch
        %474 = sbr.rel (%p472) target = $region36
      $region35: #{_lambda_.4} parent=31 // pred_region
        _
      $region36: #{_lambda_.4} parent=31 // pred_fallthru
        _
    $region32: #{_lambda_.4} parent=5 // pred_fallthru
      _
    %p475 = scmp.le.s32.totalorder 2, %s9
    // Predicated region
    $region37: #{_lambda_.4} parent=5 // pred_check
      %p476 = pneg %p475
    $region38: #{_lambda_.4} parent=5 // pred_check_branch
      %478 = sbr.rel (%p476) target = $region40
    $region39: #{_lambda_.4} parent=5 // pred_region
      %s479 = ssub.s32 %s9, 2
      // Predicated region
      $region41: #{_lambda_.4} parent=39 // pred_check
        %p480 = pneg %p106
      $region42: #{_lambda_.4} parent=39 // pred_check_branch
        %482 = sbr.rel (%p480) target = $region44
      $region43: #{_lambda_.4} parent=39 // pred_region
        %p483 = scmp.lt.s32.totalorder %s15, 1
        %s484 = scalar_select %p483, %s15, 1
        %s485 = smul.addr %s484, 8
        %s486 = smul.addr %s485, 8
        %s487 = scalar_lea.vmem %s3, %s486
      $region44: #{_lambda_.4} parent=39 // pred_fallthru
        _
    $region40: #{_lambda_.4} parent=5 // pred_fallthru
      _
  $region6: #{_lambda_.4} parent=0 // loop_footer
    %s13 = sadd.s32 1, %s9
  $region7: #{_lambda_.4} parent=0 // loop_footer_branch
    %8 = sbr.rel target = $region3
  $region8: #{_lambda_.4} parent=0 // loop_exit
    _

</llo_original>
